<compile_context>
chip_gen: v7x
topology: tpu7x:2x2x1
jax: 0.10.0
libtpu: 0.0.40
codegen_flags: <defaults>
</compile_context>

<pallas_src>
import math

import jax
import jax.numpy as jnp
from jax.experimental import pallas as pl
from jax.experimental.pallas import tpu as pltpu  # noqa: F401  (TPU backend)

# ----------------------------- configuration --------------------------------
B = 2
D_MODEL = 32
NHEAD = 4
HEAD_DIM = D_MODEL // NHEAD
DIM_FF = 64
Z_PILLAR = 4                       # num_points_in_pillar
NUM_LEVELS = 2
NUM_POINTS = 2                     # sampling points per pillar point
P_TOT = Z_PILLAR * NUM_POINTS      # Detr3DCrossAtten.num_points
NUM_CAMS = 2
H_BEV, W_BEV = 4, 4
NQ = H_BEV * W_BEV
M_TOT = B * NQ
IMG_H, IMG_W = 64.0, 64.0
PC_RANGE = (-10.0, -10.0, -3.0, 10.0, 10.0, 3.0)
FEAT_HW = ((8, 8), (4, 4))
LN_EPS = 1e-5

N_OFF = NHEAD * NUM_LEVELS * P_TOT * 2     # 128
N_ATTW = NHEAD * NUM_LEVELS * P_TOT        # 64
N_OA = N_OFF + N_ATTW                      # 192
K_TOT = NHEAD * P_TOT * NUM_LEVELS         # 64


def _ln(x, g, b):
    mu = jnp.mean(x, axis=-1, keepdims=True)
    var = jnp.mean((x - mu) ** 2, axis=-1, keepdims=True)
    return (x - mu) * jax.lax.rsqrt(var + LN_EPS) * g + b


# ------------------------ fused Pallas kernel A ------------------------------
# position_encoder -> (query + pos) -> self-attn (fused QKV, all heads, out
# proj) -> add+LN1 -> fused (offsets | attention-weights) projection.
def _pre_kernel(q_ref, x_ref, pe_w1_ref, pe_w2_ref, wqkv_ref, bqkv_ref,
                wao_ref, woa_ref, boa_ref, vec_ref, tgt_ref, oa_ref):
    vec = vec_ref[...]                              # (9, D) packed small params
    pe_b1, pe_g1, pe_be1 = vec[0:1], vec[1:2], vec[2:3]
    pe_b2, pe_g2, pe_be2 = vec[3:4], vec[4:5], vec[5:6]
    b_ao, n1_g, n1_b = vec[6:7], vec[7:8], vec[8:9]

    query = q_ref[...]                              # (M, D)

    # position encoder: Linear -> LN -> ReLU, twice
    h = jnp.dot(x_ref[...], pe_w1_ref[...], preferred_element_type=jnp.float32) + pe_b1
    h = jnp.maximum(_ln(h, pe_g1, pe_be1), 0.0)
    qpe = jnp.dot(h, pe_w2_ref[...], preferred_element_type=jnp.float32) + pe_b2
    qpe = jnp.maximum(_ln(qpe, pe_g2, pe_be2), 0.0)

    # fused QKV projection: Q,K from (query + qpe), V from query, one matmul
    q_in = query + qpe
    xin = jnp.concatenate([q_in, query], axis=-1)   # (M, 2D)
    qkv = jnp.dot(xin, wqkv_ref[...], preferred_element_type=jnp.float32) + bqkv_ref[...]
    qkv3 = qkv.reshape(B, NQ, 3 * D_MODEL)
    qh = qkv3[:, :, :D_MODEL]
    kh = qkv3[:, :, D_MODEL:2 * D_MODEL]
    vh = qkv3[:, :, 2 * D_MODEL:]

    # multi-head attention, all heads inside this single grid step
    scale = 1.0 / math.sqrt(HEAD_DIM)
    head_outs = []
    for hix in range(NHEAD):
        c0 = hix * HEAD_DIM
        qs = qh[:, :, c0:c0 + HEAD_DIM] * scale     # (B, NQ, Dh)
        ks = kh[:, :, c0:c0 + HEAD_DIM]
        vs = vh[:, :, c0:c0 + HEAD_DIM]
        s = jnp.einsum('bqd,bkd->bqk', qs, ks, preferred_element_type=jnp.float32)
        s = s - jnp.max(s, axis=-1, keepdims=True)
        p = jnp.exp(s)
        p = p * pl.reciprocal(jnp.sum(p, axis=-1, keepdims=True), approx=True)
        head_outs.append(jnp.einsum('bqk,bkd->bqd', p, vs,
                                    preferred_element_type=jnp.float32))
    attn = jnp.concatenate(head_outs, axis=-1).reshape(M_TOT, D_MODEL)

    attn = jnp.dot(attn, wao_ref[...], preferred_element_type=jnp.float32) + b_ao
    tgt = _ln(query + attn, n1_g, n1_b)
    tgt_ref[...] = tgt.astype(tgt_ref.dtype)

    # fused offsets + attention-weight projection (lane-dense 192-wide output)
    # TODO(synk): reference Detr3DCrossAtten applies sigmoid + per-cam masking to
    # the attention weights; kept raw here to match the established semantics.
    qc = tgt + qpe
    oa_ref[...] = (jnp.dot(qc, woa_ref[...], preferred_element_type=jnp.float32)
                   + boa_ref[...]).astype(oa_ref.dtype)


def fused_pre(query2d, qpe_in, fp):
    return pl.pallas_call(
        _pre_kernel,
        out_shape=(jax.ShapeDtypeStruct((M_TOT, D_MODEL), jnp.float32),
                   jax.ShapeDtypeStruct((M_TOT, N_OA), jnp.float32)),
    )(query2d, qpe_in, fp['pe_w1'], fp['pe_w2'], fp['w_qkv'], fp['b_qkv'],
      fp['w_ao'], fp['w_oa'], fp['b_oa'], fp['vecA'])


# ------------------------ fused Pallas kernel B ------------------------------
# weighted aggregation over sampled features -> out proj -> residuals + LN2 ->
# FFN -> residual + LN3.
def _post_kernel(samp_ref, attw_ref, cnt_ref, tgt_ref,
                 wcop_ref, wff1_ref, bff1_ref, wff2_ref, vec_ref, o_ref):
    vec = vec_ref[...]                              # (6, D)
    b_cop, n2_g, n2_b = vec[0:1], vec[1:2], vec[2:3]
    b_ff2, n3_g, n3_b = vec[3:4], vec[4:5], vec[5:6]

    s = samp_ref[...]                               # (M, C, K)
    w = attw_ref[...]                               # (M, K)
    agg = jnp.sum(s * w[:, None, :], axis=-1)       # (M, C)
    agg = agg * pl.reciprocal(cnt_ref[...], approx=True)

    tgt = tgt_ref[...]
    cross = jnp.dot(agg, wcop_ref[...], preferred_element_type=jnp.float32) + b_cop
    # Detr3DCrossAtten adds its own residual; the decoder layer adds tgt again.
    t2 = _ln(tgt + (cross + tgt), n2_g, n2_b)

    hdn = jnp.maximum(jnp.dot(t2, wff1_ref[...], preferred_element_type=jnp.float32)
                      + bff1_ref[...], 0.0)
    ffn = jnp.dot(hdn, wff2_ref[...], preferred_element_type=jnp.float32) + b_ff2
    o_ref[...] = _ln(t2 + ffn, n3_g, n3_b).astype(o_ref.dtype)


def fused_post(sampled, attw, count, tgt, fp):
    return pl.pallas_call(
        _post_kernel,
        out_shape=jax.ShapeDtypeStruct((M_TOT, D_MODEL), jnp.float32),
    )(sampled, attw, count, tgt, fp['w_cop'], fp['w_ff1'], fp['b_ff1'],
      fp['w_ff2'], fp['vecB'])


# --------------------------- plain-JAX glue ----------------------------------
# TODO(synk): F.grid_sample (bilinear, data-dependent gather) and the
# per-camera nonzero() query rebatch have no clean Pallas equivalent; the
# rebatch is replaced by a mathematically equivalent dense mask and the gather
# stays in JAX.
def grid_sample_bilinear(feat, grid):
    """feat: (N, C, H, W); grid: (N, Hg, Wg, 2) in [-1,1] (x,y) order.
    Matches F.grid_sample(mode='bilinear', padding_mode='zeros', align_corners=False)."""
    N, C, H, W = feat.shape
    Hg, Wg = grid.shape[1], grid.shape[2]
    gx = (grid[..., 0] + 1.0) * (W / 2.0) - 0.5
    gy = (grid[..., 1] + 1.0) * (H / 2.0) - 0.5
    x0 = jnp.floor(gx)
    y0 = jnp.floor(gy)
    x1 = x0 + 1.0
    y1 = y0 + 1.0
    wx1 = gx - x0
    wx0 = 1.0 - wx1
    wy1 = gy - y0
    wy0 = 1.0 - wy1
    flat = feat.reshape(N, C, H * W)

    def gather(ix, iy):
        valid = (ix >= 0) & (ix < W) & (iy >= 0) & (iy < H)
        idx = (jnp.clip(iy, 0, H - 1).astype(jnp.int32) * W
               + jnp.clip(ix, 0, W - 1).astype(jnp.int32)).reshape(N, 1, Hg * Wg)
        g = jnp.take_along_axis(flat, idx, axis=2).reshape(N, C, Hg, Wg)
        return g * valid.reshape(N, 1, Hg, Wg).astype(feat.dtype)

    v00 = gather(x0, y0)
    v10 = gather(x1, y0)
    v01 = gather(x0, y1)
    v11 = gather(x1, y1)
    return (v00 * (wx0 * wy0)[:, None] + v10 * (wx1 * wy0)[:, None]
            + v01 * (wx0 * wy1)[:, None] + v11 * (wx1 * wy1)[:, None])


def feature_sampling(mlvl_feats, ref_pts, off_raw, lidar2img):
    """Dense (mask-based) equivalent of feature_sampling().
    ref_pts: (B, Q, Z, 3) in [0,1]; off_raw: (B, Q, H*L*P*2) raw offset head output.
    Returns sampled (B, Q, C, K) with K = NHEAD * P_TOT * NUM_LEVELS, and count (B, Q)."""
    Bn, Q, Zp, _ = ref_pts.shape
    num_cam = lidar2img.shape[1]
    offs = off_raw.reshape(Bn, Q, NHEAD, NUM_LEVELS, Zp, NUM_POINTS, 2)

    pc = PC_RANGE
    rp = jnp.stack([ref_pts[..., 0] * (pc[3] - pc[0]) + pc[0],
                    ref_pts[..., 1] * (pc[4] - pc[1]) + pc[1],
                    ref_pts[..., 2] * (pc[5] - pc[2]) + pc[2],
                    jnp.ones_like(ref_pts[..., 0])], axis=-1)        # (B, Q, Z, 4)

    cam = jnp.einsum('bcij,bqzj->bcqzi', lidar2img, rp)              # (B, cam, Q, Z, 4)
    eps = 1e-5
    depth = cam[..., 2:3]
    mask = depth > eps
    xy = cam[..., 0:2] / jnp.maximum(depth, eps)
    xy = xy / jnp.array([IMG_W, IMG_H], dtype=xy.dtype)
    xy = (xy - 0.5) * 2.0
    mask = (mask & (xy[..., 0:1] > -1.0) & (xy[..., 0:1] < 1.0)
            & (xy[..., 1:2] > -1.0) & (xy[..., 1:2] < 1.0))[..., 0]  # (B, cam, Q, Z)

    # per-camera query validity taken from batch 0 (mirrors the reference
    # nonzero() rebatch quirk), applied to all batches.
    valid = jnp.any(mask[0], axis=-1)                                # (cam, Q)
    count = jnp.maximum(
        jnp.sum(jnp.any(mask, axis=-1).astype(jnp.float32), axis=1), 1.0)   # (B, Q)

    K1 = NHEAD * Zp * NUM_POINTS
    sampled_lvls = []
    for lvl, feat in enumerate(mlvl_feats):
        C, Hf, Wf = feat.shape[-3:]
        off_l = offs[:, :, :, lvl]                                   # (B, Q, H, Z, NP, 2)
        loc = (xy[:, :, :, None, :, None, :]                         # (B,cam,Q,1,Z,1,2)
               + off_l[:, None, :, :, :, :, :])                      # (B,1,Q,H,Z,NP,2)
        grid = loc.reshape(Bn * num_cam, Q, K1, 2)
        s = grid_sample_bilinear(feat.reshape(Bn * num_cam, C, Hf, Wf), grid)
        sampled_lvls.append(s.reshape(Bn, num_cam, C, Q, K1))
    samp = jnp.stack(sampled_lvls, axis=-1)                          # (B,cam,C,Q,K1,L)

    vmask = valid[None, :, None, :, None, None].astype(samp.dtype)
    slots = jnp.nan_to_num(jnp.sum(samp * vmask, axis=1))            # (B, C, Q, K1, L)
    sampled = jnp.transpose(slots, (0, 2, 1, 3, 4)).reshape(Bn, Q, slots.shape[1],
                                                            K1 * NUM_LEVELS)
    return sampled, count


# --------------------------- module forward ----------------------------------
def fuse_params(p):
    D = D_MODEL
    z = jnp.zeros((D, D), jnp.float32)
    # input to the fused QKV matmul is concat([query + qpe, query], -1)
    w_qkv = jnp.concatenate(
        [jnp.concatenate([p['wq'], p['wk'], z], axis=1),     # rows for (query + qpe)
         jnp.concatenate([z, z, p['wv']], axis=1)], axis=0)  # rows for query (value path)
    return {
        'pe_w1': p['pe_w1'], 'pe_w2': p['pe_w2'],
        'w_qkv': w_qkv,
        'b_qkv': jnp.concatenate([p['bq'], p['bk'], p['bv']]).reshape(1, 3 * D),
        'w_ao': p['w_ao'],
        'w_oa': jnp.concatenate([p['w_off'], p['w_attw']], axis=1),
        'b_oa': jnp.concatenate([p['b_off'], p['b_attw']]).reshape(1, N_OA),
        'vecA': jnp.stack([p['pe_b1'], p['pe_g1'], p['pe_be1'],
                           p['pe_b2'], p['pe_g2'], p['pe_be2'],
                           p['b_ao'], p['n1_g'], p['n1_b']], axis=0),
        'w_cop': p['w_cop'],
        'w_ff1': p['w_ff1'], 'b_ff1': p['b_ff1'].reshape(1, DIM_FF),
        'w_ff2': p['w_ff2'],
        'vecB': jnp.stack([p['b_cop'], p['n2_g'], p['n2_b'],
                           p['b_ff2'], p['n3_g'], p['n3_b']], axis=0),
    }


@jax.jit
def decoder_layer_forward(p, query, query_pos, mlvl_feats, lidar2img):
    fp = fuse_params(p)
    # 'b z h w d -> b (h w) (z d)' and 'b z h w d -> b (h w) z d'
    qp = jnp.transpose(query_pos, (0, 2, 3, 1, 4))
    qpe_in = qp.reshape(M_TOT, Z_PILLAR * 3)
    ref_pts = qp.reshape(B, NQ, Z_PILLAR, 3)

    tgt, offattw = fused_pre(query.reshape(M_TOT, D_MODEL), qpe_in, fp)
    off_raw = offattw[:, :N_OFF].reshape(B, NQ, N_OFF)
    attw = offattw[:, N_OFF:]                                   # (M, K_TOT)

    sampled, count = feature_sampling(mlvl_feats, ref_pts, off_raw, lidar2img)

    out = fused_post(sampled.reshape(M_TOT, D_MODEL, K_TOT), attw,
                     count.reshape(M_TOT, 1), tgt, fp)
    return out.reshape(B, NQ, D_MODEL)


# --------------------------- parameters / inputs ------------------------------
def init_params(key):
    ks = iter(jax.random.split(key, 24))

    def nrm(shape, scale=0.1):
        return scale * jax.random.normal(next(ks), shape, dtype=jnp.float32)

    ones = lambda n: jnp.ones((n,), jnp.float32)
    zeros = lambda n: jnp.zeros((n,), jnp.float32)
    p = {}
    # position_encoder: Linear(3Z,D) LN ReLU Linear(D,D) LN ReLU
    p['pe_w1'] = nrm((3 * Z_PILLAR, D_MODEL)); p['pe_b1'] = nrm((D_MODEL,), 0.02)
    p['pe_g1'] = ones(D_MODEL); p['pe_be1'] = zeros(D_MODEL)
    p['pe_w2'] = nrm((D_MODEL, D_MODEL)); p['pe_b2'] = nrm((D_MODEL,), 0.02)
    p['pe_g2'] = ones(D_MODEL); p['pe_be2'] = zeros(D_MODEL)
    # self_attn = nn.MultiheadAttention(d_model, nhead, batch_first=True)
    p['wq'] = nrm((D_MODEL, D_MODEL)); p['bq'] = nrm((D_MODEL,), 0.02)
    p['wk'] = nrm((D_MODEL, D_MODEL)); p['bk'] = nrm((D_MODEL,), 0.02)
    p['wv'] = nrm((D_MODEL, D_MODEL)); p['bv'] = nrm((D_MODEL,), 0.02)
    p['w_ao'] = nrm((D_MODEL, D_MODEL)); p['b_ao'] = zeros(D_MODEL)
    # cross_attn = Detr3DCrossAtten(d_model, ...)
    p['w_off'] = nrm((D_MODEL, N_OFF), 0.02)
    thetas = jnp.arange(NHEAD, dtype=jnp.float32) * (2.0 * math.pi / NHEAD)
    grid_init = jnp.stack([jnp.cos(thetas), jnp.sin(thetas)], -1)
    grid_init = grid_init / jnp.max(jnp.abs(grid_init), axis=-1, keepdims=True)
    grid_init = jnp.tile(grid_init.reshape(NHEAD, 1, 1, 2), (1, NUM_LEVELS, P_TOT, 1))
    grid_init = grid_init * (jnp.arange(P_TOT, dtype=jnp.float32) + 1.0)[None, None, :, None]
    # Detr3DCrossAtten.init_weight() bias pattern (scaled so synthetic samples land in-image).
    p['b_off'] = 0.05 * grid_init.reshape(-1)
    p['w_attw'] = nrm((D_MODEL, N_ATTW), 0.05); p['b_attw'] = nrm((N_ATTW,), 0.02)
    p['w_cop'] = nrm((D_MODEL, D_MODEL)); p['b_cop'] = zeros(D_MODEL)
    # norms + FFN
    for n in ('n1', 'n2', 'n3'):
        p[n + '_g'] = ones(D_MODEL); p[n + '_b'] = zeros(D_MODEL)
    p['w_ff1'] = nrm((D_MODEL, DIM_FF)); p['b_ff1'] = nrm((DIM_FF,), 0.02)
    p['w_ff2'] = nrm((DIM_FF, D_MODEL)); p['b_ff2'] = nrm((D_MODEL,), 0.02)
    return p


def make_lidar2img():
    fx = fy = 20.0
    cx, cy = IMG_W / 2.0, IMG_H / 2.0
    cam0 = jnp.array([[cx, fx, 0.0, 0.0],      # looks along +x
                      [cy, 0.0, fy, 0.0],
                      [1.0, 0.0, 0.0, 0.0],
                      [0.0, 0.0, 0.0, 1.0]], jnp.float32)
    cam1 = jnp.array([[fx, cx, 0.0, 0.0],      # looks along +y
                      [0.0, cy, fy, 0.0],
                      [0.0, 1.0, 0.0, 0.0],
                      [0.0, 0.0, 0.0, 1.0]], jnp.float32)
    l2i = jnp.stack([cam0, cam1], 0)
    return jnp.broadcast_to(l2i[None], (B, NUM_CAMS, 4, 4)).astype(jnp.float32)


if __name__ == "__main__":
    key = jax.random.PRNGKey(0)
    k_par, k_q, k_pos, k_f0, k_f1 = jax.random.split(key, 5)
    params = init_params(k_par)

    query = jax.random.normal(k_q, (B, NQ, D_MODEL), jnp.float32)
    query_pos = jax.random.uniform(k_pos, (B, Z_PILLAR, H_BEV, W_BEV, 3), jnp.float32)
    mlvl_feats = [
        jax.random.normal(k_f0, (B, NUM_CAMS, D_MODEL, FEAT_HW[0][0], FEAT_HW[0][1]), jnp.float32),
        jax.random.normal(k_f1, (B, NUM_CAMS, D_MODEL, FEAT_HW[1][0], FEAT_HW[1][1]), jnp.float32),
    ]
    lidar2img = make_lidar2img()

    out = decoder_layer_forward(params, query, query_pos, mlvl_feats, lidar2img)
    out = jax.block_until_ready(out)
    assert out.shape == (B, NQ, D_MODEL)
    assert bool(jnp.all(jnp.isfinite(out)))
    print("KERNEL_OK")
</pallas_src>

<mosaic_0001>
module attributes {stable_mosaic.version = 11 : i64} {
  func.func @_pre_kernel(%arg0: memref<32x32xf32, #tpu.memory_space<vmem>>, %arg1: memref<32x12xf32, #tpu.memory_space<vmem>>, %arg2: memref<12x32xf32, #tpu.memory_space<vmem>>, %arg3: memref<32x32xf32, #tpu.memory_space<vmem>>, %arg4: memref<64x96xf32, #tpu.memory_space<vmem>>, %arg5: memref<1x96xf32, #tpu.memory_space<vmem>>, %arg6: memref<32x32xf32, #tpu.memory_space<vmem>>, %arg7: memref<32x192xf32, #tpu.memory_space<vmem>>, %arg8: memref<1x192xf32, #tpu.memory_space<vmem>>, %arg9: memref<9x32xf32, #tpu.memory_space<vmem>>, %arg10: memref<32x32xf32, #tpu.memory_space<vmem>>, %arg11: memref<32x192xf32, #tpu.memory_space<vmem>>) attributes {dimension_semantics = [], scalar_prefetch = 0 : i64, scratch_operands = 0 : i64, tpu.core_type = #tpu.core_type<tc>} {
    %c0 = arith.constant 0 : index
    %c0_0 = arith.constant 0 : index
    %0 = vector.load %arg9[%c0, %c0_0] : memref<9x32xf32, #tpu.memory_space<vmem>>, vector<9x32xf32>
    %1 = vector.extract_strided_slice %0 {offsets = [0, 0], sizes = [1, 32], strides = [1, 1]} : vector<9x32xf32> to vector<1x32xf32>
    %2 = vector.extract_strided_slice %0 {offsets = [1, 0], sizes = [1, 32], strides = [1, 1]} : vector<9x32xf32> to vector<1x32xf32>
    %3 = vector.extract_strided_slice %0 {offsets = [2, 0], sizes = [1, 32], strides = [1, 1]} : vector<9x32xf32> to vector<1x32xf32>
    %4 = vector.extract_strided_slice %0 {offsets = [3, 0], sizes = [1, 32], strides = [1, 1]} : vector<9x32xf32> to vector<1x32xf32>
    %5 = vector.extract_strided_slice %0 {offsets = [4, 0], sizes = [1, 32], strides = [1, 1]} : vector<9x32xf32> to vector<1x32xf32>
    %6 = vector.extract_strided_slice %0 {offsets = [5, 0], sizes = [1, 32], strides = [1, 1]} : vector<9x32xf32> to vector<1x32xf32>
    %7 = vector.extract_strided_slice %0 {offsets = [6, 0], sizes = [1, 32], strides = [1, 1]} : vector<9x32xf32> to vector<1x32xf32>
    %8 = vector.extract_strided_slice %0 {offsets = [7, 0], sizes = [1, 32], strides = [1, 1]} : vector<9x32xf32> to vector<1x32xf32>
    %9 = vector.extract_strided_slice %0 {offsets = [8, 0], sizes = [1, 32], strides = [1, 1]} : vector<9x32xf32> to vector<1x32xf32>
    %c0_1 = arith.constant 0 : index
    %c0_2 = arith.constant 0 : index
    %10 = vector.load %arg0[%c0_1, %c0_2] : memref<32x32xf32, #tpu.memory_space<vmem>>, vector<32x32xf32>
    %c0_3 = arith.constant 0 : index
    %c0_4 = arith.constant 0 : index
    %11 = vector.load %arg1[%c0_3, %c0_4] : memref<32x12xf32, #tpu.memory_space<vmem>>, vector<32x12xf32>
    %c0_5 = arith.constant 0 : index
    %c0_6 = arith.constant 0 : index
    %12 = vector.load %arg2[%c0_5, %c0_6] : memref<12x32xf32, #tpu.memory_space<vmem>>, vector<12x32xf32>
    %cst = arith.constant dense<0.000000e+00> : vector<32x32xf32>
    %13 = tpu.matmul %11, %12, %cst {dimension_numbers = #tpu.dot_dimension_numbers<[1], [0], [0], [1], [0, 0, 1, 1], [], []>} : vector<32x12xf32>, vector<12x32xf32>, vector<32x32xf32> -> vector<32x32xf32>
    %14 = vector.broadcast %1 : vector<1x32xf32> to vector<32x32xf32>
    %15 = arith.addf %13, %14 : vector<32x32xf32>
    %cst_7 = arith.constant dense<0.000000e+00> : vector<32xf32>
    %16 = vector.multi_reduction <add>, %15, %cst_7 [1] : vector<32x32xf32> to vector<32xf32>
    %17 = vector.shape_cast %16 : vector<32xf32> to vector<32x1xf32>
    %cst_8 = arith.constant 3.200000e+01 : f32
    %18 = vector.broadcast %cst_8 : f32 to vector<32x1xf32>
    %19 = arith.divf %17, %18 : vector<32x1xf32>
    %20 = vector.broadcast %19 : vector<32x1xf32> to vector<32x32xf32>
    %21 = arith.subf %15, %20 : vector<32x32xf32>
    %22 = arith.mulf %21, %21 : vector<32x32xf32>
    %cst_9 = arith.constant dense<0.000000e+00> : vector<32xf32>
    %23 = vector.multi_reduction <add>, %22, %cst_9 [1] : vector<32x32xf32> to vector<32xf32>
    %24 = vector.shape_cast %23 : vector<32xf32> to vector<32x1xf32>
    %cst_10 = arith.constant 3.200000e+01 : f32
    %25 = vector.broadcast %cst_10 : f32 to vector<32x1xf32>
    %26 = arith.divf %24, %25 : vector<32x1xf32>
    %27 = vector.broadcast %19 : vector<32x1xf32> to vector<32x32xf32>
    %28 = arith.subf %15, %27 : vector<32x32xf32>
    %cst_11 = arith.constant 9.99999974E-6 : f32
    %29 = vector.broadcast %cst_11 : f32 to vector<32x1xf32>
    %30 = arith.addf %26, %29 : vector<32x1xf32>
    %31 = math.rsqrt %30 : vector<32x1xf32>
    %32 = vector.broadcast %31 : vector<32x1xf32> to vector<32x32xf32>
    %33 = arith.mulf %28, %32 : vector<32x32xf32>
    %34 = vector.broadcast %2 : vector<1x32xf32> to vector<32x32xf32>
    %35 = arith.mulf %33, %34 : vector<32x32xf32>
    %36 = vector.broadcast %3 : vector<1x32xf32> to vector<32x32xf32>
    %37 = arith.addf %35, %36 : vector<32x32xf32>
    %cst_12 = arith.constant 0.000000e+00 : f32
    %38 = vector.broadcast %cst_12 : f32 to vector<32x32xf32>
    %39 = arith.maximumf %37, %38 : vector<32x32xf32>
    %c0_13 = arith.constant 0 : index
    %c0_14 = arith.constant 0 : index
    %40 = vector.load %arg3[%c0_13, %c0_14] : memref<32x32xf32, #tpu.memory_space<vmem>>, vector<32x32xf32>
    %cst_15 = arith.constant dense<0.000000e+00> : vector<32x32xf32>
    %41 = tpu.matmul %39, %40, %cst_15 {dimension_numbers = #tpu.dot_dimension_numbers<[1], [0], [0], [1], [0, 0, 1, 1], [], []>} : vector<32x32xf32>, vector<32x32xf32>, vector<32x32xf32> -> vector<32x32xf32>
    %42 = vector.broadcast %4 : vector<1x32xf32> to vector<32x32xf32>
    %43 = arith.addf %41, %42 : vector<32x32xf32>
    %cst_16 = arith.constant dense<0.000000e+00> : vector<32xf32>
    %44 = vector.multi_reduction <add>, %43, %cst_16 [1] : vector<32x32xf32> to vector<32xf32>
    %45 = vector.shape_cast %44 : vector<32xf32> to vector<32x1xf32>
    %cst_17 = arith.constant 3.200000e+01 : f32
    %46 = vector.broadcast %cst_17 : f32 to vector<32x1xf32>
    %47 = arith.divf %45, %46 : vector<32x1xf32>
    %48 = vector.broadcast %47 : vector<32x1xf32> to vector<32x32xf32>
    %49 = arith.subf %43, %48 : vector<32x32xf32>
    %50 = arith.mulf %49, %49 : vector<32x32xf32>
    %cst_18 = arith.constant dense<0.000000e+00> : vector<32xf32>
    %51 = vector.multi_reduction <add>, %50, %cst_18 [1] : vector<32x32xf32> to vector<32xf32>
    %52 = vector.shape_cast %51 : vector<32xf32> to vector<32x1xf32>
    %cst_19 = arith.constant 3.200000e+01 : f32
    %53 = vector.broadcast %cst_19 : f32 to vector<32x1xf32>
    %54 = arith.divf %52, %53 : vector<32x1xf32>
    %55 = vector.broadcast %47 : vector<32x1xf32> to vector<32x32xf32>
    %56 = arith.subf %43, %55 : vector<32x32xf32>
    %cst_20 = arith.constant 9.99999974E-6 : f32
    %57 = vector.broadcast %cst_20 : f32 to vector<32x1xf32>
    %58 = arith.addf %54, %57 : vector<32x1xf32>
    %59 = math.rsqrt %58 : vector<32x1xf32>
    %60 = vector.broadcast %59 : vector<32x1xf32> to vector<32x32xf32>
    %61 = arith.mulf %56, %60 : vector<32x32xf32>
    %62 = vector.broadcast %5 : vector<1x32xf32> to vector<32x32xf32>
    %63 = arith.mulf %61, %62 : vector<32x32xf32>
    %64 = vector.broadcast %6 : vector<1x32xf32> to vector<32x32xf32>
    %65 = arith.addf %63, %64 : vector<32x32xf32>
    %cst_21 = arith.constant 0.000000e+00 : f32
    %66 = vector.broadcast %cst_21 : f32 to vector<32x32xf32>
    %67 = arith.maximumf %65, %66 : vector<32x32xf32>
    %68 = arith.addf %10, %67 : vector<32x32xf32>
    %69 = tpu.concatenate %68, %10 in 1 : vector<32x32xf32>, vector<32x32xf32> -> vector<32x64xf32>
    %c0_22 = arith.constant 0 : index
    %c0_23 = arith.constant 0 : index
    %70 = vector.load %arg4[%c0_22, %c0_23] : memref<64x96xf32, #tpu.memory_space<vmem>>, vector<64x96xf32>
    %cst_24 = arith.constant dense<0.000000e+00> : vector<32x96xf32>
    %71 = tpu.matmul %69, %70, %cst_24 {dimension_numbers = #tpu.dot_dimension_numbers<[1], [0], [0], [1], [0, 0, 1, 1], [], []>} : vector<32x64xf32>, vector<64x96xf32>, vector<32x96xf32> -> vector<32x96xf32>
    %c0_25 = arith.constant 0 : index
    %c0_26 = arith.constant 0 : index
    %72 = vector.load %arg5[%c0_25, %c0_26] : memref<1x96xf32, #tpu.memory_space<vmem>>, vector<1x96xf32>
    %73 = vector.broadcast %72 : vector<1x96xf32> to vector<32x96xf32>
    %74 = arith.addf %71, %73 : vector<32x96xf32>
    %75 = vector.shape_cast %74 : vector<32x96xf32> to vector<2x16x96xf32>
    %76 = vector.extract_strided_slice %75 {offsets = [0, 0, 0], sizes = [2, 16, 32], strides = [1, 1, 1]} : vector<2x16x96xf32> to vector<2x16x32xf32>
    %77 = vector.extract_strided_slice %75 {offsets = [0, 0, 32], sizes = [2, 16, 32], strides = [1, 1, 1]} : vector<2x16x96xf32> to vector<2x16x32xf32>
    %78 = vector.extract_strided_slice %75 {offsets = [0, 0, 64], sizes = [2, 16, 32], strides = [1, 1, 1]} : vector<2x16x96xf32> to vector<2x16x32xf32>
    %79 = vector.extract_strided_slice %76 {offsets = [0, 0, 0], sizes = [2, 16, 8], strides = [1, 1, 1]} : vector<2x16x32xf32> to vector<2x16x8xf32>
    %cst_27 = arith.constant 0.353553385 : f32
    %80 = vector.broadcast %cst_27 : f32 to vector<2x16x8xf32>
    %81 = arith.mulf %79, %80 : vector<2x16x8xf32>
    %82 = vector.extract_strided_slice %77 {offsets = [0, 0, 0], sizes = [2, 16, 8], strides = [1, 1, 1]} : vector<2x16x32xf32> to vector<2x16x8xf32>
    %83 = vector.extract_strided_slice %78 {offsets = [0, 0, 0], sizes = [2, 16, 8], strides = [1, 1, 1]} : vector<2x16x32xf32> to vector<2x16x8xf32>
    "tpu.trace_start"() <{level = 10 : i32, message = "bqd,bkd->bqk"}> : () -> ()
    %cst_28 = arith.constant dense<0.000000e+00> : vector<2x16x16xf32>
    %84 = tpu.matmul %81, %82, %cst_28 {dimension_numbers = #tpu.dot_dimension_numbers<[2], [2], [1], [1], [0, 0, 0, 1, 1, 1], [0], [0]>} : vector<2x16x8xf32>, vector<2x16x8xf32>, vector<2x16x16xf32> -> vector<2x16x16xf32>
    "tpu.trace_stop"() : () -> ()
    %cst_29 = arith.constant dense<0xFF800000> : vector<2x16xf32>
    %85 = vector.multi_reduction <maximumf>, %84, %cst_29 [2] : vector<2x16x16xf32> to vector<2x16xf32>
    %86 = vector.shape_cast %85 : vector<2x16xf32> to vector<2x16x1xf32>
    %87 = vector.broadcast %86 : vector<2x16x1xf32> to vector<2x16x16xf32>
    %88 = arith.subf %84, %87 : vector<2x16x16xf32>
    %89 = math.exp %88 : vector<2x16x16xf32>
    %cst_30 = arith.constant dense<0.000000e+00> : vector<2x16xf32>
    %90 = vector.multi_reduction <add>, %89, %cst_30 [2] : vector<2x16x16xf32> to vector<2x16xf32>
    %91 = vector.shape_cast %90 : vector<2x16xf32> to vector<2x16x1xf32>
    %92 = tpu.reciprocal %91 {approx = true} : vector<2x16x1xf32> -> vector<2x16x1xf32>
    %93 = vector.broadcast %92 : vector<2x16x1xf32> to vector<2x16x16xf32>
    %94 = arith.mulf %89, %93 : vector<2x16x16xf32>
    "tpu.trace_start"() <{level = 10 : i32, message = "bqk,bkd->bqd"}> : () -> ()
    %cst_31 = arith.constant dense<0.000000e+00> : vector<2x16x8xf32>
    %95 = tpu.matmul %94, %83, %cst_31 {dimension_numbers = #tpu.dot_dimension_numbers<[2], [1], [1], [2], [0, 0, 0, 1, 1, 2], [0], [0]>} : vector<2x16x16xf32>, vector<2x16x8xf32>, vector<2x16x8xf32> -> vector<2x16x8xf32>
    "tpu.trace_stop"() : () -> ()
    %96 = vector.extract_strided_slice %76 {offsets = [0, 0, 8], sizes = [2, 16, 8], strides = [1, 1, 1]} : vector<2x16x32xf32> to vector<2x16x8xf32>
    %cst_32 = arith.constant 0.353553385 : f32
    %97 = vector.broadcast %cst_32 : f32 to vector<2x16x8xf32>
    %98 = arith.mulf %96, %97 : vector<2x16x8xf32>
    %99 = vector.extract_strided_slice %77 {offsets = [0, 0, 8], sizes = [2, 16, 8], strides = [1, 1, 1]} : vector<2x16x32xf32> to vector<2x16x8xf32>
    %100 = vector.extract_strided_slice %78 {offsets = [0, 0, 8], sizes = [2, 16, 8], strides = [1, 1, 1]} : vector<2x16x32xf32> to vector<2x16x8xf32>
    "tpu.trace_start"() <{level = 10 : i32, message = "bqd,bkd->bqk"}> : () -> ()
    %cst_33 = arith.constant dense<0.000000e+00> : vector<2x16x16xf32>
    %101 = tpu.matmul %98, %99, %cst_33 {dimension_numbers = #tpu.dot_dimension_numbers<[2], [2], [1], [1], [0, 0, 0, 1, 1, 1], [0], [0]>} : vector<2x16x8xf32>, vector<2x16x8xf32>, vector<2x16x16xf32> -> vector<2x16x16xf32>
    "tpu.trace_stop"() : () -> ()
    %cst_34 = arith.constant dense<0xFF800000> : vector<2x16xf32>
    %102 = vector.multi_reduction <maximumf>, %101, %cst_34 [2] : vector<2x16x16xf32> to vector<2x16xf32>
    %103 = vector.shape_cast %102 : vector<2x16xf32> to vector<2x16x1xf32>
    %104 = vector.broadcast %103 : vector<2x16x1xf32> to vector<2x16x16xf32>
    %105 = arith.subf %101, %104 : vector<2x16x16xf32>
    %106 = math.exp %105 : vector<2x16x16xf32>
    %cst_35 = arith.constant dense<0.000000e+00> : vector<2x16xf32>
    %107 = vector.multi_reduction <add>, %106, %cst_35 [2] : vector<2x16x16xf32> to vector<2x16xf32>
    %108 = vector.shape_cast %107 : vector<2x16xf32> to vector<2x16x1xf32>
    %109 = tpu.reciprocal %108 {approx = true} : vector<2x16x1xf32> -> vector<2x16x1xf32>
    %110 = vector.broadcast %109 : vector<2x16x1xf32> to vector<2x16x16xf32>
    %111 = arith.mulf %106, %110 : vector<2x16x16xf32>
    "tpu.trace_start"() <{level = 10 : i32, message = "bqk,bkd->bqd"}> : () -> ()
    %cst_36 = arith.constant dense<0.000000e+00> : vector<2x16x8xf32>
    %112 = tpu.matmul %111, %100, %cst_36 {dimension_numbers = #tpu.dot_dimension_numbers<[2], [1], [1], [2], [0, 0, 0, 1, 1, 2], [0], [0]>} : vector<2x16x16xf32>, vector<2x16x8xf32>, vector<2x16x8xf32> -> vector<2x16x8xf32>
    "tpu.trace_stop"() : () -> ()
    %113 = vector.extract_strided_slice %76 {offsets = [0, 0, 16], sizes = [2, 16, 8], strides = [1, 1, 1]} : vector<2x16x32xf32> to vector<2x16x8xf32>
    %cst_37 = arith.constant 0.353553385 : f32
    %114 = vector.broadcast %cst_37 : f32 to vector<2x16x8xf32>
    %115 = arith.mulf %113, %114 : vector<2x16x8xf32>
    %116 = vector.extract_strided_slice %77 {offsets = [0, 0, 16], sizes = [2, 16, 8], strides = [1, 1, 1]} : vector<2x16x32xf32> to vector<2x16x8xf32>
    %117 = vector.extract_strided_slice %78 {offsets = [0, 0, 16], sizes = [2, 16, 8], strides = [1, 1, 1]} : vector<2x16x32xf32> to vector<2x16x8xf32>
    "tpu.trace_start"() <{level = 10 : i32, message = "bqd,bkd->bqk"}> : () -> ()
    %cst_38 = arith.constant dense<0.000000e+00> : vector<2x16x16xf32>
    %118 = tpu.matmul %115, %116, %cst_38 {dimension_numbers = #tpu.dot_dimension_numbers<[2], [2], [1], [1], [0, 0, 0, 1, 1, 1], [0], [0]>} : vector<2x16x8xf32>, vector<2x16x8xf32>, vector<2x16x16xf32> -> vector<2x16x16xf32>
    "tpu.trace_stop"() : () -> ()
    %cst_39 = arith.constant dense<0xFF800000> : vector<2x16xf32>
    %119 = vector.multi_reduction <maximumf>, %118, %cst_39 [2] : vector<2x16x16xf32> to vector<2x16xf32>
    %120 = vector.shape_cast %119 : vector<2x16xf32> to vector<2x16x1xf32>
    %121 = vector.broadcast %120 : vector<2x16x1xf32> to vector<2x16x16xf32>
    %122 = arith.subf %118, %121 : vector<2x16x16xf32>
    %123 = math.exp %122 : vector<2x16x16xf32>
    %cst_40 = arith.constant dense<0.000000e+00> : vector<2x16xf32>
    %124 = vector.multi_reduction <add>, %123, %cst_40 [2] : vector<2x16x16xf32> to vector<2x16xf32>
    %125 = vector.shape_cast %124 : vector<2x16xf32> to vector<2x16x1xf32>
    %126 = tpu.reciprocal %125 {approx = true} : vector<2x16x1xf32> -> vector<2x16x1xf32>
    %127 = vector.broadcast %126 : vector<2x16x1xf32> to vector<2x16x16xf32>
    %128 = arith.mulf %123, %127 : vector<2x16x16xf32>
    "tpu.trace_start"() <{level = 10 : i32, message = "bqk,bkd->bqd"}> : () -> ()
    %cst_41 = arith.constant dense<0.000000e+00> : vector<2x16x8xf32>
    %129 = tpu.matmul %128, %117, %cst_41 {dimension_numbers = #tpu.dot_dimension_numbers<[2], [1], [1], [2], [0, 0, 0, 1, 1, 2], [0], [0]>} : vector<2x16x16xf32>, vector<2x16x8xf32>, vector<2x16x8xf32> -> vector<2x16x8xf32>
    "tpu.trace_stop"() : () -> ()
    %130 = vector.extract_strided_slice %76 {offsets = [0, 0, 24], sizes = [2, 16, 8], strides = [1, 1, 1]} : vector<2x16x32xf32> to vector<2x16x8xf32>
    %cst_42 = arith.constant 0.353553385 : f32
    %131 = vector.broadcast %cst_42 : f32 to vector<2x16x8xf32>
    %132 = arith.mulf %130, %131 : vector<2x16x8xf32>
    %133 = vector.extract_strided_slice %77 {offsets = [0, 0, 24], sizes = [2, 16, 8], strides = [1, 1, 1]} : vector<2x16x32xf32> to vector<2x16x8xf32>
    %134 = vector.extract_strided_slice %78 {offsets = [0, 0, 24], sizes = [2, 16, 8], strides = [1, 1, 1]} : vector<2x16x32xf32> to vector<2x16x8xf32>
    "tpu.trace_start"() <{level = 10 : i32, message = "bqd,bkd->bqk"}> : () -> ()
    %cst_43 = arith.constant dense<0.000000e+00> : vector<2x16x16xf32>
    %135 = tpu.matmul %132, %133, %cst_43 {dimension_numbers = #tpu.dot_dimension_numbers<[2], [2], [1], [1], [0, 0, 0, 1, 1, 1], [0], [0]>} : vector<2x16x8xf32>, vector<2x16x8xf32>, vector<2x16x16xf32> -> vector<2x16x16xf32>
    "tpu.trace_stop"() : () -> ()
    %cst_44 = arith.constant dense<0xFF800000> : vector<2x16xf32>
    %136 = vector.multi_reduction <maximumf>, %135, %cst_44 [2] : vector<2x16x16xf32> to vector<2x16xf32>
    %137 = vector.shape_cast %136 : vector<2x16xf32> to vector<2x16x1xf32>
    %138 = vector.broadcast %137 : vector<2x16x1xf32> to vector<2x16x16xf32>
    %139 = arith.subf %135, %138 : vector<2x16x16xf32>
    %140 = math.exp %139 : vector<2x16x16xf32>
    %cst_45 = arith.constant dense<0.000000e+00> : vector<2x16xf32>
    %141 = vector.multi_reduction <add>, %140, %cst_45 [2] : vector<2x16x16xf32> to vector<2x16xf32>
    %142 = vector.shape_cast %141 : vector<2x16xf32> to vector<2x16x1xf32>
    %143 = tpu.reciprocal %142 {approx = true} : vector<2x16x1xf32> -> vector<2x16x1xf32>
    %144 = vector.broadcast %143 : vector<2x16x1xf32> to vector<2x16x16xf32>
    %145 = arith.mulf %140, %144 : vector<2x16x16xf32>
    "tpu.trace_start"() <{level = 10 : i32, message = "bqk,bkd->bqd"}> : () -> ()
    %cst_46 = arith.constant dense<0.000000e+00> : vector<2x16x8xf32>
    %146 = tpu.matmul %145, %134, %cst_46 {dimension_numbers = #tpu.dot_dimension_numbers<[2], [1], [1], [2], [0, 0, 0, 1, 1, 2], [0], [0]>} : vector<2x16x16xf32>, vector<2x16x8xf32>, vector<2x16x8xf32> -> vector<2x16x8xf32>
    "tpu.trace_stop"() : () -> ()
    %147 = tpu.concatenate %95, %112, %129, %146 in 2 : vector<2x16x8xf32>, vector<2x16x8xf32>, vector<2x16x8xf32>, vector<2x16x8xf32> -> vector<2x16x32xf32>
    %148 = vector.shape_cast %147 : vector<2x16x32xf32> to vector<32x32xf32>
    %c0_47 = arith.constant 0 : index
    %c0_48 = arith.constant 0 : index
    %149 = vector.load %arg6[%c0_47, %c0_48] : memref<32x32xf32, #tpu.memory_space<vmem>>, vector<32x32xf32>
    %cst_49 = arith.constant dense<0.000000e+00> : vector<32x32xf32>
    %150 = tpu.matmul %148, %149, %cst_49 {dimension_numbers = #tpu.dot_dimension_numbers<[1], [0], [0], [1], [0, 0, 1, 1], [], []>} : vector<32x32xf32>, vector<32x32xf32>, vector<32x32xf32> -> vector<32x32xf32>
    %151 = vector.broadcast %7 : vector<1x32xf32> to vector<32x32xf32>
    %152 = arith.addf %150, %151 : vector<32x32xf32>
    %153 = arith.addf %10, %152 : vector<32x32xf32>
    %cst_50 = arith.constant dense<0.000000e+00> : vector<32xf32>
    %154 = vector.multi_reduction <add>, %153, %cst_50 [1] : vector<32x32xf32> to vector<32xf32>
    %155 = vector.shape_cast %154 : vector<32xf32> to vector<32x1xf32>
    %cst_51 = arith.constant 3.200000e+01 : f32
    %156 = vector.broadcast %cst_51 : f32 to vector<32x1xf32>
    %157 = arith.divf %155, %156 : vector<32x1xf32>
    %158 = vector.broadcast %157 : vector<32x1xf32> to vector<32x32xf32>
    %159 = arith.subf %153, %158 : vector<32x32xf32>
    %160 = arith.mulf %159, %159 : vector<32x32xf32>
    %cst_52 = arith.constant dense<0.000000e+00> : vector<32xf32>
    %161 = vector.multi_reduction <add>, %160, %cst_52 [1] : vector<32x32xf32> to vector<32xf32>
    %162 = vector.shape_cast %161 : vector<32xf32> to vector<32x1xf32>
    %cst_53 = arith.constant 3.200000e+01 : f32
    %163 = vector.broadcast %cst_53 : f32 to vector<32x1xf32>
    %164 = arith.divf %162, %163 : vector<32x1xf32>
    %165 = vector.broadcast %157 : vector<32x1xf32> to vector<32x32xf32>
    %166 = arith.subf %153, %165 : vector<32x32xf32>
    %cst_54 = arith.constant 9.99999974E-6 : f32
    %167 = vector.broadcast %cst_54 : f32 to vector<32x1xf32>
    %168 = arith.addf %164, %167 : vector<32x1xf32>
    %169 = math.rsqrt %168 : vector<32x1xf32>
    %170 = vector.broadcast %169 : vector<32x1xf32> to vector<32x32xf32>
    %171 = arith.mulf %166, %170 : vector<32x32xf32>
    %172 = vector.broadcast %8 : vector<1x32xf32> to vector<32x32xf32>
    %173 = arith.mulf %171, %172 : vector<32x32xf32>
    %174 = vector.broadcast %9 : vector<1x32xf32> to vector<32x32xf32>
    %175 = arith.addf %173, %174 : vector<32x32xf32>
    %c0_55 = arith.constant 0 : index
    %c0_56 = arith.constant 0 : index
    %176 = vector.load %arg10[%c0_55, %c0_56] : memref<32x32xf32, #tpu.memory_space<vmem>>, vector<32x32xf32>
    tpu.vector_store %arg10[%c0_55, %c0_56], %175 {strides = array<i32>} : memref<32x32xf32, #tpu.memory_space<vmem>>, vector<32x32xf32>,
    %177 = arith.addf %175, %67 : vector<32x32xf32>
    %c0_57 = arith.constant 0 : index
    %c0_58 = arith.constant 0 : index
    %178 = vector.load %arg7[%c0_57, %c0_58] : memref<32x192xf32, #tpu.memory_space<vmem>>, vector<32x192xf32>
    %cst_59 = arith.constant dense<0.000000e+00> : vector<32x192xf32>
    %179 = tpu.matmul %177, %178, %cst_59 {dimension_numbers = #tpu.dot_dimension_numbers<[1], [0], [0], [1], [0, 0, 1, 1], [], []>} : vector<32x32xf32>, vector<32x192xf32>, vector<32x192xf32> -> vector<32x192xf32>
    %c0_60 = arith.constant 0 : index
    %c0_61 = arith.constant 0 : index
    %180 = vector.load %arg8[%c0_60, %c0_61] : memref<1x192xf32, #tpu.memory_space<vmem>>, vector<1x192xf32>
    %181 = vector.broadcast %180 : vector<1x192xf32> to vector<32x192xf32>
    %182 = arith.addf %179, %181 : vector<32x192xf32>
    %c0_62 = arith.constant 0 : index
    %c0_63 = arith.constant 0 : index
    %183 = vector.load %arg11[%c0_62, %c0_63] : memref<32x192xf32, #tpu.memory_space<vmem>>, vector<32x192xf32>
    tpu.vector_store %arg11[%c0_62, %c0_63], %182 {strides = array<i32>} : memref<32x192xf32, #tpu.memory_space<vmem>>, vector<32x192xf32>,
    return
  }
}

module attributes {stable_mosaic.version = 11 : i64} {
  func.func @_post_kernel(%arg0: memref<32x32x64xf32, #tpu.memory_space<vmem>>, %arg1: memref<32x64xf32, #tpu.memory_space<vmem>>, %arg2: memref<32x1xf32, #tpu.memory_space<vmem>>, %arg3: memref<32x32xf32, #tpu.memory_space<vmem>>, %arg4: memref<32x32xf32, #tpu.memory_space<vmem>>, %arg5: memref<32x64xf32, #tpu.memory_space<vmem>>, %arg6: memref<1x64xf32, #tpu.memory_space<vmem>>, %arg7: memref<64x32xf32, #tpu.memory_space<vmem>>, %arg8: memref<6x32xf32, #tpu.memory_space<vmem>>, %arg9: memref<32x32xf32, #tpu.memory_space<vmem>>) attributes {dimension_semantics = [], scalar_prefetch = 0 : i64, scratch_operands = 0 : i64, tpu.core_type = #tpu.core_type<tc>} {
    %c0 = arith.constant 0 : index
    %c0_0 = arith.constant 0 : index
    %0 = vector.load %arg8[%c0, %c0_0] : memref<6x32xf32, #tpu.memory_space<vmem>>, vector<6x32xf32>
    %1 = vector.extract_strided_slice %0 {offsets = [0, 0], sizes = [1, 32], strides = [1, 1]} : vector<6x32xf32> to vector<1x32xf32>
    %2 = vector.extract_strided_slice %0 {offsets = [1, 0], sizes = [1, 32], strides = [1, 1]} : vector<6x32xf32> to vector<1x32xf32>
    %3 = vector.extract_strided_slice %0 {offsets = [2, 0], sizes = [1, 32], strides = [1, 1]} : vector<6x32xf32> to vector<1x32xf32>
    %4 = vector.extract_strided_slice %0 {offsets = [3, 0], sizes = [1, 32], strides = [1, 1]} : vector<6x32xf32> to vector<1x32xf32>
    %5 = vector.extract_strided_slice %0 {offsets = [4, 0], sizes = [1, 32], strides = [1, 1]} : vector<6x32xf32> to vector<1x32xf32>
    %6 = vector.extract_strided_slice %0 {offsets = [5, 0], sizes = [1, 32], strides = [1, 1]} : vector<6x32xf32> to vector<1x32xf32>
    %c0_1 = arith.constant 0 : index
    %c0_2 = arith.constant 0 : index
    %c0_3 = arith.constant 0 : index
    %7 = vector.load %arg0[%c0_1, %c0_2, %c0_3] : memref<32x32x64xf32, #tpu.memory_space<vmem>>, vector<32x32x64xf32>
    %c0_4 = arith.constant 0 : index
    %c0_5 = arith.constant 0 : index
    %8 = vector.load %arg1[%c0_4, %c0_5] : memref<32x64xf32, #tpu.memory_space<vmem>>, vector<32x64xf32>
    %9 = vector.shape_cast %8 : vector<32x64xf32> to vector<32x1x64xf32>
    %10 = vector.broadcast %9 : vector<32x1x64xf32> to vector<32x32x64xf32>
    %11 = arith.mulf %7, %10 : vector<32x32x64xf32>
    %cst = arith.constant dense<0.000000e+00> : vector<32x32xf32>
    %12 = vector.multi_reduction <add>, %11, %cst [2] : vector<32x32x64xf32> to vector<32x32xf32>
    %c0_6 = arith.constant 0 : index
    %c0_7 = arith.constant 0 : index
    %13 = vector.load %arg2[%c0_6, %c0_7] : memref<32x1xf32, #tpu.memory_space<vmem>>, vector<32x1xf32>
    %14 = tpu.reciprocal %13 {approx = true} : vector<32x1xf32> -> vector<32x1xf32>
    %15 = vector.broadcast %14 : vector<32x1xf32> to vector<32x32xf32>
    %16 = arith.mulf %12, %15 : vector<32x32xf32>
    %c0_8 = arith.constant 0 : index
    %c0_9 = arith.constant 0 : index
    %17 = vector.load %arg3[%c0_8, %c0_9] : memref<32x32xf32, #tpu.memory_space<vmem>>, vector<32x32xf32>
    %c0_10 = arith.constant 0 : index
    %c0_11 = arith.constant 0 : index
    %18 = vector.load %arg4[%c0_10, %c0_11] : memref<32x32xf32, #tpu.memory_space<vmem>>, vector<32x32xf32>
    %cst_12 = arith.constant dense<0.000000e+00> : vector<32x32xf32>
    %19 = tpu.matmul %16, %18, %cst_12 {dimension_numbers = #tpu.dot_dimension_numbers<[1], [0], [0], [1], [0, 0, 1, 1], [], []>} : vector<32x32xf32>, vector<32x32xf32>, vector<32x32xf32> -> vector<32x32xf32>
    %20 = vector.broadcast %1 : vector<1x32xf32> to vector<32x32xf32>
    %21 = arith.addf %19, %20 : vector<32x32xf32>
    %22 = arith.addf %21, %17 : vector<32x32xf32>
    %23 = arith.addf %17, %22 : vector<32x32xf32>
    %cst_13 = arith.constant dense<0.000000e+00> : vector<32xf32>
    %24 = vector.multi_reduction <add>, %23, %cst_13 [1] : vector<32x32xf32> to vector<32xf32>
    %25 = vector.shape_cast %24 : vector<32xf32> to vector<32x1xf32>
    %cst_14 = arith.constant 3.200000e+01 : f32
    %26 = vector.broadcast %cst_14 : f32 to vector<32x1xf32>
    %27 = arith.divf %25, %26 : vector<32x1xf32>
    %28 = vector.broadcast %27 : vector<32x1xf32> to vector<32x32xf32>
    %29 = arith.subf %23, %28 : vector<32x32xf32>
    %30 = arith.mulf %29, %29 : vector<32x32xf32>
    %cst_15 = arith.constant dense<0.000000e+00> : vector<32xf32>
    %31 = vector.multi_reduction <add>, %30, %cst_15 [1] : vector<32x32xf32> to vector<32xf32>
    %32 = vector.shape_cast %31 : vector<32xf32> to vector<32x1xf32>
    %cst_16 = arith.constant 3.200000e+01 : f32
    %33 = vector.broadcast %cst_16 : f32 to vector<32x1xf32>
    %34 = arith.divf %32, %33 : vector<32x1xf32>
    %35 = vector.broadcast %27 : vector<32x1xf32> to vector<32x32xf32>
    %36 = arith.subf %23, %35 : vector<32x32xf32>
    %cst_17 = arith.constant 9.99999974E-6 : f32
    %37 = vector.broadcast %cst_17 : f32 to vector<32x1xf32>
    %38 = arith.addf %34, %37 : vector<32x1xf32>
    %39 = math.rsqrt %38 : vector<32x1xf32>
    %40 = vector.broadcast %39 : vector<32x1xf32> to vector<32x32xf32>
    %41 = arith.mulf %36, %40 : vector<32x32xf32>
    %42 = vector.broadcast %2 : vector<1x32xf32> to vector<32x32xf32>
    %43 = arith.mulf %41, %42 : vector<32x32xf32>
    %44 = vector.broadcast %3 : vector<1x32xf32> to vector<32x32xf32>
    %45 = arith.addf %43, %44 : vector<32x32xf32>
    %c0_18 = arith.constant 0 : index
    %c0_19 = arith.constant 0 : index
    %46 = vector.load %arg5[%c0_18, %c0_19] : memref<32x64xf32, #tpu.memory_space<vmem>>, vector<32x64xf32>
    %cst_20 = arith.constant dense<0.000000e+00> : vector<32x64xf32>
    %47 = tpu.matmul %45, %46, %cst_20 {dimension_numbers = #tpu.dot_dimension_numbers<[1], [0], [0], [1], [0, 0, 1, 1], [], []>} : vector<32x32xf32>, vector<32x64xf32>, vector<32x64xf32> -> vector<32x64xf32>
    %c0_21 = arith.constant 0 : index
    %c0_22 = arith.constant 0 : index
    %48 = vector.load %arg6[%c0_21, %c0_22] : memref<1x64xf32, #tpu.memory_space<vmem>>, vector<1x64xf32>
    %49 = vector.broadcast %48 : vector<1x64xf32> to vector<32x64xf32>
    %50 = arith.addf %47, %49 : vector<32x64xf32>
    %cst_23 = arith.constant 0.000000e+00 : f32
    %51 = vector.broadcast %cst_23 : f32 to vector<32x64xf32>
    %52 = arith.maximumf %50, %51 : vector<32x64xf32>
    %c0_24 = arith.constant 0 : index
    %c0_25 = arith.constant 0 : index
    %53 = vector.load %arg7[%c0_24, %c0_25] : memref<64x32xf32, #tpu.memory_space<vmem>>, vector<64x32xf32>
    %cst_26 = arith.constant dense<0.000000e+00> : vector<32x32xf32>
    %54 = tpu.matmul %52, %53, %cst_26 {dimension_numbers = #tpu.dot_dimension_numbers<[1], [0], [0], [1], [0, 0, 1, 1], [], []>} : vector<32x64xf32>, vector<64x32xf32>, vector<32x32xf32> -> vector<32x32xf32>
    %55 = vector.broadcast %4 : vector<1x32xf32> to vector<32x32xf32>
    %56 = arith.addf %54, %55 : vector<32x32xf32>
    %57 = arith.addf %45, %56 : vector<32x32xf32>
    %cst_27 = arith.constant dense<0.000000e+00> : vector<32xf32>
    %58 = vector.multi_reduction <add>, %57, %cst_27 [1] : vector<32x32xf32> to vector<32xf32>
    %59 = vector.shape_cast %58 : vector<32xf32> to vector<32x1xf32>
    %cst_28 = arith.constant 3.200000e+01 : f32
    %60 = vector.broadcast %cst_28 : f32 to vector<32x1xf32>
    %61 = arith.divf %59, %60 : vector<32x1xf32>
    %62 = vector.broadcast %61 : vector<32x1xf32> to vector<32x32xf32>
    %63 = arith.subf %57, %62 : vector<32x32xf32>
    %64 = arith.mulf %63, %63 : vector<32x32xf32>
    %cst_29 = arith.constant dense<0.000000e+00> : vector<32xf32>
    %65 = vector.multi_reduction <add>, %64, %cst_29 [1] : vector<32x32xf32> to vector<32xf32>
    %66 = vector.shape_cast %65 : vector<32xf32> to vector<32x1xf32>
    %cst_30 = arith.constant 3.200000e+01 : f32
    %67 = vector.broadcast %cst_30 : f32 to vector<32x1xf32>
    %68 = arith.divf %66, %67 : vector<32x1xf32>
    %69 = vector.broadcast %61 : vector<32x1xf32> to vector<32x32xf32>
    %70 = arith.subf %57, %69 : vector<32x32xf32>
    %cst_31 = arith.constant 9.99999974E-6 : f32
    %71 = vector.broadcast %cst_31 : f32 to vector<32x1xf32>
    %72 = arith.addf %68, %71 : vector<32x1xf32>
    %73 = math.rsqrt %72 : vector<32x1xf32>
    %74 = vector.broadcast %73 : vector<32x1xf32> to vector<32x32xf32>
    %75 = arith.mulf %70, %74 : vector<32x32xf32>
    %76 = vector.broadcast %5 : vector<1x32xf32> to vector<32x32xf32>
    %77 = arith.mulf %75, %76 : vector<32x32xf32>
    %78 = vector.broadcast %6 : vector<1x32xf32> to vector<32x32xf32>
    %79 = arith.addf %77, %78 : vector<32x32xf32>
    %c0_32 = arith.constant 0 : index
    %c0_33 = arith.constant 0 : index
    %80 = vector.load %arg9[%c0_32, %c0_33] : memref<32x32xf32, #tpu.memory_space<vmem>>, vector<32x32xf32>
    tpu.vector_store %arg9[%c0_32, %c0_33], %79 {strides = array<i32>} : memref<32x32xf32, #tpu.memory_space<vmem>>, vector<32x32xf32>,
    return
  }
}

</mosaic_0001>

<llo_original>
// kernel: decoder_layer_forward.2
$region0: #{decoder_layer_forward.2}
  #allocation0 [shape = 'u32[]', space=smem, size = 0x4, offset = 0x4, fixed_abs, tag = 'smem constant byte address 0x4 - core index']
  #allocation1 [shape = 'u32[144,128]{1,0:T(1,128)}', space=vmem, size = 0x12000, scoped, tag = 'internal scratch']
  %s0 = inlined_call_operand.hbm [shape: f32[32,32], index: 0, kind: input, shape index: {}]
  %s1 = inlined_call_operand.vmem [shape: f32[32,12], index: 1, kind: input, shape index: {}]
  %s2 = inlined_call_operand.hbm [shape: f32[12,32], index: 2, kind: input, shape index: {}]
  %s3 = inlined_call_operand.hbm [shape: f32[32,32], index: 3, kind: input, shape index: {}]
  %s4 = inlined_call_operand.vmem [shape: f32[64,96], index: 4, kind: input, shape index: {}]
  %s5 = inlined_call_operand.vmem [shape: f32[1,96], index: 5, kind: input, shape index: {}]
  %s6 = inlined_call_operand.hbm [shape: f32[32,32], index: 6, kind: input, shape index: {}]
  %s7 = inlined_call_operand.vmem [shape: f32[32,192], index: 7, kind: input, shape index: {}]
  %s8 = inlined_call_operand.vmem [shape: f32[1,192], index: 8, kind: input, shape index: {}]
  %s9 = inlined_call_operand.vmem [shape: f32[9,32], index: 9, kind: input, shape index: {}]
  %s10 = inlined_call_operand.vmem [shape: f32[32,32], index: 10, kind: output, shape index: {0}]
  %s11 = inlined_call_operand.vmem [shape: f32[32,192], index: 11, kind: output, shape index: {1}]
  %12 = xla_tuple %s10, %s11
  %s13 = sld [smem:[#allocation0]]
  $region74: #{decoder_layer_forward.2} parent=0
    _
  %s15 = ssub.s32 1, %s13
  %s16 = scalar_select 0, %s15, %s13
  $region1: #{decoder_layer_forward.2} parent=0
    #allocation2 [shape = 'u8[16384]{0}', space=vmem, size = 0x4000, scoped, tag = 'input window, operand 0, single buffered']
    #allocation3 [shape = 's32[1]{0}', space=sflag, size = 0x4, scoped, tag = 'scoped memory for decoder_layer_forward.2']
    #allocation4 [shape = 'u8[8192]{0}', space=vmem, size = 0x2000, scoped, tag = 'input window, operand 2, single buffered']
    #allocation5 [shape = 's32[1]{0}', space=sflag, size = 0x4, scoped, tag = 'scoped memory for decoder_layer_forward.2']
    #allocation6 [shape = 'u8[16384]{0}', space=vmem, size = 0x4000, scoped, tag = 'input window, operand 3, single buffered']
    #allocation7 [shape = 'u8[16384]{0}', space=vmem, size = 0x4000, scoped, tag = 'input window, operand 6, single buffered']
    #allocation8 [shape = 's32[1]{0}', space=sflag, size = 0x4, scoped, tag = 'scoped memory for decoder_layer_forward.2']
    %17 = vsyncpa [#allocation3], 0
    %18 = vsyncpa [#allocation5], 0
    %19 = vsyncpa [#allocation8], 0
    // Predicated region
    $region2: #{decoder_layer_forward.2} parent=1 // pred_check
      _
    $region3: #{decoder_layer_forward.2} parent=1 // pred_check_branch
      %21 = sbr.rel (0) target = $region5
    $region4: #{decoder_layer_forward.2} parent=1 // pred_region
      %s23 = ssub.s32 512, 512
      %24 = vsyncadd [#allocation3], %s23
      %s25 = sshll.u32 [#allocation2], 4
      %s26 = int_to_ptr.vmem [resolvable:$true] %s25
      %31 = dma.hbm_to_vmem [thread:$0]  %s0, 512, %s26, [#allocation3], 128, 128, 8
    $region5: #{decoder_layer_forward.2} parent=1 // pred_fallthru
      _
    // Predicated region
    $region6: #{decoder_layer_forward.2} parent=1 // pred_check
      _
    $region7: #{decoder_layer_forward.2} parent=1 // pred_check_branch
      %33 = sbr.rel (0) target = $region9
    $region8: #{decoder_layer_forward.2} parent=1 // pred_region
      _
    $region9: #{decoder_layer_forward.2} parent=1 // pred_fallthru
      _
    // Predicated region
    $region10: #{decoder_layer_forward.2} parent=1 // pred_check
      _
    $region11: #{decoder_layer_forward.2} parent=1 // pred_check_branch
      %35 = sbr.rel (0) target = $region13
    $region12: #{decoder_layer_forward.2} parent=1 // pred_region
      %s37 = ssub.s32 256, 256
      %38 = vsyncadd [#allocation5], %s37
      %s39 = sshll.u32 [#allocation4], 4
      %s40 = int_to_ptr.vmem [resolvable:$true] %s39
      %45 = dma.hbm_to_vmem [thread:$0]  %s2, 256, %s40, [#allocation5], 128, 128, 8
    $region13: #{decoder_layer_forward.2} parent=1 // pred_fallthru
      _
    // Predicated region
    $region14: #{decoder_layer_forward.2} parent=1 // pred_check
      _
    $region15: #{decoder_layer_forward.2} parent=1 // pred_check_branch
      %47 = sbr.rel (0) target = $region17
    $region16: #{decoder_layer_forward.2} parent=1 // pred_region
      %s49 = ssub.s32 512, 512
      %50 = vsyncadd [#allocation5], %s49
      %s51 = sshll.u32 [#allocation6], 4
      %s52 = int_to_ptr.vmem [resolvable:$true] %s51
      %57 = dma.hbm_to_vmem [thread:$0]  %s3, 512, %s52, [#allocation5], 128, 128, 8
    $region17: #{decoder_layer_forward.2} parent=1 // pred_fallthru
      _
    // Predicated region
    $region18: #{decoder_layer_forward.2} parent=1 // pred_check
      _
    $region19: #{decoder_layer_forward.2} parent=1 // pred_check_branch
      %59 = sbr.rel (0) target = $region21
    $region20: #{decoder_layer_forward.2} parent=1 // pred_region
      _
    $region21: #{decoder_layer_forward.2} parent=1 // pred_fallthru
      _
    // Predicated region
    $region22: #{decoder_layer_forward.2} parent=1 // pred_check
      _
    $region23: #{decoder_layer_forward.2} parent=1 // pred_check_branch
      %61 = sbr.rel (0) target = $region25
    $region24: #{decoder_layer_forward.2} parent=1 // pred_region
      _
    $region25: #{decoder_layer_forward.2} parent=1 // pred_fallthru
      _
    // Predicated region
    $region26: #{decoder_layer_forward.2} parent=1 // pred_check
      _
    $region27: #{decoder_layer_forward.2} parent=1 // pred_check_branch
      %63 = sbr.rel (0) target = $region29
    $region28: #{decoder_layer_forward.2} parent=1 // pred_region
      %s65 = ssub.s32 512, 512
      %66 = vsyncadd [#allocation8], %s65
      %s67 = sshll.u32 [#allocation7], 4
      %s68 = int_to_ptr.vmem [resolvable:$true] %s67
      %73 = dma.hbm_to_vmem [thread:$0]  %s6, 512, %s68, [#allocation8], 128, 128, 8
    $region29: #{decoder_layer_forward.2} parent=1 // pred_fallthru
      _
    // Predicated region
    $region30: #{decoder_layer_forward.2} parent=1 // pred_check
      _
    $region31: #{decoder_layer_forward.2} parent=1 // pred_check_branch
      %75 = sbr.rel (0) target = $region33
    $region32: #{decoder_layer_forward.2} parent=1 // pred_region
      _
    $region33: #{decoder_layer_forward.2} parent=1 // pred_fallthru
      _
    // Predicated region
    $region34: #{decoder_layer_forward.2} parent=1 // pred_check
      _
    $region35: #{decoder_layer_forward.2} parent=1 // pred_check_branch
      %77 = sbr.rel (0) target = $region37
    $region36: #{decoder_layer_forward.2} parent=1 // pred_region
      _
    $region37: #{decoder_layer_forward.2} parent=1 // pred_fallthru
      _
    // Predicated region
    $region38: #{decoder_layer_forward.2} parent=1 // pred_check
      _
    $region39: #{decoder_layer_forward.2} parent=1 // pred_check_branch
      %79 = sbr.rel (0) target = $region41
    $region40: #{decoder_layer_forward.2} parent=1 // pred_region
      _
    $region41: #{decoder_layer_forward.2} parent=1 // pred_fallthru
      _
    // Predicated region
    $region42: #{decoder_layer_forward.2} parent=1 // pred_check
      _
    $region43: #{decoder_layer_forward.2} parent=1 // pred_check_branch
      %81 = sbr.rel (0) target = $region45
    $region44: #{decoder_layer_forward.2} parent=1 // pred_region
      %82 = dma.done [#allocation3], 512
    $region45: #{decoder_layer_forward.2} parent=1 // pred_fallthru
      _
    // Predicated region
    $region46: #{decoder_layer_forward.2} parent=1 // pred_check
      _
    $region47: #{decoder_layer_forward.2} parent=1 // pred_check_branch
      %84 = sbr.rel (0) target = $region49
    $region48: #{decoder_layer_forward.2} parent=1 // pred_region
      %85 = dma.done [#allocation5], 256
    $region49: #{decoder_layer_forward.2} parent=1 // pred_fallthru
      _
    // Predicated region
    $region50: #{decoder_layer_forward.2} parent=1 // pred_check
      _
    $region51: #{decoder_layer_forward.2} parent=1 // pred_check_branch
      %87 = sbr.rel (0) target = $region53
    $region52: #{decoder_layer_forward.2} parent=1 // pred_region
      %88 = dma.done [#allocation5], 512
    $region53: #{decoder_layer_forward.2} parent=1 // pred_fallthru
      _
    // Predicated region
    $region54: #{decoder_layer_forward.2} parent=1 // pred_check
      _
    $region55: #{decoder_layer_forward.2} parent=1 // pred_check_branch
      %90 = sbr.rel (0) target = $region57
    $region56: #{decoder_layer_forward.2} parent=1 // pred_region
      %91 = dma.done [#allocation8], 512
    $region57: #{decoder_layer_forward.2} parent=1 // pred_fallthru
      _
    %v92 = vld [vmem:[%s9] sm:$0xff]
    %v93 = vld [vmem:[%s9 + $0x8] sm:$0x1]
    %v94 = vld [vmem:[#allocation2] sm:$0xff]
    %v95 = vld [vmem:[#allocation2 + $0x8] sm:$0xff]
    %v96 = vld [vmem:[#allocation2 + $0x10] sm:$0xff]
    %v97 = vld [vmem:[#allocation2 + $0x18] sm:$0xff]
    %v98 = vld [vmem:[%s1] sm:$0xff]
    %v99 = vld [vmem:[%s1 + $0x8] sm:$0xff]
    %v100 = vld [vmem:[%s1 + $0x10] sm:$0xff]
    %v101 = vld [vmem:[%s1 + $0x18] sm:$0xff]
    %v102 = vld [vmem:[#allocation4] sm:$0xff]
    %v103 = vld [vmem:[#allocation4 + $0x8] sm:$0xf]
    %v104 = vlaneseq
    %v105 = vshrl.u32 %v104, 7
    %v106 = vsub.s32 0, %v105
    %v107 = vrot.slane %v92, %v106
    %vm108 = vcmask 97280
    %v110 = vsel %vm108, %v98, 0
    %v113 = vsel %vm108, %v99, 0
    %v116 = vsel %vm108, %v100, 0
    %v119 = vsel %vm108, %v101, 0
    %vm121 = vcmask 1043456
    %v123 = vsel %vm121, %v103, 0
    %125 = vmatprep.subr.mxu0 0.0
    %126 = vmatpush1.msra.mxu0 %v102
    %127 = vmatprep.subr.mxu0 0.0
    %128 = vmatpush1.msra.mxu0 %v123
    %129 = vmatprep.subr.mxu0 0.0
    %130 = vmatpush1.msra.mxu0 0.0
    %131 = vmatprep.subr.mxu0 0.0
    %132 = vmatpush1.msra.mxu0 0.0
    %133 = vmatprep.subr.mxu0 0.0
    %134 = vmatpush1.msra.mxu0 0.0
    %135 = vmatprep.subr.mxu0 0.0
    %136 = vmatpush1.msra.mxu0 0.0
    %137 = vmatprep.subr.mxu0 0.0
    %138 = vmatpush1.msra.mxu0 0.0
    %139 = vmatprep.subr.mxu0 0.0
    %140 = vmatpush1.msra.mxu0 0.0
    %141 = vmatprep.subr.mxu0 0.0
    %142 = vmatpush1.msra.mxu0 0.0
    %143 = vmatprep.subr.mxu0 0.0
    %144 = vmatpush1.msra.mxu0 0.0
    %145 = vmatprep.subr.mxu0 0.0
    %146 = vmatpush1.msra.mxu0 0.0
    %147 = vmatprep.subr.mxu0 0.0
    %148 = vmatpush1.msra.mxu0 0.0
    %149 = vmatprep.subr.mxu0 0.0
    %150 = vmatpush1.msra.mxu0 0.0
    %151 = vmatprep.subr.mxu0 0.0
    %152 = vmatpush1.msra.mxu0 0.0
    %153 = vmatprep.subr.mxu0 0.0
    %154 = vmatpush1.msra.mxu0 0.0
    %155 = vmatprep.subr.mxu0 0.0
    %156 = vmatpush1.msra.mxu0 0.0
    %157 = vmatprep.subr.mxu0 0.0
    %158 = vmatpush1.msra.mxu0 0.0
    %159 = vmatprep.subr.mxu0 0.0
    %160 = vmatpush1.msra.mxu0 0.0
    %161 = vmatprep.subr.mxu0 0.0
    %162 = vmatpush1.msra.mxu0 0.0
    %163 = vmatprep.subr.mxu0 0.0
    %164 = vmatpush1.msra.mxu0 0.0
    %165 = vmatprep.subr.mxu0 0.0
    %166 = vmatpush1.msra.mxu0 0.0
    %167 = vmatprep.subr.mxu0 0.0
    %168 = vmatpush1.msra.mxu0 0.0
    %169 = vmatprep.subr.mxu0 0.0
    %170 = vmatpush1.msra.mxu0 0.0
    %171 = vmatprep.subr.mxu0 0.0
    %172 = vmatpush1.msra.mxu0 0.0
    %173 = vmatprep.subr.mxu0 0.0
    %174 = vmatpush1.msra.mxu0 0.0
    %175 = vmatprep.subr.mxu0 0.0
    %176 = vmatpush1.msra.mxu0 0.0
    %177 = vmatprep.subr.mxu0 0.0
    %178 = vmatpush1.msra.mxu0 0.0
    %179 = vmatprep.subr.mxu0 0.0
    %180 = vmatpush1.msra.mxu0 0.0
    %181 = vmatprep.subr.mxu0 0.0
    %182 = vmatpush1.msra.mxu0 0.0
    %183 = vmatprep.subr.mxu0 0.0
    %184 = vmatpush1.msra.mxu0 0.0
    %185 = vmatprep.subr.mxu0 0.0
    %186 = vmatpush1.msra.mxu0 0.0
    %187 = vmatprep.subr.mxu0 0.0
    %188 = vmatpush1.msra.mxu0 0.0
    %189 = vmatprep.mubr.f32.mxu0 0.0
    %190 = vmatmul.mubr.f32.gmra.mrb[0].mxu0 %v110
    %v191 = vpop.f32.mrb[0].mxu0
    %v192 = vadd.f32 %v107, %v191
    %v193 = vpop.f32.mrb[0].mxu0
    %194 = vmatprep.mubr.f32.mxu0 0.0
    %195 = vmatmul.mubr.f32.gmra.mrb[0].mxu0 %v113
    %v196 = vpop.f32.mrb[0].mxu0
    %v197 = vadd.f32 %v107, %v196
    %v198 = vpop.f32.mrb[0].mxu0
    %199 = vmatprep.mubr.f32.mxu0 0.0
    %200 = vmatmul.mubr.f32.gmra.mrb[0].mxu0 %v116
    %v201 = vpop.f32.mrb[0].mxu0
    %v202 = vadd.f32 %v107, %v201
    %v203 = vpop.f32.mrb[0].mxu0
    %204 = vmatprep.mubr.f32.mxu0 0.0
    %205 = vmatmul.mubr.f32.gmra.mrb[0].mxu0 %v119
    %v206 = vpop.f32.mrb[0].mxu0
    %v207 = vadd.f32 %v107, %v206
    %v208 = vpop.f32.mrb[0].mxu0
    %209 = vdwg.mxu0
    %vm210 = vcmask 261120
    %v211 = vsel %vm210, %v192, 0.0
    %212 = vadd.xlane.f32.xlu0 %v211
    %v213 = vpop.xlane.xlu0 %212
    %v214 = vsel %vm210, %v197, 0.0
    %215 = vadd.xlane.f32.xlu0 %v214
    %v216 = vpop.xlane.xlu0 %215
    %v217 = vsel %vm210, %v202, 0.0
    %218 = vadd.xlane.f32.xlu0 %v217
    %v219 = vpop.xlane.xlu0 %218
    %v220 = vsel %vm210, %v207, 0.0
    %221 = vadd.xlane.f32.xlu0 %v220
    %v222 = vpop.xlane.xlu0 %221
    %v223 = vrcp.pop 32.0
    %v224 = vmul.f32 %v213, %v223
    %v225 = vmul.f32 %v216, %v223
    %v226 = vmul.f32 %v219, %v223
    %v227 = vmul.f32 %v222, %v223
    %v228 = vsub.f32 %v192, %v224
    %v229 = vsub.f32 %v197, %v225
    %v230 = vsub.f32 %v202, %v226
    %v231 = vsub.f32 %v207, %v227
    %v232 = vmul.f32 %v228, %v228
    %v233 = vmul.f32 %v229, %v229
    %v234 = vmul.f32 %v230, %v230
    %v235 = vmul.f32 %v231, %v231
    %v236 = vsel %vm210, %v232, 0.0
    %237 = vadd.xlane.f32.xlu0 %v236
    %v238 = vpop.xlane.xlu0 %237
    %v239 = vsel %vm210, %v233, 0.0
    %240 = vadd.xlane.f32.xlu0 %v239
    %v241 = vpop.xlane.xlu0 %240
    %v242 = vsel %vm210, %v234, 0.0
    %243 = vadd.xlane.f32.xlu0 %v242
    %v244 = vpop.xlane.xlu0 %243
    %v245 = vsel %vm210, %v235, 0.0
    %246 = vadd.xlane.f32.xlu0 %v245
    %v247 = vpop.xlane.xlu0 %246
    %v248 = vmul.f32 %v238, %v223
    %v249 = vmul.f32 %v241, %v223
    %v250 = vmul.f32 %v244, %v223
    %v251 = vmul.f32 %v247, %v223
    %v252 = vadd.f32 %v248, 1e-05
    %v253 = vadd.f32 %v249, 1e-05
    %v254 = vadd.f32 %v250, 1e-05
    %v255 = vadd.f32 %v251, 1e-05
    %v256 = vrsqrt.pop %v252
    %v257 = vrsqrt.pop %v253
    %v258 = vrsqrt.pop %v254
    %v259 = vrsqrt.pop %v255
    %v260 = vmul.f32 %v228, %v256
    %v261 = vmul.f32 %v229, %v257
    %v262 = vmul.f32 %v230, %v258
    %v263 = vmul.f32 %v231, %v259
    %v264 = vlaneseq
    %v265 = vshrl.u32 %v264, 7
    %v266 = vsub.s32 1, %v265
    %v267 = vrot.slane %v92, %v266
    %v268 = vmul.f32 %v260, %v267
    %v269 = vmul.f32 %v261, %v267
    %v270 = vmul.f32 %v262, %v267
    %v271 = vmul.f32 %v263, %v267
    %v272 = vlaneseq
    %v273 = vshrl.u32 %v272, 7
    %v274 = vsub.s32 2, %v273
    %v275 = vrot.slane %v92, %v274
    %v276 = vadd.f32 %v268, %v275
    %v277 = vadd.f32 %v269, %v275
    %v278 = vadd.f32 %v270, %v275
    %v279 = vadd.f32 %v271, %v275
    %v280 = vmax.f32 %v276, 0.0
    %v281 = vmax.f32 %v277, 0.0
    %v282 = vmax.f32 %v278, 0.0
    %v283 = vmax.f32 %v279, 0.0
    %v284 = vld [vmem:[#allocation6] sm:$0xff]
    %v285 = vld [vmem:[#allocation6 + $0x8] sm:$0xff]
    %v286 = vld [vmem:[#allocation6 + $0x10] sm:$0xff]
    %v287 = vld [vmem:[#allocation6 + $0x18] sm:$0xff]
    %v288 = vlaneseq
    %v289 = vshrl.u32 %v288, 7
    %v290 = vsub.s32 3, %v289
    %v291 = vrot.slane %v92, %v290
    %v293 = vsel %vm210, %v280, 0
    %v296 = vsel %vm210, %v281, 0
    %v299 = vsel %vm210, %v282, 0
    %v302 = vsel %vm210, %v283, 0
    %304 = vmatprep.subr.mxu0 0.0
    %305 = vmatpush1.msra.mxu0 %v284
    %306 = vmatprep.subr.mxu0 0.0
    %307 = vmatpush1.msra.mxu0 %v285
    %308 = vmatprep.subr.mxu0 0.0
    %309 = vmatpush1.msra.mxu0 %v286
    %310 = vmatprep.subr.mxu0 0.0
    %311 = vmatpush1.msra.mxu0 %v287
    %312 = vmatprep.subr.mxu0 0.0
    %313 = vmatpush1.msra.mxu0 0.0
    %314 = vmatprep.subr.mxu0 0.0
    %315 = vmatpush1.msra.mxu0 0.0
    %316 = vmatprep.subr.mxu0 0.0
    %317 = vmatpush1.msra.mxu0 0.0
    %318 = vmatprep.subr.mxu0 0.0
    %319 = vmatpush1.msra.mxu0 0.0
    %320 = vmatprep.subr.mxu0 0.0
    %321 = vmatpush1.msra.mxu0 0.0
    %322 = vmatprep.subr.mxu0 0.0
    %323 = vmatpush1.msra.mxu0 0.0
    %324 = vmatprep.subr.mxu0 0.0
    %325 = vmatpush1.msra.mxu0 0.0
    %326 = vmatprep.subr.mxu0 0.0
    %327 = vmatpush1.msra.mxu0 0.0
    %328 = vmatprep.subr.mxu0 0.0
    %329 = vmatpush1.msra.mxu0 0.0
    %330 = vmatprep.subr.mxu0 0.0
    %331 = vmatpush1.msra.mxu0 0.0
    %332 = vmatprep.subr.mxu0 0.0
    %333 = vmatpush1.msra.mxu0 0.0
    %334 = vmatprep.subr.mxu0 0.0
    %335 = vmatpush1.msra.mxu0 0.0
    %336 = vmatprep.subr.mxu0 0.0
    %337 = vmatpush1.msra.mxu0 0.0
    %338 = vmatprep.subr.mxu0 0.0
    %339 = vmatpush1.msra.mxu0 0.0
    %340 = vmatprep.subr.mxu0 0.0
    %341 = vmatpush1.msra.mxu0 0.0
    %342 = vmatprep.subr.mxu0 0.0
    %343 = vmatpush1.msra.mxu0 0.0
    %344 = vmatprep.subr.mxu0 0.0
    %345 = vmatpush1.msra.mxu0 0.0
    %346 = vmatprep.subr.mxu0 0.0
    %347 = vmatpush1.msra.mxu0 0.0
    %348 = vmatprep.subr.mxu0 0.0
    %349 = vmatpush1.msra.mxu0 0.0
    %350 = vmatprep.subr.mxu0 0.0
    %351 = vmatpush1.msra.mxu0 0.0
    %352 = vmatprep.subr.mxu0 0.0
    %353 = vmatpush1.msra.mxu0 0.0
    %354 = vmatprep.subr.mxu0 0.0
    %355 = vmatpush1.msra.mxu0 0.0
    %356 = vmatprep.subr.mxu0 0.0
    %357 = vmatpush1.msra.mxu0 0.0
    %358 = vmatprep.subr.mxu0 0.0
    %359 = vmatpush1.msra.mxu0 0.0
    %360 = vmatprep.subr.mxu0 0.0
    %361 = vmatpush1.msra.mxu0 0.0
    %362 = vmatprep.subr.mxu0 0.0
    %363 = vmatpush1.msra.mxu0 0.0
    %364 = vmatprep.subr.mxu0 0.0
    %365 = vmatpush1.msra.mxu0 0.0
    %366 = vmatprep.subr.mxu0 0.0
    %367 = vmatpush1.msra.mxu0 0.0
    %368 = vmatprep.mubr.f32.mxu0 0.0
    %369 = vmatmul.mubr.f32.gmra.mrb[0].mxu0 %v293
    %v370 = vpop.f32.mrb[0].mxu0
    %v371 = vadd.f32 %v291, %v370
    %v372 = vpop.f32.mrb[0].mxu0
    %373 = vmatprep.mubr.f32.mxu0 0.0
    %374 = vmatmul.mubr.f32.gmra.mrb[0].mxu0 %v296
    %v375 = vpop.f32.mrb[0].mxu0
    %v376 = vadd.f32 %v291, %v375
    %v377 = vpop.f32.mrb[0].mxu0
    %378 = vmatprep.mubr.f32.mxu0 0.0
    %379 = vmatmul.mubr.f32.gmra.mrb[0].mxu0 %v299
    %v380 = vpop.f32.mrb[0].mxu0
    %v381 = vadd.f32 %v291, %v380
    %v382 = vpop.f32.mrb[0].mxu0
    %383 = vmatprep.mubr.f32.mxu0 0.0
    %384 = vmatmul.mubr.f32.gmra.mrb[0].mxu0 %v302
    %v385 = vpop.f32.mrb[0].mxu0
    %v386 = vadd.f32 %v291, %v385
    %v387 = vpop.f32.mrb[0].mxu0
    %388 = vdwg.mxu0
    %v389 = vsel %vm210, %v371, 0.0
    %390 = vadd.xlane.f32.xlu0 %v389
    %v391 = vpop.xlane.xlu0 %390
    %v392 = vsel %vm210, %v376, 0.0
    %393 = vadd.xlane.f32.xlu0 %v392
    %v394 = vpop.xlane.xlu0 %393
    %v395 = vsel %vm210, %v381, 0.0
    %396 = vadd.xlane.f32.xlu0 %v395
    %v397 = vpop.xlane.xlu0 %396
    %v398 = vsel %vm210, %v386, 0.0
    %399 = vadd.xlane.f32.xlu0 %v398
    %v400 = vpop.xlane.xlu0 %399
    %v401 = vmul.f32 %v391, %v223
    %v402 = vmul.f32 %v394, %v223
    %v403 = vmul.f32 %v397, %v223
    %v404 = vmul.f32 %v400, %v223
    %v405 = vsub.f32 %v371, %v401
    %v406 = vsub.f32 %v376, %v402
    %v407 = vsub.f32 %v381, %v403
    %v408 = vsub.f32 %v386, %v404
    %v409 = vmul.f32 %v405, %v405
    %v410 = vmul.f32 %v406, %v406
    %v411 = vmul.f32 %v407, %v407
    %v412 = vmul.f32 %v408, %v408
    %v413 = vsel %vm210, %v409, 0.0
    %414 = vadd.xlane.f32.xlu0 %v413
    %v415 = vpop.xlane.xlu0 %414
    %v416 = vsel %vm210, %v410, 0.0
    %417 = vadd.xlane.f32.xlu0 %v416
    %v418 = vpop.xlane.xlu0 %417
    %v419 = vsel %vm210, %v411, 0.0
    %420 = vadd.xlane.f32.xlu0 %v419
    %v421 = vpop.xlane.xlu0 %420
    %v422 = vsel %vm210, %v412, 0.0
    %423 = vadd.xlane.f32.xlu0 %v422
    %v424 = vpop.xlane.xlu0 %423
    %v425 = vmul.f32 %v415, %v223
    %v426 = vmul.f32 %v418, %v223
    %v427 = vmul.f32 %v421, %v223
    %v428 = vmul.f32 %v424, %v223
    %v429 = vadd.f32 %v425, 1e-05
    %v430 = vadd.f32 %v426, 1e-05
    %v431 = vadd.f32 %v427, 1e-05
    %v432 = vadd.f32 %v428, 1e-05
    %v433 = vrsqrt.pop %v429
    %v434 = vrsqrt.pop %v430
    %v435 = vrsqrt.pop %v431
    %v436 = vrsqrt.pop %v432
    %v437 = vmul.f32 %v405, %v433
    %v438 = vmul.f32 %v406, %v434
    %v439 = vmul.f32 %v407, %v435
    %v440 = vmul.f32 %v408, %v436
    %v441 = vlaneseq
    %v442 = vshrl.u32 %v441, 7
    %v443 = vsub.s32 4, %v442
    %v444 = vrot.slane %v92, %v443
    %v445 = vmul.f32 %v437, %v444
    %v446 = vmul.f32 %v438, %v444
    %v447 = vmul.f32 %v439, %v444
    %v448 = vmul.f32 %v440, %v444
    %v449 = vlaneseq
    %v450 = vshrl.u32 %v449, 7
    %v451 = vsub.s32 5, %v450
    %v452 = vrot.slane %v92, %v451
    %v453 = vadd.f32 %v445, %v452
    %v454 = vadd.f32 %v446, %v452
    %v455 = vadd.f32 %v447, %v452
    %v456 = vadd.f32 %v448, %v452
    %v457 = vmax.f32 %v453, 0.0
    %v458 = vmax.f32 %v454, 0.0
    %v459 = vmax.f32 %v455, 0.0
    %v460 = vmax.f32 %v456, 0.0
    %v461 = vadd.f32 %v94, %v457
    %v462 = vadd.f32 %v95, %v458
    %v463 = vadd.f32 %v96, %v459
    %v464 = vadd.f32 %v97, %v460
    %469 = vrot.lane.b32.xlu0 %v94, 32
    %v470 = vpop.permute.xlu0 %469
    %471 = vrot.lane.b32.xlu0 %v95, 32
    %v472 = vpop.permute.xlu0 %471
    %473 = vrot.lane.b32.xlu0 %v96, 32
    %v474 = vpop.permute.xlu0 %473
    %475 = vrot.lane.b32.xlu0 %v97, 32
    %v476 = vpop.permute.xlu0 %475
    %v481 = vsel %vm210, %v461, %v470
    %v482 = vsel %vm210, %v462, %v472
    %v483 = vsel %vm210, %v463, %v474
    %v484 = vsel %vm210, %v464, %v476
    %v485 = vld [vmem:[%s4] sm:$0xff]
    %v486 = vld [vmem:[%s4 + $0x8] sm:$0xff]
    %v487 = vld [vmem:[%s4 + $0x10] sm:$0xff]
    %v488 = vld [vmem:[%s4 + $0x18] sm:$0xff]
    %v489 = vld [vmem:[%s4 + $0x20] sm:$0xff]
    %v490 = vld [vmem:[%s4 + $0x28] sm:$0xff]
    %v491 = vld [vmem:[%s4 + $0x30] sm:$0xff]
    %v492 = vld [vmem:[%s4 + $0x38] sm:$0xff]
    %v493 = vld [vmem:[%s5] sm:$0x1]
    %v495 = vlaneseq
    %v496 = vshrl.u32 %v495, 7
    %v497 = vsub.s32 0, %v496
    %v498 = vrot.slane %v493, %v497
    %vm500 = vcmask 523264
    %v502 = vsel %vm500, %v481, 0
    %v505 = vsel %vm500, %v482, 0
    %v508 = vsel %vm500, %v483, 0
    %v511 = vsel %vm500, %v484, 0
    %513 = vmatprep.subr.mxu0 0.0
    %514 = vmatpush1.msra.mxu0 %v485
    %515 = vmatprep.subr.mxu0 0.0
    %516 = vmatpush1.msra.mxu0 %v486
    %517 = vmatprep.subr.mxu0 0.0
    %518 = vmatpush1.msra.mxu0 %v487
    %519 = vmatprep.subr.mxu0 0.0
    %520 = vmatpush1.msra.mxu0 %v488
    %521 = vmatprep.subr.mxu0 0.0
    %522 = vmatpush1.msra.mxu0 %v489
    %523 = vmatprep.subr.mxu0 0.0
    %524 = vmatpush1.msra.mxu0 %v490
    %525 = vmatprep.subr.mxu0 0.0
    %526 = vmatpush1.msra.mxu0 %v491
    %527 = vmatprep.subr.mxu0 0.0
    %528 = vmatpush1.msra.mxu0 %v492
    %529 = vmatprep.subr.mxu0 0.0
    %530 = vmatpush1.msra.mxu0 0.0
    %531 = vmatprep.subr.mxu0 0.0
    %532 = vmatpush1.msra.mxu0 0.0
    %533 = vmatprep.subr.mxu0 0.0
    %534 = vmatpush1.msra.mxu0 0.0
    %535 = vmatprep.subr.mxu0 0.0
    %536 = vmatpush1.msra.mxu0 0.0
    %537 = vmatprep.subr.mxu0 0.0
    %538 = vmatpush1.msra.mxu0 0.0
    %539 = vmatprep.subr.mxu0 0.0
    %540 = vmatpush1.msra.mxu0 0.0
    %541 = vmatprep.subr.mxu0 0.0
    %542 = vmatpush1.msra.mxu0 0.0
    %543 = vmatprep.subr.mxu0 0.0
    %544 = vmatpush1.msra.mxu0 0.0
    %545 = vmatprep.subr.mxu0 0.0
    %546 = vmatpush1.msra.mxu0 0.0
    %547 = vmatprep.subr.mxu0 0.0
    %548 = vmatpush1.msra.mxu0 0.0
    %549 = vmatprep.subr.mxu0 0.0
    %550 = vmatpush1.msra.mxu0 0.0
    %551 = vmatprep.subr.mxu0 0.0
    %552 = vmatpush1.msra.mxu0 0.0
    %553 = vmatprep.subr.mxu0 0.0
    %554 = vmatpush1.msra.mxu0 0.0
    %555 = vmatprep.subr.mxu0 0.0
    %556 = vmatpush1.msra.mxu0 0.0
    %557 = vmatprep.subr.mxu0 0.0
    %558 = vmatpush1.msra.mxu0 0.0
    %559 = vmatprep.subr.mxu0 0.0
    %560 = vmatpush1.msra.mxu0 0.0
    %561 = vmatprep.subr.mxu0 0.0
    %562 = vmatpush1.msra.mxu0 0.0
    %563 = vmatprep.subr.mxu0 0.0
    %564 = vmatpush1.msra.mxu0 0.0
    %565 = vmatprep.subr.mxu0 0.0
    %566 = vmatpush1.msra.mxu0 0.0
    %567 = vmatprep.subr.mxu0 0.0
    %568 = vmatpush1.msra.mxu0 0.0
    %569 = vmatprep.subr.mxu0 0.0
    %570 = vmatpush1.msra.mxu0 0.0
    %571 = vmatprep.subr.mxu0 0.0
    %572 = vmatpush1.msra.mxu0 0.0
    %573 = vmatprep.subr.mxu0 0.0
    %574 = vmatpush1.msra.mxu0 0.0
    %575 = vmatprep.subr.mxu0 0.0
    %576 = vmatpush1.msra.mxu0 0.0
    %577 = vmatprep.mubr.f32.mxu0 0.0
    %578 = vmatmul.mubr.f32.gmra.mrb[0].mxu0 %v502
    %v579 = vpop.f32.mrb[0].mxu0
    %v580 = vadd.f32 %v498, %v579
    %v581 = vpop.f32.mrb[0].mxu0
    %582 = vmatprep.mubr.f32.mxu0 0.0
    %583 = vmatmul.mubr.f32.gmra.mrb[0].mxu0 %v505
    %v584 = vpop.f32.mrb[0].mxu0
    %v585 = vadd.f32 %v498, %v584
    %v586 = vpop.f32.mrb[0].mxu0
    %587 = vmatprep.mubr.f32.mxu0 0.0
    %588 = vmatmul.mubr.f32.gmra.mrb[0].mxu0 %v508
    %v589 = vpop.f32.mrb[0].mxu0
    %v590 = vadd.f32 %v498, %v589
    %v591 = vpop.f32.mrb[0].mxu0
    %592 = vmatprep.mubr.f32.mxu0 0.0
    %593 = vmatmul.mubr.f32.gmra.mrb[0].mxu0 %v511
    %v594 = vpop.f32.mrb[0].mxu0
    %v595 = vadd.f32 %v498, %v594
    %v596 = vpop.f32.mrb[0].mxu0
    %597 = vdwg.mxu0
    %v598 = vmul.f32 %v580, 0.35355338
    %v599 = vmul.f32 %v585, 0.35355338
    %v600 = vmul.f32 %v590, 0.35355338
    %v601 = vmul.f32 %v595, 0.35355338
    %604 = vrot.lane.b32.xlu0 %v580, 96
    %v605 = vpop.permute.xlu0 %604
    %606 = vrot.lane.b32.xlu0 %v585, 96
    %v607 = vpop.permute.xlu0 %606
    %vm608 = vcmask 64512
    %v610 = vsel %vm608, %v598, 0
    %v613 = vsel %vm608, %v599, 0
    %v615 = vsel %vm608, %v605, 0
    %v617 = vsel %vm608, %v607, 0
    %619 = vmatprep.subr.mxu0 0.0
    %620 = vmatpush1.xpose.msra.mxu0 %v615
    %621 = vmatprep.subr.mxu0 0.0
    %622 = vmatpush1.xpose.msra.mxu0 %v617
    %623 = vmatprep.subr.mxu0 0.0
    %624 = vmatpush1.xpose.msra.mxu0 0.0
    %625 = vmatprep.subr.mxu0 0.0
    %626 = vmatpush1.xpose.msra.mxu0 0.0
    %627 = vmatprep.subr.mxu0 0.0
    %628 = vmatpush1.xpose.msra.mxu0 0.0
    %629 = vmatprep.subr.mxu0 0.0
    %630 = vmatpush1.xpose.msra.mxu0 0.0
    %631 = vmatprep.subr.mxu0 0.0
    %632 = vmatpush1.xpose.msra.mxu0 0.0
    %633 = vmatprep.subr.mxu0 0.0
    %634 = vmatpush1.xpose.msra.mxu0 0.0
    %635 = vmatprep.subr.mxu0 0.0
    %636 = vmatpush1.xpose.msra.mxu0 0.0
    %637 = vmatprep.subr.mxu0 0.0
    %638 = vmatpush1.xpose.msra.mxu0 0.0
    %639 = vmatprep.subr.mxu0 0.0
    %640 = vmatpush1.xpose.msra.mxu0 0.0
    %641 = vmatprep.subr.mxu0 0.0
    %642 = vmatpush1.xpose.msra.mxu0 0.0
    %643 = vmatprep.subr.mxu0 0.0
    %644 = vmatpush1.xpose.msra.mxu0 0.0
    %645 = vmatprep.subr.mxu0 0.0
    %646 = vmatpush1.xpose.msra.mxu0 0.0
    %647 = vmatprep.subr.mxu0 0.0
    %648 = vmatpush1.xpose.msra.mxu0 0.0
    %649 = vmatprep.subr.mxu0 0.0
    %650 = vmatpush1.xpose.msra.mxu0 0.0
    %651 = vmatprep.subr.mxu0 0.0
    %652 = vmatpush1.xpose.msra.mxu0 0.0
    %653 = vmatprep.subr.mxu0 0.0
    %654 = vmatpush1.xpose.msra.mxu0 0.0
    %655 = vmatprep.subr.mxu0 0.0
    %656 = vmatpush1.xpose.msra.mxu0 0.0
    %657 = vmatprep.subr.mxu0 0.0
    %658 = vmatpush1.xpose.msra.mxu0 0.0
    %659 = vmatprep.subr.mxu0 0.0
    %660 = vmatpush1.xpose.msra.mxu0 0.0
    %661 = vmatprep.subr.mxu0 0.0
    %662 = vmatpush1.xpose.msra.mxu0 0.0
    %663 = vmatprep.subr.mxu0 0.0
    %664 = vmatpush1.xpose.msra.mxu0 0.0
    %665 = vmatprep.subr.mxu0 0.0
    %666 = vmatpush1.xpose.msra.mxu0 0.0
    %667 = vmatprep.subr.mxu0 0.0
    %668 = vmatpush1.xpose.msra.mxu0 0.0
    %669 = vmatprep.subr.mxu0 0.0
    %670 = vmatpush1.xpose.msra.mxu0 0.0
    %671 = vmatprep.subr.mxu0 0.0
    %672 = vmatpush1.xpose.msra.mxu0 0.0
    %673 = vmatprep.subr.mxu0 0.0
    %674 = vmatpush1.xpose.msra.mxu0 0.0
    %675 = vmatprep.subr.mxu0 0.0
    %676 = vmatpush1.xpose.msra.mxu0 0.0
    %677 = vmatprep.subr.mxu0 0.0
    %678 = vmatpush1.xpose.msra.mxu0 0.0
    %679 = vmatprep.subr.mxu0 0.0
    %680 = vmatpush1.xpose.msra.mxu0 0.0
    %681 = vmatprep.subr.mxu0 0.0
    %682 = vmatpush1.xpose.msra.mxu0 0.0
    %683 = vmatprep.mubr.f32.mxu0 0.0
    %684 = vmatmul.mubr.f32.gmra.mrb[0].mxu0 %v610
    %v685 = vpop.f32.mrb[0].mxu0
    %v686 = vadd.f32 0.0, %v685
    %v687 = vpop.f32.mrb[0].mxu0
    %688 = vmatprep.mubr.f32.mxu0 0.0
    %689 = vmatmul.mubr.f32.gmra.mrb[0].mxu0 %v613
    %v690 = vpop.f32.mrb[0].mxu0
    %v691 = vadd.f32 0.0, %v690
    %v692 = vpop.f32.mrb[0].mxu0
    %693 = vdwg.mxu0
    %696 = vrot.lane.b32.xlu0 %v590, 96
    %v697 = vpop.permute.xlu0 %696
    %698 = vrot.lane.b32.xlu0 %v595, 96
    %v699 = vpop.permute.xlu0 %698
    %v701 = vsel %vm608, %v600, 0
    %v704 = vsel %vm608, %v601, 0
    %v706 = vsel %vm608, %v697, 0
    %v708 = vsel %vm608, %v699, 0
    %710 = vmatprep.subr.mxu0 0.0
    %711 = vmatpush1.xpose.msra.mxu0 %v706
    %712 = vmatprep.subr.mxu0 0.0
    %713 = vmatpush1.xpose.msra.mxu0 %v708
    %714 = vmatprep.subr.mxu0 0.0
    %715 = vmatpush1.xpose.msra.mxu0 0.0
    %716 = vmatprep.subr.mxu0 0.0
    %717 = vmatpush1.xpose.msra.mxu0 0.0
    %718 = vmatprep.subr.mxu0 0.0
    %719 = vmatpush1.xpose.msra.mxu0 0.0
    %720 = vmatprep.subr.mxu0 0.0
    %721 = vmatpush1.xpose.msra.mxu0 0.0
    %722 = vmatprep.subr.mxu0 0.0
    %723 = vmatpush1.xpose.msra.mxu0 0.0
    %724 = vmatprep.subr.mxu0 0.0
    %725 = vmatpush1.xpose.msra.mxu0 0.0
    %726 = vmatprep.subr.mxu0 0.0
    %727 = vmatpush1.xpose.msra.mxu0 0.0
    %728 = vmatprep.subr.mxu0 0.0
    %729 = vmatpush1.xpose.msra.mxu0 0.0
    %730 = vmatprep.subr.mxu0 0.0
    %731 = vmatpush1.xpose.msra.mxu0 0.0
    %732 = vmatprep.subr.mxu0 0.0
    %733 = vmatpush1.xpose.msra.mxu0 0.0
    %734 = vmatprep.subr.mxu0 0.0
    %735 = vmatpush1.xpose.msra.mxu0 0.0
    %736 = vmatprep.subr.mxu0 0.0
    %737 = vmatpush1.xpose.msra.mxu0 0.0
    %738 = vmatprep.subr.mxu0 0.0
    %739 = vmatpush1.xpose.msra.mxu0 0.0
    %740 = vmatprep.subr.mxu0 0.0
    %741 = vmatpush1.xpose.msra.mxu0 0.0
    %742 = vmatprep.subr.mxu0 0.0
    %743 = vmatpush1.xpose.msra.mxu0 0.0
    %744 = vmatprep.subr.mxu0 0.0
    %745 = vmatpush1.xpose.msra.mxu0 0.0
    %746 = vmatprep.subr.mxu0 0.0
    %747 = vmatpush1.xpose.msra.mxu0 0.0
    %748 = vmatprep.subr.mxu0 0.0
    %749 = vmatpush1.xpose.msra.mxu0 0.0
    %750 = vmatprep.subr.mxu0 0.0
    %751 = vmatpush1.xpose.msra.mxu0 0.0
    %752 = vmatprep.subr.mxu0 0.0
    %753 = vmatpush1.xpose.msra.mxu0 0.0
    %754 = vmatprep.subr.mxu0 0.0
    %755 = vmatpush1.xpose.msra.mxu0 0.0
    %756 = vmatprep.subr.mxu0 0.0
    %757 = vmatpush1.xpose.msra.mxu0 0.0
    %758 = vmatprep.subr.mxu0 0.0
    %759 = vmatpush1.xpose.msra.mxu0 0.0
    %760 = vmatprep.subr.mxu0 0.0
    %761 = vmatpush1.xpose.msra.mxu0 0.0
    %762 = vmatprep.subr.mxu0 0.0
    %763 = vmatpush1.xpose.msra.mxu0 0.0
    %764 = vmatprep.subr.mxu0 0.0
    %765 = vmatpush1.xpose.msra.mxu0 0.0
    %766 = vmatprep.subr.mxu0 0.0
    %767 = vmatpush1.xpose.msra.mxu0 0.0
    %768 = vmatprep.subr.mxu0 0.0
    %769 = vmatpush1.xpose.msra.mxu0 0.0
    %770 = vmatprep.subr.mxu0 0.0
    %771 = vmatpush1.xpose.msra.mxu0 0.0
    %772 = vmatprep.subr.mxu0 0.0
    %773 = vmatpush1.xpose.msra.mxu0 0.0
    %774 = vmatprep.mubr.f32.mxu0 0.0
    %775 = vmatmul.mubr.f32.gmra.mrb[0].mxu0 %v701
    %v776 = vpop.f32.mrb[0].mxu0
    %v777 = vadd.f32 0.0, %v776
    %v778 = vpop.f32.mrb[0].mxu0
    %779 = vmatprep.mubr.f32.mxu0 0.0
    %780 = vmatmul.mubr.f32.gmra.mrb[0].mxu0 %v704
    %v781 = vpop.f32.mrb[0].mxu0
    %v782 = vadd.f32 0.0, %v781
    %v783 = vpop.f32.mrb[0].mxu0
    %784 = vdwg.mxu0
    %vm785 = vcmask 130048
    %v786 = vsel %vm785, %v686, -inf
    %787 = vmax.xlane.f32.xlu0 %v786
    %v788 = vpop.xlane.xlu0 %787
    %v789 = vsel %vm785, %v691, -inf
    %790 = vmax.xlane.f32.xlu0 %v789
    %v791 = vpop.xlane.xlu0 %790
    %v792 = vsel %vm785, %v777, -inf
    %793 = vmax.xlane.f32.xlu0 %v792
    %v794 = vpop.xlane.xlu0 %793
    %v795 = vsel %vm785, %v782, -inf
    %796 = vmax.xlane.f32.xlu0 %v795
    %v797 = vpop.xlane.xlu0 %796
    %v798 = vsub.f32 %v686, %v788
    %v799 = vsub.f32 %v691, %v791
    %v800 = vsub.f32 %v777, %v794
    %v801 = vsub.f32 %v782, %v797
    %v802 = vmul.f32 %v798, 1.442695
    %v803 = vpow.pop %v802
    %v804 = vmul.f32 %v799, 1.442695
    %v805 = vpow.pop %v804
    %v806 = vmul.f32 %v800, 1.442695
    %v807 = vpow.pop %v806
    %v808 = vmul.f32 %v801, 1.442695
    %v809 = vpow.pop %v808
    %v810 = vsel %vm785, %v803, 0.0
    %811 = vadd.xlane.f32.xlu0 %v810
    %v812 = vpop.xlane.xlu0 %811
    %v813 = vsel %vm785, %v805, 0.0
    %814 = vadd.xlane.f32.xlu0 %v813
    %v815 = vpop.xlane.xlu0 %814
    %v816 = vsel %vm785, %v807, 0.0
    %817 = vadd.xlane.f32.xlu0 %v816
    %v818 = vpop.xlane.xlu0 %817
    %v819 = vsel %vm785, %v809, 0.0
    %820 = vadd.xlane.f32.xlu0 %v819
    %v821 = vpop.xlane.xlu0 %820
    %v822 = vrcp.pop %v812
    %v823 = vrcp.pop %v815
    %v824 = vrcp.pop %v818
    %v825 = vrcp.pop %v821
    %v826 = vmul.f32 %v803, %v822
    %v827 = vmul.f32 %v805, %v823
    %v828 = vmul.f32 %v807, %v824
    %v829 = vmul.f32 %v809, %v825
    %830 = vrot.lane.b32.xlu0 %v580, 64
    %v831 = vpop.permute.xlu0 %830
    %832 = vrot.lane.b32.xlu0 %v585, 64
    %v833 = vpop.permute.xlu0 %832
    %v837 = vsel %vm785, %v826, 0
    %v840 = vsel %vm785, %v827, 0
    %842 = vmatprep.subr.mxu0 0.0
    %843 = vmatpush1.msra.mxu0 %v831
    %844 = vmatprep.subr.mxu0 0.0
    %845 = vmatpush1.msra.mxu0 %v833
    %846 = vmatprep.subr.mxu0 0.0
    %847 = vmatpush1.msra.mxu0 0.0
    %848 = vmatprep.subr.mxu0 0.0
    %849 = vmatpush1.msra.mxu0 0.0
    %850 = vmatprep.subr.mxu0 0.0
    %851 = vmatpush1.msra.mxu0 0.0
    %852 = vmatprep.subr.mxu0 0.0
    %853 = vmatpush1.msra.mxu0 0.0
    %854 = vmatprep.subr.mxu0 0.0
    %855 = vmatpush1.msra.mxu0 0.0
    %856 = vmatprep.subr.mxu0 0.0
    %857 = vmatpush1.msra.mxu0 0.0
    %858 = vmatprep.subr.mxu0 0.0
    %859 = vmatpush1.msra.mxu0 0.0
    %860 = vmatprep.subr.mxu0 0.0
    %861 = vmatpush1.msra.mxu0 0.0
    %862 = vmatprep.subr.mxu0 0.0
    %863 = vmatpush1.msra.mxu0 0.0
    %864 = vmatprep.subr.mxu0 0.0
    %865 = vmatpush1.msra.mxu0 0.0
    %866 = vmatprep.subr.mxu0 0.0
    %867 = vmatpush1.msra.mxu0 0.0
    %868 = vmatprep.subr.mxu0 0.0
    %869 = vmatpush1.msra.mxu0 0.0
    %870 = vmatprep.subr.mxu0 0.0
    %871 = vmatpush1.msra.mxu0 0.0
    %872 = vmatprep.subr.mxu0 0.0
    %873 = vmatpush1.msra.mxu0 0.0
    %874 = vmatprep.subr.mxu0 0.0
    %875 = vmatpush1.msra.mxu0 0.0
    %876 = vmatprep.subr.mxu0 0.0
    %877 = vmatpush1.msra.mxu0 0.0
    %878 = vmatprep.subr.mxu0 0.0
    %879 = vmatpush1.msra.mxu0 0.0
    %880 = vmatprep.subr.mxu0 0.0
    %881 = vmatpush1.msra.mxu0 0.0
    %882 = vmatprep.subr.mxu0 0.0
    %883 = vmatpush1.msra.mxu0 0.0
    %884 = vmatprep.subr.mxu0 0.0
    %885 = vmatpush1.msra.mxu0 0.0
    %886 = vmatprep.subr.mxu0 0.0
    %887 = vmatpush1.msra.mxu0 0.0
    %888 = vmatprep.subr.mxu0 0.0
    %889 = vmatpush1.msra.mxu0 0.0
    %890 = vmatprep.subr.mxu0 0.0
    %891 = vmatpush1.msra.mxu0 0.0
    %892 = vmatprep.subr.mxu0 0.0
    %893 = vmatpush1.msra.mxu0 0.0
    %894 = vmatprep.subr.mxu0 0.0
    %895 = vmatpush1.msra.mxu0 0.0
    %896 = vmatprep.subr.mxu0 0.0
    %897 = vmatpush1.msra.mxu0 0.0
    %898 = vmatprep.subr.mxu0 0.0
    %899 = vmatpush1.msra.mxu0 0.0
    %900 = vmatprep.subr.mxu0 0.0
    %901 = vmatpush1.msra.mxu0 0.0
    %902 = vmatprep.subr.mxu0 0.0
    %903 = vmatpush1.msra.mxu0 0.0
    %904 = vmatprep.subr.mxu0 0.0
    %905 = vmatpush1.msra.mxu0 0.0
    %906 = vmatprep.mubr.f32.mxu0 0.0
    %907 = vmatmul.mubr.f32.gmra.mrb[0].mxu0 %v837
    %v908 = vpop.f32.mrb[0].mxu0
    %v909 = vadd.f32 0.0, %v908
    %v910 = vpop.f32.mrb[0].mxu0
    %911 = vmatprep.mubr.f32.mxu0 0.0
    %912 = vmatmul.mubr.f32.gmra.mrb[0].mxu0 %v840
    %v913 = vpop.f32.mrb[0].mxu0
    %v914 = vadd.f32 0.0, %v913
    %v915 = vpop.f32.mrb[0].mxu0
    %916 = vdwg.mxu0
    %917 = vrot.lane.b32.xlu0 %v590, 64
    %v918 = vpop.permute.xlu0 %917
    %919 = vrot.lane.b32.xlu0 %v595, 64
    %v920 = vpop.permute.xlu0 %919
    %v924 = vsel %vm785, %v828, 0
    %v927 = vsel %vm785, %v829, 0
    %929 = vmatprep.subr.mxu0 0.0
    %930 = vmatpush1.msra.mxu0 %v918
    %931 = vmatprep.subr.mxu0 0.0
    %932 = vmatpush1.msra.mxu0 %v920
    %933 = vmatprep.subr.mxu0 0.0
    %934 = vmatpush1.msra.mxu0 0.0
    %935 = vmatprep.subr.mxu0 0.0
    %936 = vmatpush1.msra.mxu0 0.0
    %937 = vmatprep.subr.mxu0 0.0
    %938 = vmatpush1.msra.mxu0 0.0
    %939 = vmatprep.subr.mxu0 0.0
    %940 = vmatpush1.msra.mxu0 0.0
    %941 = vmatprep.subr.mxu0 0.0
    %942 = vmatpush1.msra.mxu0 0.0
    %943 = vmatprep.subr.mxu0 0.0
    %944 = vmatpush1.msra.mxu0 0.0
    %945 = vmatprep.subr.mxu0 0.0
    %946 = vmatpush1.msra.mxu0 0.0
    %947 = vmatprep.subr.mxu0 0.0
    %948 = vmatpush1.msra.mxu0 0.0
    %949 = vmatprep.subr.mxu0 0.0
    %950 = vmatpush1.msra.mxu0 0.0
    %951 = vmatprep.subr.mxu0 0.0
    %952 = vmatpush1.msra.mxu0 0.0
    %953 = vmatprep.subr.mxu0 0.0
    %954 = vmatpush1.msra.mxu0 0.0
    %955 = vmatprep.subr.mxu0 0.0
    %956 = vmatpush1.msra.mxu0 0.0
    %957 = vmatprep.subr.mxu0 0.0
    %958 = vmatpush1.msra.mxu0 0.0
    %959 = vmatprep.subr.mxu0 0.0
    %960 = vmatpush1.msra.mxu0 0.0
    %961 = vmatprep.subr.mxu0 0.0
    %962 = vmatpush1.msra.mxu0 0.0
    %963 = vmatprep.subr.mxu0 0.0
    %964 = vmatpush1.msra.mxu0 0.0
    %965 = vmatprep.subr.mxu0 0.0
    %966 = vmatpush1.msra.mxu0 0.0
    %967 = vmatprep.subr.mxu0 0.0
    %968 = vmatpush1.msra.mxu0 0.0
    %969 = vmatprep.subr.mxu0 0.0
    %970 = vmatpush1.msra.mxu0 0.0
    %971 = vmatprep.subr.mxu0 0.0
    %972 = vmatpush1.msra.mxu0 0.0
    %973 = vmatprep.subr.mxu0 0.0
    %974 = vmatpush1.msra.mxu0 0.0
    %975 = vmatprep.subr.mxu0 0.0
    %976 = vmatpush1.msra.mxu0 0.0
    %977 = vmatprep.subr.mxu0 0.0
    %978 = vmatpush1.msra.mxu0 0.0
    %979 = vmatprep.subr.mxu0 0.0
    %980 = vmatpush1.msra.mxu0 0.0
    %981 = vmatprep.subr.mxu0 0.0
    %982 = vmatpush1.msra.mxu0 0.0
    %983 = vmatprep.subr.mxu0 0.0
    %984 = vmatpush1.msra.mxu0 0.0
    %985 = vmatprep.subr.mxu0 0.0
    %986 = vmatpush1.msra.mxu0 0.0
    %987 = vmatprep.subr.mxu0 0.0
    %988 = vmatpush1.msra.mxu0 0.0
    %989 = vmatprep.subr.mxu0 0.0
    %990 = vmatpush1.msra.mxu0 0.0
    %991 = vmatprep.subr.mxu0 0.0
    %992 = vmatpush1.msra.mxu0 0.0
    %993 = vmatprep.mubr.f32.mxu0 0.0
    %994 = vmatmul.mubr.f32.gmra.mrb[0].mxu0 %v924
    %v995 = vpop.f32.mrb[0].mxu0
    %v996 = vadd.f32 0.0, %v995
    %v997 = vpop.f32.mrb[0].mxu0
    %998 = vmatprep.mubr.f32.mxu0 0.0
    %999 = vmatmul.mubr.f32.gmra.mrb[0].mxu0 %v927
    %v1000 = vpop.f32.mrb[0].mxu0
    %v1001 = vadd.f32 0.0, %v1000
    %v1002 = vpop.f32.mrb[0].mxu0
    %1003 = vdwg.mxu0
    %1004 = vrot.lane.b32.xlu0 %v598, 120
    %v1005 = vpop.permute.xlu0 %1004
    %1006 = vrot.lane.b32.xlu0 %v599, 120
    %v1007 = vpop.permute.xlu0 %1006
    %1008 = vrot.lane.b32.xlu0 %v580, 88
    %v1009 = vpop.permute.xlu0 %1008
    %1010 = vrot.lane.b32.xlu0 %v585, 88
    %v1011 = vpop.permute.xlu0 %1010
    %v1012 = vsel %vm608, %v1005, 0
    %v1014 = vsel %vm608, %v1007, 0
    %v1016 = vsel %vm608, %v1009, 0
    %v1018 = vsel %vm608, %v1011, 0
    %1020 = vmatprep.subr.mxu0 0.0
    %1021 = vmatpush1.xpose.msra.mxu0 %v1016
    %1022 = vmatprep.subr.mxu0 0.0
    %1023 = vmatpush1.xpose.msra.mxu0 %v1018
    %1024 = vmatprep.subr.mxu0 0.0
    %1025 = vmatpush1.xpose.msra.mxu0 0.0
    %1026 = vmatprep.subr.mxu0 0.0
    %1027 = vmatpush1.xpose.msra.mxu0 0.0
    %1028 = vmatprep.subr.mxu0 0.0
    %1029 = vmatpush1.xpose.msra.mxu0 0.0
    %1030 = vmatprep.subr.mxu0 0.0
    %1031 = vmatpush1.xpose.msra.mxu0 0.0
    %1032 = vmatprep.subr.mxu0 0.0
    %1033 = vmatpush1.xpose.msra.mxu0 0.0
    %1034 = vmatprep.subr.mxu0 0.0
    %1035 = vmatpush1.xpose.msra.mxu0 0.0
    %1036 = vmatprep.subr.mxu0 0.0
    %1037 = vmatpush1.xpose.msra.mxu0 0.0
    %1038 = vmatprep.subr.mxu0 0.0
    %1039 = vmatpush1.xpose.msra.mxu0 0.0
    %1040 = vmatprep.subr.mxu0 0.0
    %1041 = vmatpush1.xpose.msra.mxu0 0.0
    %1042 = vmatprep.subr.mxu0 0.0
    %1043 = vmatpush1.xpose.msra.mxu0 0.0
    %1044 = vmatprep.subr.mxu0 0.0
    %1045 = vmatpush1.xpose.msra.mxu0 0.0
    %1046 = vmatprep.subr.mxu0 0.0
    %1047 = vmatpush1.xpose.msra.mxu0 0.0
    %1048 = vmatprep.subr.mxu0 0.0
    %1049 = vmatpush1.xpose.msra.mxu0 0.0
    %1050 = vmatprep.subr.mxu0 0.0
    %1051 = vmatpush1.xpose.msra.mxu0 0.0
    %1052 = vmatprep.subr.mxu0 0.0
    %1053 = vmatpush1.xpose.msra.mxu0 0.0
    %1054 = vmatprep.subr.mxu0 0.0
    %1055 = vmatpush1.xpose.msra.mxu0 0.0
    %1056 = vmatprep.subr.mxu0 0.0
    %1057 = vmatpush1.xpose.msra.mxu0 0.0
    %1058 = vmatprep.subr.mxu0 0.0
    %1059 = vmatpush1.xpose.msra.mxu0 0.0
    %1060 = vmatprep.subr.mxu0 0.0
    %1061 = vmatpush1.xpose.msra.mxu0 0.0
    %1062 = vmatprep.subr.mxu0 0.0
    %1063 = vmatpush1.xpose.msra.mxu0 0.0
    %1064 = vmatprep.subr.mxu0 0.0
    %1065 = vmatpush1.xpose.msra.mxu0 0.0
    %1066 = vmatprep.subr.mxu0 0.0
    %1067 = vmatpush1.xpose.msra.mxu0 0.0
    %1068 = vmatprep.subr.mxu0 0.0
    %1069 = vmatpush1.xpose.msra.mxu0 0.0
    %1070 = vmatprep.subr.mxu0 0.0
    %1071 = vmatpush1.xpose.msra.mxu0 0.0
    %1072 = vmatprep.subr.mxu0 0.0
    %1073 = vmatpush1.xpose.msra.mxu0 0.0
    %1074 = vmatprep.subr.mxu0 0.0
    %1075 = vmatpush1.xpose.msra.mxu0 0.0
    %1076 = vmatprep.subr.mxu0 0.0
    %1077 = vmatpush1.xpose.msra.mxu0 0.0
    %1078 = vmatprep.subr.mxu0 0.0
    %1079 = vmatpush1.xpose.msra.mxu0 0.0
    %1080 = vmatprep.subr.mxu0 0.0
    %1081 = vmatpush1.xpose.msra.mxu0 0.0
    %1082 = vmatprep.subr.mxu0 0.0
    %1083 = vmatpush1.xpose.msra.mxu0 0.0
    %1084 = vmatprep.mubr.f32.mxu0 0.0
    %1085 = vmatmul.mubr.f32.gmra.mrb[0].mxu0 %v1012
    %v1086 = vpop.f32.mrb[0].mxu0
    %v1087 = vadd.f32 0.0, %v1086
    %v1088 = vpop.f32.mrb[0].mxu0
    %1089 = vmatprep.mubr.f32.mxu0 0.0
    %1090 = vmatmul.mubr.f32.gmra.mrb[0].mxu0 %v1014
    %v1091 = vpop.f32.mrb[0].mxu0
    %v1092 = vadd.f32 0.0, %v1091
    %v1093 = vpop.f32.mrb[0].mxu0
    %1094 = vdwg.mxu0
    %1095 = vrot.lane.b32.xlu0 %v600, 120
    %v1096 = vpop.permute.xlu0 %1095
    %1097 = vrot.lane.b32.xlu0 %v601, 120
    %v1098 = vpop.permute.xlu0 %1097
    %1099 = vrot.lane.b32.xlu0 %v590, 88
    %v1100 = vpop.permute.xlu0 %1099
    %1101 = vrot.lane.b32.xlu0 %v595, 88
    %v1102 = vpop.permute.xlu0 %1101
    %v1103 = vsel %vm608, %v1096, 0
    %v1105 = vsel %vm608, %v1098, 0
    %v1107 = vsel %vm608, %v1100, 0
    %v1109 = vsel %vm608, %v1102, 0
    %1111 = vmatprep.subr.mxu0 0.0
    %1112 = vmatpush1.xpose.msra.mxu0 %v1107
    %1113 = vmatprep.subr.mxu0 0.0
    %1114 = vmatpush1.xpose.msra.mxu0 %v1109
    %1115 = vmatprep.subr.mxu0 0.0
    %1116 = vmatpush1.xpose.msra.mxu0 0.0
    %1117 = vmatprep.subr.mxu0 0.0
    %1118 = vmatpush1.xpose.msra.mxu0 0.0
    %1119 = vmatprep.subr.mxu0 0.0
    %1120 = vmatpush1.xpose.msra.mxu0 0.0
    %1121 = vmatprep.subr.mxu0 0.0
    %1122 = vmatpush1.xpose.msra.mxu0 0.0
    %1123 = vmatprep.subr.mxu0 0.0
    %1124 = vmatpush1.xpose.msra.mxu0 0.0
    %1125 = vmatprep.subr.mxu0 0.0
    %1126 = vmatpush1.xpose.msra.mxu0 0.0
    %1127 = vmatprep.subr.mxu0 0.0
    %1128 = vmatpush1.xpose.msra.mxu0 0.0
    %1129 = vmatprep.subr.mxu0 0.0
    %1130 = vmatpush1.xpose.msra.mxu0 0.0
    %1131 = vmatprep.subr.mxu0 0.0
    %1132 = vmatpush1.xpose.msra.mxu0 0.0
    %1133 = vmatprep.subr.mxu0 0.0
    %1134 = vmatpush1.xpose.msra.mxu0 0.0
    %1135 = vmatprep.subr.mxu0 0.0
    %1136 = vmatpush1.xpose.msra.mxu0 0.0
    %1137 = vmatprep.subr.mxu0 0.0
    %1138 = vmatpush1.xpose.msra.mxu0 0.0
    %1139 = vmatprep.subr.mxu0 0.0
    %1140 = vmatpush1.xpose.msra.mxu0 0.0
    %1141 = vmatprep.subr.mxu0 0.0
    %1142 = vmatpush1.xpose.msra.mxu0 0.0
    %1143 = vmatprep.subr.mxu0 0.0
    %1144 = vmatpush1.xpose.msra.mxu0 0.0
    %1145 = vmatprep.subr.mxu0 0.0
    %1146 = vmatpush1.xpose.msra.mxu0 0.0
    %1147 = vmatprep.subr.mxu0 0.0
    %1148 = vmatpush1.xpose.msra.mxu0 0.0
    %1149 = vmatprep.subr.mxu0 0.0
    %1150 = vmatpush1.xpose.msra.mxu0 0.0
    %1151 = vmatprep.subr.mxu0 0.0
    %1152 = vmatpush1.xpose.msra.mxu0 0.0
    %1153 = vmatprep.subr.mxu0 0.0
    %1154 = vmatpush1.xpose.msra.mxu0 0.0
    %1155 = vmatprep.subr.mxu0 0.0
    %1156 = vmatpush1.xpose.msra.mxu0 0.0
    %1157 = vmatprep.subr.mxu0 0.0
    %1158 = vmatpush1.xpose.msra.mxu0 0.0
    %1159 = vmatprep.subr.mxu0 0.0
    %1160 = vmatpush1.xpose.msra.mxu0 0.0
    %1161 = vmatprep.subr.mxu0 0.0
    %1162 = vmatpush1.xpose.msra.mxu0 0.0
    %1163 = vmatprep.subr.mxu0 0.0
    %1164 = vmatpush1.xpose.msra.mxu0 0.0
    %1165 = vmatprep.subr.mxu0 0.0
    %1166 = vmatpush1.xpose.msra.mxu0 0.0
    %1167 = vmatprep.subr.mxu0 0.0
    %1168 = vmatpush1.xpose.msra.mxu0 0.0
    %1169 = vmatprep.subr.mxu0 0.0
    %1170 = vmatpush1.xpose.msra.mxu0 0.0
    %1171 = vmatprep.subr.mxu0 0.0
    %1172 = vmatpush1.xpose.msra.mxu0 0.0
    %1173 = vmatprep.subr.mxu0 0.0
    %1174 = vmatpush1.xpose.msra.mxu0 0.0
    %1175 = vmatprep.mubr.f32.mxu0 0.0
    %1176 = vmatmul.mubr.f32.gmra.mrb[0].mxu0 %v1103
    %v1177 = vpop.f32.mrb[0].mxu0
    %v1178 = vadd.f32 0.0, %v1177
    %v1179 = vpop.f32.mrb[0].mxu0
    %1180 = vmatprep.mubr.f32.mxu0 0.0
    %1181 = vmatmul.mubr.f32.gmra.mrb[0].mxu0 %v1105
    %v1182 = vpop.f32.mrb[0].mxu0
    %v1183 = vadd.f32 0.0, %v1182
    %v1184 = vpop.f32.mrb[0].mxu0
    %1185 = vdwg.mxu0
    %v1186 = vsel %vm785, %v1087, -inf
    %1187 = vmax.xlane.f32.xlu0 %v1186
    %v1188 = vpop.xlane.xlu0 %1187
    %v1189 = vsel %vm785, %v1092, -inf
    %1190 = vmax.xlane.f32.xlu0 %v1189
    %v1191 = vpop.xlane.xlu0 %1190
    %v1192 = vsel %vm785, %v1178, -inf
    %1193 = vmax.xlane.f32.xlu0 %v1192
    %v1194 = vpop.xlane.xlu0 %1193
    %v1195 = vsel %vm785, %v1183, -inf
    %1196 = vmax.xlane.f32.xlu0 %v1195
    %v1197 = vpop.xlane.xlu0 %1196
    %v1198 = vsub.f32 %v1087, %v1188
    %v1199 = vsub.f32 %v1092, %v1191
    %v1200 = vsub.f32 %v1178, %v1194
    %v1201 = vsub.f32 %v1183, %v1197
    %v1202 = vmul.f32 %v1198, 1.442695
    %v1203 = vpow.pop %v1202
    %v1204 = vmul.f32 %v1199, 1.442695
    %v1205 = vpow.pop %v1204
    %v1206 = vmul.f32 %v1200, 1.442695
    %v1207 = vpow.pop %v1206
    %v1208 = vmul.f32 %v1201, 1.442695
    %v1209 = vpow.pop %v1208
    %v1210 = vsel %vm785, %v1203, 0.0
    %1211 = vadd.xlane.f32.xlu0 %v1210
    %v1212 = vpop.xlane.xlu0 %1211
    %v1213 = vsel %vm785, %v1205, 0.0
    %1214 = vadd.xlane.f32.xlu0 %v1213
    %v1215 = vpop.xlane.xlu0 %1214
    %v1216 = vsel %vm785, %v1207, 0.0
    %1217 = vadd.xlane.f32.xlu0 %v1216
    %v1218 = vpop.xlane.xlu0 %1217
    %v1219 = vsel %vm785, %v1209, 0.0
    %1220 = vadd.xlane.f32.xlu0 %v1219
    %v1221 = vpop.xlane.xlu0 %1220
    %v1222 = vrcp.pop %v1212
    %v1223 = vrcp.pop %v1215
    %v1224 = vrcp.pop %v1218
    %v1225 = vrcp.pop %v1221
    %v1226 = vmul.f32 %v1203, %v1222
    %v1227 = vmul.f32 %v1205, %v1223
    %v1228 = vmul.f32 %v1207, %v1224
    %v1229 = vmul.f32 %v1209, %v1225
    %1230 = vrot.lane.b32.xlu0 %v580, 56
    %v1231 = vpop.permute.xlu0 %1230
    %1232 = vrot.lane.b32.xlu0 %v585, 56
    %v1233 = vpop.permute.xlu0 %1232
    %v1237 = vsel %vm785, %v1226, 0
    %v1240 = vsel %vm785, %v1227, 0
    %1242 = vmatprep.subr.mxu0 0.0
    %1243 = vmatpush1.msra.mxu0 %v1231
    %1244 = vmatprep.subr.mxu0 0.0
    %1245 = vmatpush1.msra.mxu0 %v1233
    %1246 = vmatprep.subr.mxu0 0.0
    %1247 = vmatpush1.msra.mxu0 0.0
    %1248 = vmatprep.subr.mxu0 0.0
    %1249 = vmatpush1.msra.mxu0 0.0
    %1250 = vmatprep.subr.mxu0 0.0
    %1251 = vmatpush1.msra.mxu0 0.0
    %1252 = vmatprep.subr.mxu0 0.0
    %1253 = vmatpush1.msra.mxu0 0.0
    %1254 = vmatprep.subr.mxu0 0.0
    %1255 = vmatpush1.msra.mxu0 0.0
    %1256 = vmatprep.subr.mxu0 0.0
    %1257 = vmatpush1.msra.mxu0 0.0
    %1258 = vmatprep.subr.mxu0 0.0
    %1259 = vmatpush1.msra.mxu0 0.0
    %1260 = vmatprep.subr.mxu0 0.0
    %1261 = vmatpush1.msra.mxu0 0.0
    %1262 = vmatprep.subr.mxu0 0.0
    %1263 = vmatpush1.msra.mxu0 0.0
    %1264 = vmatprep.subr.mxu0 0.0
    %1265 = vmatpush1.msra.mxu0 0.0
    %1266 = vmatprep.subr.mxu0 0.0
    %1267 = vmatpush1.msra.mxu0 0.0
    %1268 = vmatprep.subr.mxu0 0.0
    %1269 = vmatpush1.msra.mxu0 0.0
    %1270 = vmatprep.subr.mxu0 0.0
    %1271 = vmatpush1.msra.mxu0 0.0
    %1272 = vmatprep.subr.mxu0 0.0
    %1273 = vmatpush1.msra.mxu0 0.0
    %1274 = vmatprep.subr.mxu0 0.0
    %1275 = vmatpush1.msra.mxu0 0.0
    %1276 = vmatprep.subr.mxu0 0.0
    %1277 = vmatpush1.msra.mxu0 0.0
    %1278 = vmatprep.subr.mxu0 0.0
    %1279 = vmatpush1.msra.mxu0 0.0
    %1280 = vmatprep.subr.mxu0 0.0
    %1281 = vmatpush1.msra.mxu0 0.0
    %1282 = vmatprep.subr.mxu0 0.0
    %1283 = vmatpush1.msra.mxu0 0.0
    %1284 = vmatprep.subr.mxu0 0.0
    %1285 = vmatpush1.msra.mxu0 0.0
    %1286 = vmatprep.subr.mxu0 0.0
    %1287 = vmatpush1.msra.mxu0 0.0
    %1288 = vmatprep.subr.mxu0 0.0
    %1289 = vmatpush1.msra.mxu0 0.0
    %1290 = vmatprep.subr.mxu0 0.0
    %1291 = vmatpush1.msra.mxu0 0.0
    %1292 = vmatprep.subr.mxu0 0.0
    %1293 = vmatpush1.msra.mxu0 0.0
    %1294 = vmatprep.subr.mxu0 0.0
    %1295 = vmatpush1.msra.mxu0 0.0
    %1296 = vmatprep.subr.mxu0 0.0
    %1297 = vmatpush1.msra.mxu0 0.0
    %1298 = vmatprep.subr.mxu0 0.0
    %1299 = vmatpush1.msra.mxu0 0.0
    %1300 = vmatprep.subr.mxu0 0.0
    %1301 = vmatpush1.msra.mxu0 0.0
    %1302 = vmatprep.subr.mxu0 0.0
    %1303 = vmatpush1.msra.mxu0 0.0
    %1304 = vmatprep.subr.mxu0 0.0
    %1305 = vmatpush1.msra.mxu0 0.0
    %1306 = vmatprep.mubr.f32.mxu0 0.0
    %1307 = vmatmul.mubr.f32.gmra.mrb[0].mxu0 %v1237
    %v1308 = vpop.f32.mrb[0].mxu0
    %v1309 = vadd.f32 0.0, %v1308
    %v1310 = vpop.f32.mrb[0].mxu0
    %1311 = vmatprep.mubr.f32.mxu0 0.0
    %1312 = vmatmul.mubr.f32.gmra.mrb[0].mxu0 %v1240
    %v1313 = vpop.f32.mrb[0].mxu0
    %v1314 = vadd.f32 0.0, %v1313
    %v1315 = vpop.f32.mrb[0].mxu0
    %1316 = vdwg.mxu0
    %1317 = vrot.lane.b32.xlu0 %v590, 56
    %v1318 = vpop.permute.xlu0 %1317
    %1319 = vrot.lane.b32.xlu0 %v595, 56
    %v1320 = vpop.permute.xlu0 %1319
    %v1324 = vsel %vm785, %v1228, 0
    %v1327 = vsel %vm785, %v1229, 0
    %1329 = vmatprep.subr.mxu0 0.0
    %1330 = vmatpush1.msra.mxu0 %v1318
    %1331 = vmatprep.subr.mxu0 0.0
    %1332 = vmatpush1.msra.mxu0 %v1320
    %1333 = vmatprep.subr.mxu0 0.0
    %1334 = vmatpush1.msra.mxu0 0.0
    %1335 = vmatprep.subr.mxu0 0.0
    %1336 = vmatpush1.msra.mxu0 0.0
    %1337 = vmatprep.subr.mxu0 0.0
    %1338 = vmatpush1.msra.mxu0 0.0
    %1339 = vmatprep.subr.mxu0 0.0
    %1340 = vmatpush1.msra.mxu0 0.0
    %1341 = vmatprep.subr.mxu0 0.0
    %1342 = vmatpush1.msra.mxu0 0.0
    %1343 = vmatprep.subr.mxu0 0.0
    %1344 = vmatpush1.msra.mxu0 0.0
    %1345 = vmatprep.subr.mxu0 0.0
    %1346 = vmatpush1.msra.mxu0 0.0
    %1347 = vmatprep.subr.mxu0 0.0
    %1348 = vmatpush1.msra.mxu0 0.0
    %1349 = vmatprep.subr.mxu0 0.0
    %1350 = vmatpush1.msra.mxu0 0.0
    %1351 = vmatprep.subr.mxu0 0.0
    %1352 = vmatpush1.msra.mxu0 0.0
    %1353 = vmatprep.subr.mxu0 0.0
    %1354 = vmatpush1.msra.mxu0 0.0
    %1355 = vmatprep.subr.mxu0 0.0
    %1356 = vmatpush1.msra.mxu0 0.0
    %1357 = vmatprep.subr.mxu0 0.0
    %1358 = vmatpush1.msra.mxu0 0.0
    %1359 = vmatprep.subr.mxu0 0.0
    %1360 = vmatpush1.msra.mxu0 0.0
    %1361 = vmatprep.subr.mxu0 0.0
    %1362 = vmatpush1.msra.mxu0 0.0
    %1363 = vmatprep.subr.mxu0 0.0
    %1364 = vmatpush1.msra.mxu0 0.0
    %1365 = vmatprep.subr.mxu0 0.0
    %1366 = vmatpush1.msra.mxu0 0.0
    %1367 = vmatprep.subr.mxu0 0.0
    %1368 = vmatpush1.msra.mxu0 0.0
    %1369 = vmatprep.subr.mxu0 0.0
    %1370 = vmatpush1.msra.mxu0 0.0
    %1371 = vmatprep.subr.mxu0 0.0
    %1372 = vmatpush1.msra.mxu0 0.0
    %1373 = vmatprep.subr.mxu0 0.0
    %1374 = vmatpush1.msra.mxu0 0.0
    %1375 = vmatprep.subr.mxu0 0.0
    %1376 = vmatpush1.msra.mxu0 0.0
    %1377 = vmatprep.subr.mxu0 0.0
    %1378 = vmatpush1.msra.mxu0 0.0
    %1379 = vmatprep.subr.mxu0 0.0
    %1380 = vmatpush1.msra.mxu0 0.0
    %1381 = vmatprep.subr.mxu0 0.0
    %1382 = vmatpush1.msra.mxu0 0.0
    %1383 = vmatprep.subr.mxu0 0.0
    %1384 = vmatpush1.msra.mxu0 0.0
    %1385 = vmatprep.subr.mxu0 0.0
    %1386 = vmatpush1.msra.mxu0 0.0
    %1387 = vmatprep.subr.mxu0 0.0
    %1388 = vmatpush1.msra.mxu0 0.0
    %1389 = vmatprep.subr.mxu0 0.0
    %1390 = vmatpush1.msra.mxu0 0.0
    %1391 = vmatprep.subr.mxu0 0.0
    %1392 = vmatpush1.msra.mxu0 0.0
    %1393 = vmatprep.mubr.f32.mxu0 0.0
    %1394 = vmatmul.mubr.f32.gmra.mrb[0].mxu0 %v1324
    %v1395 = vpop.f32.mrb[0].mxu0
    %v1396 = vadd.f32 0.0, %v1395
    %v1397 = vpop.f32.mrb[0].mxu0
    %1398 = vmatprep.mubr.f32.mxu0 0.0
    %1399 = vmatmul.mubr.f32.gmra.mrb[0].mxu0 %v1327
    %v1400 = vpop.f32.mrb[0].mxu0
    %v1401 = vadd.f32 0.0, %v1400
    %v1402 = vpop.f32.mrb[0].mxu0
    %1403 = vdwg.mxu0
    %1404 = vrot.lane.b32.xlu0 %v598, 112
    %v1405 = vpop.permute.xlu0 %1404
    %1406 = vrot.lane.b32.xlu0 %v599, 112
    %v1407 = vpop.permute.xlu0 %1406
    %1408 = vrot.lane.b32.xlu0 %v580, 80
    %v1409 = vpop.permute.xlu0 %1408
    %1410 = vrot.lane.b32.xlu0 %v585, 80
    %v1411 = vpop.permute.xlu0 %1410
    %v1412 = vsel %vm608, %v1405, 0
    %v1414 = vsel %vm608, %v1407, 0
    %v1416 = vsel %vm608, %v1409, 0
    %v1418 = vsel %vm608, %v1411, 0
    %1420 = vmatprep.subr.mxu0 0.0
    %1421 = vmatpush1.xpose.msra.mxu0 %v1416
    %1422 = vmatprep.subr.mxu0 0.0
    %1423 = vmatpush1.xpose.msra.mxu0 %v1418
    %1424 = vmatprep.subr.mxu0 0.0
    %1425 = vmatpush1.xpose.msra.mxu0 0.0
    %1426 = vmatprep.subr.mxu0 0.0
    %1427 = vmatpush1.xpose.msra.mxu0 0.0
    %1428 = vmatprep.subr.mxu0 0.0
    %1429 = vmatpush1.xpose.msra.mxu0 0.0
    %1430 = vmatprep.subr.mxu0 0.0
    %1431 = vmatpush1.xpose.msra.mxu0 0.0
    %1432 = vmatprep.subr.mxu0 0.0
    %1433 = vmatpush1.xpose.msra.mxu0 0.0
    %1434 = vmatprep.subr.mxu0 0.0
    %1435 = vmatpush1.xpose.msra.mxu0 0.0
    %1436 = vmatprep.subr.mxu0 0.0
    %1437 = vmatpush1.xpose.msra.mxu0 0.0
    %1438 = vmatprep.subr.mxu0 0.0
    %1439 = vmatpush1.xpose.msra.mxu0 0.0
    %1440 = vmatprep.subr.mxu0 0.0
    %1441 = vmatpush1.xpose.msra.mxu0 0.0
    %1442 = vmatprep.subr.mxu0 0.0
    %1443 = vmatpush1.xpose.msra.mxu0 0.0
    %1444 = vmatprep.subr.mxu0 0.0
    %1445 = vmatpush1.xpose.msra.mxu0 0.0
    %1446 = vmatprep.subr.mxu0 0.0
    %1447 = vmatpush1.xpose.msra.mxu0 0.0
    %1448 = vmatprep.subr.mxu0 0.0
    %1449 = vmatpush1.xpose.msra.mxu0 0.0
    %1450 = vmatprep.subr.mxu0 0.0
    %1451 = vmatpush1.xpose.msra.mxu0 0.0
    %1452 = vmatprep.subr.mxu0 0.0
    %1453 = vmatpush1.xpose.msra.mxu0 0.0
    %1454 = vmatprep.subr.mxu0 0.0
    %1455 = vmatpush1.xpose.msra.mxu0 0.0
    %1456 = vmatprep.subr.mxu0 0.0
    %1457 = vmatpush1.xpose.msra.mxu0 0.0
    %1458 = vmatprep.subr.mxu0 0.0
    %1459 = vmatpush1.xpose.msra.mxu0 0.0
    %1460 = vmatprep.subr.mxu0 0.0
    %1461 = vmatpush1.xpose.msra.mxu0 0.0
    %1462 = vmatprep.subr.mxu0 0.0
    %1463 = vmatpush1.xpose.msra.mxu0 0.0
    %1464 = vmatprep.subr.mxu0 0.0
    %1465 = vmatpush1.xpose.msra.mxu0 0.0
    %1466 = vmatprep.subr.mxu0 0.0
    %1467 = vmatpush1.xpose.msra.mxu0 0.0
    %1468 = vmatprep.subr.mxu0 0.0
    %1469 = vmatpush1.xpose.msra.mxu0 0.0
    %1470 = vmatprep.subr.mxu0 0.0
    %1471 = vmatpush1.xpose.msra.mxu0 0.0
    %1472 = vmatprep.subr.mxu0 0.0
    %1473 = vmatpush1.xpose.msra.mxu0 0.0
    %1474 = vmatprep.subr.mxu0 0.0
    %1475 = vmatpush1.xpose.msra.mxu0 0.0
    %1476 = vmatprep.subr.mxu0 0.0
    %1477 = vmatpush1.xpose.msra.mxu0 0.0
    %1478 = vmatprep.subr.mxu0 0.0
    %1479 = vmatpush1.xpose.msra.mxu0 0.0
    %1480 = vmatprep.subr.mxu0 0.0
    %1481 = vmatpush1.xpose.msra.mxu0 0.0
    %1482 = vmatprep.subr.mxu0 0.0
    %1483 = vmatpush1.xpose.msra.mxu0 0.0
    %1484 = vmatprep.mubr.f32.mxu0 0.0
    %1485 = vmatmul.mubr.f32.gmra.mrb[0].mxu0 %v1412
    %v1486 = vpop.f32.mrb[0].mxu0
    %v1487 = vadd.f32 0.0, %v1486
    %v1488 = vpop.f32.mrb[0].mxu0
    %1489 = vmatprep.mubr.f32.mxu0 0.0
    %1490 = vmatmul.mubr.f32.gmra.mrb[0].mxu0 %v1414
    %v1491 = vpop.f32.mrb[0].mxu0
    %v1492 = vadd.f32 0.0, %v1491
    %v1493 = vpop.f32.mrb[0].mxu0
    %1494 = vdwg.mxu0
    %1495 = vrot.lane.b32.xlu0 %v600, 112
    %v1496 = vpop.permute.xlu0 %1495
    %1497 = vrot.lane.b32.xlu0 %v601, 112
    %v1498 = vpop.permute.xlu0 %1497
    %1499 = vrot.lane.b32.xlu0 %v590, 80
    %v1500 = vpop.permute.xlu0 %1499
    %1501 = vrot.lane.b32.xlu0 %v595, 80
    %v1502 = vpop.permute.xlu0 %1501
    %v1503 = vsel %vm608, %v1496, 0
    %v1505 = vsel %vm608, %v1498, 0
    %v1507 = vsel %vm608, %v1500, 0
    %v1509 = vsel %vm608, %v1502, 0
    %1511 = vmatprep.subr.mxu0 0.0
    %1512 = vmatpush1.xpose.msra.mxu0 %v1507
    %1513 = vmatprep.subr.mxu0 0.0
    %1514 = vmatpush1.xpose.msra.mxu0 %v1509
    %1515 = vmatprep.subr.mxu0 0.0
    %1516 = vmatpush1.xpose.msra.mxu0 0.0
    %1517 = vmatprep.subr.mxu0 0.0
    %1518 = vmatpush1.xpose.msra.mxu0 0.0
    %1519 = vmatprep.subr.mxu0 0.0
    %1520 = vmatpush1.xpose.msra.mxu0 0.0
    %1521 = vmatprep.subr.mxu0 0.0
    %1522 = vmatpush1.xpose.msra.mxu0 0.0
    %1523 = vmatprep.subr.mxu0 0.0
    %1524 = vmatpush1.xpose.msra.mxu0 0.0
    %1525 = vmatprep.subr.mxu0 0.0
    %1526 = vmatpush1.xpose.msra.mxu0 0.0
    %1527 = vmatprep.subr.mxu0 0.0
    %1528 = vmatpush1.xpose.msra.mxu0 0.0
    %1529 = vmatprep.subr.mxu0 0.0
    %1530 = vmatpush1.xpose.msra.mxu0 0.0
    %1531 = vmatprep.subr.mxu0 0.0
    %1532 = vmatpush1.xpose.msra.mxu0 0.0
    %1533 = vmatprep.subr.mxu0 0.0
    %1534 = vmatpush1.xpose.msra.mxu0 0.0
    %1535 = vmatprep.subr.mxu0 0.0
    %1536 = vmatpush1.xpose.msra.mxu0 0.0
    %1537 = vmatprep.subr.mxu0 0.0
    %1538 = vmatpush1.xpose.msra.mxu0 0.0
    %1539 = vmatprep.subr.mxu0 0.0
    %1540 = vmatpush1.xpose.msra.mxu0 0.0
    %1541 = vmatprep.subr.mxu0 0.0
    %1542 = vmatpush1.xpose.msra.mxu0 0.0
    %1543 = vmatprep.subr.mxu0 0.0
    %1544 = vmatpush1.xpose.msra.mxu0 0.0
    %1545 = vmatprep.subr.mxu0 0.0
    %1546 = vmatpush1.xpose.msra.mxu0 0.0
    %1547 = vmatprep.subr.mxu0 0.0
    %1548 = vmatpush1.xpose.msra.mxu0 0.0
    %1549 = vmatprep.subr.mxu0 0.0
    %1550 = vmatpush1.xpose.msra.mxu0 0.0
    %1551 = vmatprep.subr.mxu0 0.0
    %1552 = vmatpush1.xpose.msra.mxu0 0.0
    %1553 = vmatprep.subr.mxu0 0.0
    %1554 = vmatpush1.xpose.msra.mxu0 0.0
    %1555 = vmatprep.subr.mxu0 0.0
    %1556 = vmatpush1.xpose.msra.mxu0 0.0
    %1557 = vmatprep.subr.mxu0 0.0
    %1558 = vmatpush1.xpose.msra.mxu0 0.0
    %1559 = vmatprep.subr.mxu0 0.0
    %1560 = vmatpush1.xpose.msra.mxu0 0.0
    %1561 = vmatprep.subr.mxu0 0.0
    %1562 = vmatpush1.xpose.msra.mxu0 0.0
    %1563 = vmatprep.subr.mxu0 0.0
    %1564 = vmatpush1.xpose.msra.mxu0 0.0
    %1565 = vmatprep.subr.mxu0 0.0
    %1566 = vmatpush1.xpose.msra.mxu0 0.0
    %1567 = vmatprep.subr.mxu0 0.0
    %1568 = vmatpush1.xpose.msra.mxu0 0.0
    %1569 = vmatprep.subr.mxu0 0.0
    %1570 = vmatpush1.xpose.msra.mxu0 0.0
    %1571 = vmatprep.subr.mxu0 0.0
    %1572 = vmatpush1.xpose.msra.mxu0 0.0
    %1573 = vmatprep.subr.mxu0 0.0
    %1574 = vmatpush1.xpose.msra.mxu0 0.0
    %1575 = vmatprep.mubr.f32.mxu0 0.0
    %1576 = vmatmul.mubr.f32.gmra.mrb[0].mxu0 %v1503
    %v1577 = vpop.f32.mrb[0].mxu0
    %v1578 = vadd.f32 0.0, %v1577
    %v1579 = vpop.f32.mrb[0].mxu0
    %1580 = vmatprep.mubr.f32.mxu0 0.0
    %1581 = vmatmul.mubr.f32.gmra.mrb[0].mxu0 %v1505
    %v1582 = vpop.f32.mrb[0].mxu0
    %v1583 = vadd.f32 0.0, %v1582
    %v1584 = vpop.f32.mrb[0].mxu0
    %1585 = vdwg.mxu0
    %v1586 = vsel %vm785, %v1487, -inf
    %1587 = vmax.xlane.f32.xlu0 %v1586
    %v1588 = vpop.xlane.xlu0 %1587
    %v1589 = vsel %vm785, %v1492, -inf
    %1590 = vmax.xlane.f32.xlu0 %v1589
    %v1591 = vpop.xlane.xlu0 %1590
    %v1592 = vsel %vm785, %v1578, -inf
    %1593 = vmax.xlane.f32.xlu0 %v1592
    %v1594 = vpop.xlane.xlu0 %1593
    %v1595 = vsel %vm785, %v1583, -inf
    %1596 = vmax.xlane.f32.xlu0 %v1595
    %v1597 = vpop.xlane.xlu0 %1596
    %v1598 = vsub.f32 %v1487, %v1588
    %v1599 = vsub.f32 %v1492, %v1591
    %v1600 = vsub.f32 %v1578, %v1594
    %v1601 = vsub.f32 %v1583, %v1597
    %v1602 = vmul.f32 %v1598, 1.442695
    %v1603 = vpow.pop %v1602
    %v1604 = vmul.f32 %v1599, 1.442695
    %v1605 = vpow.pop %v1604
    %v1606 = vmul.f32 %v1600, 1.442695
    %v1607 = vpow.pop %v1606
    %v1608 = vmul.f32 %v1601, 1.442695
    %v1609 = vpow.pop %v1608
    %v1610 = vsel %vm785, %v1603, 0.0
    %1611 = vadd.xlane.f32.xlu0 %v1610
    %v1612 = vpop.xlane.xlu0 %1611
    %v1613 = vsel %vm785, %v1605, 0.0
    %1614 = vadd.xlane.f32.xlu0 %v1613
    %v1615 = vpop.xlane.xlu0 %1614
    %v1616 = vsel %vm785, %v1607, 0.0
    %1617 = vadd.xlane.f32.xlu0 %v1616
    %v1618 = vpop.xlane.xlu0 %1617
    %v1619 = vsel %vm785, %v1609, 0.0
    %1620 = vadd.xlane.f32.xlu0 %v1619
    %v1621 = vpop.xlane.xlu0 %1620
    %v1622 = vrcp.pop %v1612
    %v1623 = vrcp.pop %v1615
    %v1624 = vrcp.pop %v1618
    %v1625 = vrcp.pop %v1621
    %v1626 = vmul.f32 %v1603, %v1622
    %v1627 = vmul.f32 %v1605, %v1623
    %v1628 = vmul.f32 %v1607, %v1624
    %v1629 = vmul.f32 %v1609, %v1625
    %1630 = vrot.lane.b32.xlu0 %v580, 48
    %v1631 = vpop.permute.xlu0 %1630
    %1632 = vrot.lane.b32.xlu0 %v585, 48
    %v1633 = vpop.permute.xlu0 %1632
    %v1637 = vsel %vm785, %v1626, 0
    %v1640 = vsel %vm785, %v1627, 0
    %1642 = vmatprep.subr.mxu0 0.0
    %1643 = vmatpush1.msra.mxu0 %v1631
    %1644 = vmatprep.subr.mxu0 0.0
    %1645 = vmatpush1.msra.mxu0 %v1633
    %1646 = vmatprep.subr.mxu0 0.0
    %1647 = vmatpush1.msra.mxu0 0.0
    %1648 = vmatprep.subr.mxu0 0.0
    %1649 = vmatpush1.msra.mxu0 0.0
    %1650 = vmatprep.subr.mxu0 0.0
    %1651 = vmatpush1.msra.mxu0 0.0
    %1652 = vmatprep.subr.mxu0 0.0
    %1653 = vmatpush1.msra.mxu0 0.0
    %1654 = vmatprep.subr.mxu0 0.0
    %1655 = vmatpush1.msra.mxu0 0.0
    %1656 = vmatprep.subr.mxu0 0.0
    %1657 = vmatpush1.msra.mxu0 0.0
    %1658 = vmatprep.subr.mxu0 0.0
    %1659 = vmatpush1.msra.mxu0 0.0
    %1660 = vmatprep.subr.mxu0 0.0
    %1661 = vmatpush1.msra.mxu0 0.0
    %1662 = vmatprep.subr.mxu0 0.0
    %1663 = vmatpush1.msra.mxu0 0.0
    %1664 = vmatprep.subr.mxu0 0.0
    %1665 = vmatpush1.msra.mxu0 0.0
    %1666 = vmatprep.subr.mxu0 0.0
    %1667 = vmatpush1.msra.mxu0 0.0
    %1668 = vmatprep.subr.mxu0 0.0
    %1669 = vmatpush1.msra.mxu0 0.0
    %1670 = vmatprep.subr.mxu0 0.0
    %1671 = vmatpush1.msra.mxu0 0.0
    %1672 = vmatprep.subr.mxu0 0.0
    %1673 = vmatpush1.msra.mxu0 0.0
    %1674 = vmatprep.subr.mxu0 0.0
    %1675 = vmatpush1.msra.mxu0 0.0
    %1676 = vmatprep.subr.mxu0 0.0
    %1677 = vmatpush1.msra.mxu0 0.0
    %1678 = vmatprep.subr.mxu0 0.0
    %1679 = vmatpush1.msra.mxu0 0.0
    %1680 = vmatprep.subr.mxu0 0.0
    %1681 = vmatpush1.msra.mxu0 0.0
    %1682 = vmatprep.subr.mxu0 0.0
    %1683 = vmatpush1.msra.mxu0 0.0
    %1684 = vmatprep.subr.mxu0 0.0
    %1685 = vmatpush1.msra.mxu0 0.0
    %1686 = vmatprep.subr.mxu0 0.0
    %1687 = vmatpush1.msra.mxu0 0.0
    %1688 = vmatprep.subr.mxu0 0.0
    %1689 = vmatpush1.msra.mxu0 0.0
    %1690 = vmatprep.subr.mxu0 0.0
    %1691 = vmatpush1.msra.mxu0 0.0
    %1692 = vmatprep.subr.mxu0 0.0
    %1693 = vmatpush1.msra.mxu0 0.0
    %1694 = vmatprep.subr.mxu0 0.0
    %1695 = vmatpush1.msra.mxu0 0.0
    %1696 = vmatprep.subr.mxu0 0.0
    %1697 = vmatpush1.msra.mxu0 0.0
    %1698 = vmatprep.subr.mxu0 0.0
    %1699 = vmatpush1.msra.mxu0 0.0
    %1700 = vmatprep.subr.mxu0 0.0
    %1701 = vmatpush1.msra.mxu0 0.0
    %1702 = vmatprep.subr.mxu0 0.0
    %1703 = vmatpush1.msra.mxu0 0.0
    %1704 = vmatprep.subr.mxu0 0.0
    %1705 = vmatpush1.msra.mxu0 0.0
    %1706 = vmatprep.mubr.f32.mxu0 0.0
    %1707 = vmatmul.mubr.f32.gmra.mrb[0].mxu0 %v1637
    %v1708 = vpop.f32.mrb[0].mxu0
    %v1709 = vadd.f32 0.0, %v1708
    %v1710 = vpop.f32.mrb[0].mxu0
    %1711 = vmatprep.mubr.f32.mxu0 0.0
    %1712 = vmatmul.mubr.f32.gmra.mrb[0].mxu0 %v1640
    %v1713 = vpop.f32.mrb[0].mxu0
    %v1714 = vadd.f32 0.0, %v1713
    %v1715 = vpop.f32.mrb[0].mxu0
    %1716 = vdwg.mxu0
    %1717 = vrot.lane.b32.xlu0 %v590, 48
    %v1718 = vpop.permute.xlu0 %1717
    %1719 = vrot.lane.b32.xlu0 %v595, 48
    %v1720 = vpop.permute.xlu0 %1719
    %v1724 = vsel %vm785, %v1628, 0
    %v1727 = vsel %vm785, %v1629, 0
    %1729 = vmatprep.subr.mxu0 0.0
    %1730 = vmatpush1.msra.mxu0 %v1718
    %1731 = vmatprep.subr.mxu0 0.0
    %1732 = vmatpush1.msra.mxu0 %v1720
    %1733 = vmatprep.subr.mxu0 0.0
    %1734 = vmatpush1.msra.mxu0 0.0
    %1735 = vmatprep.subr.mxu0 0.0
    %1736 = vmatpush1.msra.mxu0 0.0
    %1737 = vmatprep.subr.mxu0 0.0
    %1738 = vmatpush1.msra.mxu0 0.0
    %1739 = vmatprep.subr.mxu0 0.0
    %1740 = vmatpush1.msra.mxu0 0.0
    %1741 = vmatprep.subr.mxu0 0.0
    %1742 = vmatpush1.msra.mxu0 0.0
    %1743 = vmatprep.subr.mxu0 0.0
    %1744 = vmatpush1.msra.mxu0 0.0
    %1745 = vmatprep.subr.mxu0 0.0
    %1746 = vmatpush1.msra.mxu0 0.0
    %1747 = vmatprep.subr.mxu0 0.0
    %1748 = vmatpush1.msra.mxu0 0.0
    %1749 = vmatprep.subr.mxu0 0.0
    %1750 = vmatpush1.msra.mxu0 0.0
    %1751 = vmatprep.subr.mxu0 0.0
    %1752 = vmatpush1.msra.mxu0 0.0
    %1753 = vmatprep.subr.mxu0 0.0
    %1754 = vmatpush1.msra.mxu0 0.0
    %1755 = vmatprep.subr.mxu0 0.0
    %1756 = vmatpush1.msra.mxu0 0.0
    %1757 = vmatprep.subr.mxu0 0.0
    %1758 = vmatpush1.msra.mxu0 0.0
    %1759 = vmatprep.subr.mxu0 0.0
    %1760 = vmatpush1.msra.mxu0 0.0
    %1761 = vmatprep.subr.mxu0 0.0
    %1762 = vmatpush1.msra.mxu0 0.0
    %1763 = vmatprep.subr.mxu0 0.0
    %1764 = vmatpush1.msra.mxu0 0.0
    %1765 = vmatprep.subr.mxu0 0.0
    %1766 = vmatpush1.msra.mxu0 0.0
    %1767 = vmatprep.subr.mxu0 0.0
    %1768 = vmatpush1.msra.mxu0 0.0
    %1769 = vmatprep.subr.mxu0 0.0
    %1770 = vmatpush1.msra.mxu0 0.0
    %1771 = vmatprep.subr.mxu0 0.0
    %1772 = vmatpush1.msra.mxu0 0.0
    %1773 = vmatprep.subr.mxu0 0.0
    %1774 = vmatpush1.msra.mxu0 0.0
    %1775 = vmatprep.subr.mxu0 0.0
    %1776 = vmatpush1.msra.mxu0 0.0
    %1777 = vmatprep.subr.mxu0 0.0
    %1778 = vmatpush1.msra.mxu0 0.0
    %1779 = vmatprep.subr.mxu0 0.0
    %1780 = vmatpush1.msra.mxu0 0.0
    %1781 = vmatprep.subr.mxu0 0.0
    %1782 = vmatpush1.msra.mxu0 0.0
    %1783 = vmatprep.subr.mxu0 0.0
    %1784 = vmatpush1.msra.mxu0 0.0
    %1785 = vmatprep.subr.mxu0 0.0
    %1786 = vmatpush1.msra.mxu0 0.0
    %1787 = vmatprep.subr.mxu0 0.0
    %1788 = vmatpush1.msra.mxu0 0.0
    %1789 = vmatprep.subr.mxu0 0.0
    %1790 = vmatpush1.msra.mxu0 0.0
    %1791 = vmatprep.subr.mxu0 0.0
    %1792 = vmatpush1.msra.mxu0 0.0
    %1793 = vmatprep.mubr.f32.mxu0 0.0
    %1794 = vmatmul.mubr.f32.gmra.mrb[0].mxu0 %v1724
    %v1795 = vpop.f32.mrb[0].mxu0
    %v1796 = vadd.f32 0.0, %v1795
    %v1797 = vpop.f32.mrb[0].mxu0
    %1798 = vmatprep.mubr.f32.mxu0 0.0
    %1799 = vmatmul.mubr.f32.gmra.mrb[0].mxu0 %v1727
    %v1800 = vpop.f32.mrb[0].mxu0
    %v1801 = vadd.f32 0.0, %v1800
    %v1802 = vpop.f32.mrb[0].mxu0
    %1803 = vdwg.mxu0
    %1804 = vrot.lane.b32.xlu0 %v598, 104
    %v1805 = vpop.permute.xlu0 %1804
    %1806 = vrot.lane.b32.xlu0 %v599, 104
    %v1807 = vpop.permute.xlu0 %1806
    %1808 = vrot.lane.b32.xlu0 %v580, 72
    %v1809 = vpop.permute.xlu0 %1808
    %1810 = vrot.lane.b32.xlu0 %v585, 72
    %v1811 = vpop.permute.xlu0 %1810
    %v1812 = vsel %vm608, %v1805, 0
    %v1814 = vsel %vm608, %v1807, 0
    %v1816 = vsel %vm608, %v1809, 0
    %v1818 = vsel %vm608, %v1811, 0
    %1820 = vmatprep.subr.mxu0 0.0
    %1821 = vmatpush1.xpose.msra.mxu0 %v1816
    %1822 = vmatprep.subr.mxu0 0.0
    %1823 = vmatpush1.xpose.msra.mxu0 %v1818
    %1824 = vmatprep.subr.mxu0 0.0
    %1825 = vmatpush1.xpose.msra.mxu0 0.0
    %1826 = vmatprep.subr.mxu0 0.0
    %1827 = vmatpush1.xpose.msra.mxu0 0.0
    %1828 = vmatprep.subr.mxu0 0.0
    %1829 = vmatpush1.xpose.msra.mxu0 0.0
    %1830 = vmatprep.subr.mxu0 0.0
    %1831 = vmatpush1.xpose.msra.mxu0 0.0
    %1832 = vmatprep.subr.mxu0 0.0
    %1833 = vmatpush1.xpose.msra.mxu0 0.0
    %1834 = vmatprep.subr.mxu0 0.0
    %1835 = vmatpush1.xpose.msra.mxu0 0.0
    %1836 = vmatprep.subr.mxu0 0.0
    %1837 = vmatpush1.xpose.msra.mxu0 0.0
    %1838 = vmatprep.subr.mxu0 0.0
    %1839 = vmatpush1.xpose.msra.mxu0 0.0
    %1840 = vmatprep.subr.mxu0 0.0
    %1841 = vmatpush1.xpose.msra.mxu0 0.0
    %1842 = vmatprep.subr.mxu0 0.0
    %1843 = vmatpush1.xpose.msra.mxu0 0.0
    %1844 = vmatprep.subr.mxu0 0.0
    %1845 = vmatpush1.xpose.msra.mxu0 0.0
    %1846 = vmatprep.subr.mxu0 0.0
    %1847 = vmatpush1.xpose.msra.mxu0 0.0
    %1848 = vmatprep.subr.mxu0 0.0
    %1849 = vmatpush1.xpose.msra.mxu0 0.0
    %1850 = vmatprep.subr.mxu0 0.0
    %1851 = vmatpush1.xpose.msra.mxu0 0.0
    %1852 = vmatprep.subr.mxu0 0.0
    %1853 = vmatpush1.xpose.msra.mxu0 0.0
    %1854 = vmatprep.subr.mxu0 0.0
    %1855 = vmatpush1.xpose.msra.mxu0 0.0
    %1856 = vmatprep.subr.mxu0 0.0
    %1857 = vmatpush1.xpose.msra.mxu0 0.0
    %1858 = vmatprep.subr.mxu0 0.0
    %1859 = vmatpush1.xpose.msra.mxu0 0.0
    %1860 = vmatprep.subr.mxu0 0.0
    %1861 = vmatpush1.xpose.msra.mxu0 0.0
    %1862 = vmatprep.subr.mxu0 0.0
    %1863 = vmatpush1.xpose.msra.mxu0 0.0
    %1864 = vmatprep.subr.mxu0 0.0
    %1865 = vmatpush1.xpose.msra.mxu0 0.0
    %1866 = vmatprep.subr.mxu0 0.0
    %1867 = vmatpush1.xpose.msra.mxu0 0.0
    %1868 = vmatprep.subr.mxu0 0.0
    %1869 = vmatpush1.xpose.msra.mxu0 0.0
    %1870 = vmatprep.subr.mxu0 0.0
    %1871 = vmatpush1.xpose.msra.mxu0 0.0
    %1872 = vmatprep.subr.mxu0 0.0
    %1873 = vmatpush1.xpose.msra.mxu0 0.0
    %1874 = vmatprep.subr.mxu0 0.0
    %1875 = vmatpush1.xpose.msra.mxu0 0.0
    %1876 = vmatprep.subr.mxu0 0.0
    %1877 = vmatpush1.xpose.msra.mxu0 0.0
    %1878 = vmatprep.subr.mxu0 0.0
    %1879 = vmatpush1.xpose.msra.mxu0 0.0
    %1880 = vmatprep.subr.mxu0 0.0
    %1881 = vmatpush1.xpose.msra.mxu0 0.0
    %1882 = vmatprep.subr.mxu0 0.0
    %1883 = vmatpush1.xpose.msra.mxu0 0.0
    %1884 = vmatprep.mubr.f32.mxu0 0.0
    %1885 = vmatmul.mubr.f32.gmra.mrb[0].mxu0 %v1812
    %v1886 = vpop.f32.mrb[0].mxu0
    %v1887 = vadd.f32 0.0, %v1886
    %v1888 = vpop.f32.mrb[0].mxu0
    %1889 = vmatprep.mubr.f32.mxu0 0.0
    %1890 = vmatmul.mubr.f32.gmra.mrb[0].mxu0 %v1814
    %v1891 = vpop.f32.mrb[0].mxu0
    %v1892 = vadd.f32 0.0, %v1891
    %v1893 = vpop.f32.mrb[0].mxu0
    %1894 = vdwg.mxu0
    %1895 = vrot.lane.b32.xlu0 %v600, 104
    %v1896 = vpop.permute.xlu0 %1895
    %1897 = vrot.lane.b32.xlu0 %v601, 104
    %v1898 = vpop.permute.xlu0 %1897
    %1899 = vrot.lane.b32.xlu0 %v590, 72
    %v1900 = vpop.permute.xlu0 %1899
    %1901 = vrot.lane.b32.xlu0 %v595, 72
    %v1902 = vpop.permute.xlu0 %1901
    %v1903 = vsel %vm608, %v1896, 0
    %v1905 = vsel %vm608, %v1898, 0
    %v1907 = vsel %vm608, %v1900, 0
    %v1909 = vsel %vm608, %v1902, 0
    %1911 = vmatprep.subr.mxu0 0.0
    %1912 = vmatpush1.xpose.msra.mxu0 %v1907
    %1913 = vmatprep.subr.mxu0 0.0
    %1914 = vmatpush1.xpose.msra.mxu0 %v1909
    %1915 = vmatprep.subr.mxu0 0.0
    %1916 = vmatpush1.xpose.msra.mxu0 0.0
    %1917 = vmatprep.subr.mxu0 0.0
    %1918 = vmatpush1.xpose.msra.mxu0 0.0
    %1919 = vmatprep.subr.mxu0 0.0
    %1920 = vmatpush1.xpose.msra.mxu0 0.0
    %1921 = vmatprep.subr.mxu0 0.0
    %1922 = vmatpush1.xpose.msra.mxu0 0.0
    %1923 = vmatprep.subr.mxu0 0.0
    %1924 = vmatpush1.xpose.msra.mxu0 0.0
    %1925 = vmatprep.subr.mxu0 0.0
    %1926 = vmatpush1.xpose.msra.mxu0 0.0
    %1927 = vmatprep.subr.mxu0 0.0
    %1928 = vmatpush1.xpose.msra.mxu0 0.0
    %1929 = vmatprep.subr.mxu0 0.0
    %1930 = vmatpush1.xpose.msra.mxu0 0.0
    %1931 = vmatprep.subr.mxu0 0.0
    %1932 = vmatpush1.xpose.msra.mxu0 0.0
    %1933 = vmatprep.subr.mxu0 0.0
    %1934 = vmatpush1.xpose.msra.mxu0 0.0
    %1935 = vmatprep.subr.mxu0 0.0
    %1936 = vmatpush1.xpose.msra.mxu0 0.0
    %1937 = vmatprep.subr.mxu0 0.0
    %1938 = vmatpush1.xpose.msra.mxu0 0.0
    %1939 = vmatprep.subr.mxu0 0.0
    %1940 = vmatpush1.xpose.msra.mxu0 0.0
    %1941 = vmatprep.subr.mxu0 0.0
    %1942 = vmatpush1.xpose.msra.mxu0 0.0
    %1943 = vmatprep.subr.mxu0 0.0
    %1944 = vmatpush1.xpose.msra.mxu0 0.0
    %1945 = vmatprep.subr.mxu0 0.0
    %1946 = vmatpush1.xpose.msra.mxu0 0.0
    %1947 = vmatprep.subr.mxu0 0.0
    %1948 = vmatpush1.xpose.msra.mxu0 0.0
    %1949 = vmatprep.subr.mxu0 0.0
    %1950 = vmatpush1.xpose.msra.mxu0 0.0
    %1951 = vmatprep.subr.mxu0 0.0
    %1952 = vmatpush1.xpose.msra.mxu0 0.0
    %1953 = vmatprep.subr.mxu0 0.0
    %1954 = vmatpush1.xpose.msra.mxu0 0.0
    %1955 = vmatprep.subr.mxu0 0.0
    %1956 = vmatpush1.xpose.msra.mxu0 0.0
    %1957 = vmatprep.subr.mxu0 0.0
    %1958 = vmatpush1.xpose.msra.mxu0 0.0
    %1959 = vmatprep.subr.mxu0 0.0
    %1960 = vmatpush1.xpose.msra.mxu0 0.0
    %1961 = vmatprep.subr.mxu0 0.0
    %1962 = vmatpush1.xpose.msra.mxu0 0.0
    %1963 = vmatprep.subr.mxu0 0.0
    %1964 = vmatpush1.xpose.msra.mxu0 0.0
    %1965 = vmatprep.subr.mxu0 0.0
    %1966 = vmatpush1.xpose.msra.mxu0 0.0
    %1967 = vmatprep.subr.mxu0 0.0
    %1968 = vmatpush1.xpose.msra.mxu0 0.0
    %1969 = vmatprep.subr.mxu0 0.0
    %1970 = vmatpush1.xpose.msra.mxu0 0.0
    %1971 = vmatprep.subr.mxu0 0.0
    %1972 = vmatpush1.xpose.msra.mxu0 0.0
    %1973 = vmatprep.subr.mxu0 0.0
    %1974 = vmatpush1.xpose.msra.mxu0 0.0
    %1975 = vmatprep.mubr.f32.mxu0 0.0
    %1976 = vmatmul.mubr.f32.gmra.mrb[0].mxu0 %v1903
    %v1977 = vpop.f32.mrb[0].mxu0
    %v1978 = vadd.f32 0.0, %v1977
    %v1979 = vpop.f32.mrb[0].mxu0
    %1980 = vmatprep.mubr.f32.mxu0 0.0
    %1981 = vmatmul.mubr.f32.gmra.mrb[0].mxu0 %v1905
    %v1982 = vpop.f32.mrb[0].mxu0
    %v1983 = vadd.f32 0.0, %v1982
    %v1984 = vpop.f32.mrb[0].mxu0
    %1985 = vdwg.mxu0
    %v1986 = vsel %vm785, %v1887, -inf
    %1987 = vmax.xlane.f32.xlu0 %v1986
    %v1988 = vpop.xlane.xlu0 %1987
    %v1989 = vsel %vm785, %v1892, -inf
    %1990 = vmax.xlane.f32.xlu0 %v1989
    %v1991 = vpop.xlane.xlu0 %1990
    %v1992 = vsel %vm785, %v1978, -inf
    %1993 = vmax.xlane.f32.xlu0 %v1992
    %v1994 = vpop.xlane.xlu0 %1993
    %v1995 = vsel %vm785, %v1983, -inf
    %1996 = vmax.xlane.f32.xlu0 %v1995
    %v1997 = vpop.xlane.xlu0 %1996
    %v1998 = vsub.f32 %v1887, %v1988
    %v1999 = vsub.f32 %v1892, %v1991
    %v2000 = vsub.f32 %v1978, %v1994
    %v2001 = vsub.f32 %v1983, %v1997
    %v2002 = vmul.f32 %v1998, 1.442695
    %v2003 = vpow.pop %v2002
    %v2004 = vmul.f32 %v1999, 1.442695
    %v2005 = vpow.pop %v2004
    %v2006 = vmul.f32 %v2000, 1.442695
    %v2007 = vpow.pop %v2006
    %v2008 = vmul.f32 %v2001, 1.442695
    %v2009 = vpow.pop %v2008
    %v2010 = vsel %vm785, %v2003, 0.0
    %2011 = vadd.xlane.f32.xlu0 %v2010
    %v2012 = vpop.xlane.xlu0 %2011
    %v2013 = vsel %vm785, %v2005, 0.0
    %2014 = vadd.xlane.f32.xlu0 %v2013
    %v2015 = vpop.xlane.xlu0 %2014
    %v2016 = vsel %vm785, %v2007, 0.0
    %2017 = vadd.xlane.f32.xlu0 %v2016
    %v2018 = vpop.xlane.xlu0 %2017
    %v2019 = vsel %vm785, %v2009, 0.0
    %2020 = vadd.xlane.f32.xlu0 %v2019
    %v2021 = vpop.xlane.xlu0 %2020
    %v2022 = vrcp.pop %v2012
    %v2023 = vrcp.pop %v2015
    %v2024 = vrcp.pop %v2018
    %v2025 = vrcp.pop %v2021
    %v2026 = vmul.f32 %v2003, %v2022
    %v2027 = vmul.f32 %v2005, %v2023
    %v2028 = vmul.f32 %v2007, %v2024
    %v2029 = vmul.f32 %v2009, %v2025
    %2030 = vrot.lane.b32.xlu0 %v580, 40
    %v2031 = vpop.permute.xlu0 %2030
    %2032 = vrot.lane.b32.xlu0 %v585, 40
    %v2033 = vpop.permute.xlu0 %2032
    %v2037 = vsel %vm785, %v2026, 0
    %v2040 = vsel %vm785, %v2027, 0
    %2042 = vmatprep.subr.mxu0 0.0
    %2043 = vmatpush1.msra.mxu0 %v2031
    %2044 = vmatprep.subr.mxu0 0.0
    %2045 = vmatpush1.msra.mxu0 %v2033
    %2046 = vmatprep.subr.mxu0 0.0
    %2047 = vmatpush1.msra.mxu0 0.0
    %2048 = vmatprep.subr.mxu0 0.0
    %2049 = vmatpush1.msra.mxu0 0.0
    %2050 = vmatprep.subr.mxu0 0.0
    %2051 = vmatpush1.msra.mxu0 0.0
    %2052 = vmatprep.subr.mxu0 0.0
    %2053 = vmatpush1.msra.mxu0 0.0
    %2054 = vmatprep.subr.mxu0 0.0
    %2055 = vmatpush1.msra.mxu0 0.0
    %2056 = vmatprep.subr.mxu0 0.0
    %2057 = vmatpush1.msra.mxu0 0.0
    %2058 = vmatprep.subr.mxu0 0.0
    %2059 = vmatpush1.msra.mxu0 0.0
    %2060 = vmatprep.subr.mxu0 0.0
    %2061 = vmatpush1.msra.mxu0 0.0
    %2062 = vmatprep.subr.mxu0 0.0
    %2063 = vmatpush1.msra.mxu0 0.0
    %2064 = vmatprep.subr.mxu0 0.0
    %2065 = vmatpush1.msra.mxu0 0.0
    %2066 = vmatprep.subr.mxu0 0.0
    %2067 = vmatpush1.msra.mxu0 0.0
    %2068 = vmatprep.subr.mxu0 0.0
    %2069 = vmatpush1.msra.mxu0 0.0
    %2070 = vmatprep.subr.mxu0 0.0
    %2071 = vmatpush1.msra.mxu0 0.0
    %2072 = vmatprep.subr.mxu0 0.0
    %2073 = vmatpush1.msra.mxu0 0.0
    %2074 = vmatprep.subr.mxu0 0.0
    %2075 = vmatpush1.msra.mxu0 0.0
    %2076 = vmatprep.subr.mxu0 0.0
    %2077 = vmatpush1.msra.mxu0 0.0
    %2078 = vmatprep.subr.mxu0 0.0
    %2079 = vmatpush1.msra.mxu0 0.0
    %2080 = vmatprep.subr.mxu0 0.0
    %2081 = vmatpush1.msra.mxu0 0.0
    %2082 = vmatprep.subr.mxu0 0.0
    %2083 = vmatpush1.msra.mxu0 0.0
    %2084 = vmatprep.subr.mxu0 0.0
    %2085 = vmatpush1.msra.mxu0 0.0
    %2086 = vmatprep.subr.mxu0 0.0
    %2087 = vmatpush1.msra.mxu0 0.0
    %2088 = vmatprep.subr.mxu0 0.0
    %2089 = vmatpush1.msra.mxu0 0.0
    %2090 = vmatprep.subr.mxu0 0.0
    %2091 = vmatpush1.msra.mxu0 0.0
    %2092 = vmatprep.subr.mxu0 0.0
    %2093 = vmatpush1.msra.mxu0 0.0
    %2094 = vmatprep.subr.mxu0 0.0
    %2095 = vmatpush1.msra.mxu0 0.0
    %2096 = vmatprep.subr.mxu0 0.0
    %2097 = vmatpush1.msra.mxu0 0.0
    %2098 = vmatprep.subr.mxu0 0.0
    %2099 = vmatpush1.msra.mxu0 0.0
    %2100 = vmatprep.subr.mxu0 0.0
    %2101 = vmatpush1.msra.mxu0 0.0
    %2102 = vmatprep.subr.mxu0 0.0
    %2103 = vmatpush1.msra.mxu0 0.0
    %2104 = vmatprep.subr.mxu0 0.0
    %2105 = vmatpush1.msra.mxu0 0.0
    %2106 = vmatprep.mubr.f32.mxu0 0.0
    %2107 = vmatmul.mubr.f32.gmra.mrb[0].mxu0 %v2037
    %v2108 = vpop.f32.mrb[0].mxu0
    %v2109 = vadd.f32 0.0, %v2108
    %v2110 = vpop.f32.mrb[0].mxu0
    %2111 = vmatprep.mubr.f32.mxu0 0.0
    %2112 = vmatmul.mubr.f32.gmra.mrb[0].mxu0 %v2040
    %v2113 = vpop.f32.mrb[0].mxu0
    %v2114 = vadd.f32 0.0, %v2113
    %v2115 = vpop.f32.mrb[0].mxu0
    %2116 = vdwg.mxu0
    %2117 = vrot.lane.b32.xlu0 %v590, 40
    %v2118 = vpop.permute.xlu0 %2117
    %2119 = vrot.lane.b32.xlu0 %v595, 40
    %v2120 = vpop.permute.xlu0 %2119
    %v2124 = vsel %vm785, %v2028, 0
    %v2127 = vsel %vm785, %v2029, 0
    %2129 = vmatprep.subr.mxu0 0.0
    %2130 = vmatpush1.msra.mxu0 %v2118
    %2131 = vmatprep.subr.mxu0 0.0
    %2132 = vmatpush1.msra.mxu0 %v2120
    %2133 = vmatprep.subr.mxu0 0.0
    %2134 = vmatpush1.msra.mxu0 0.0
    %2135 = vmatprep.subr.mxu0 0.0
    %2136 = vmatpush1.msra.mxu0 0.0
    %2137 = vmatprep.subr.mxu0 0.0
    %2138 = vmatpush1.msra.mxu0 0.0
    %2139 = vmatprep.subr.mxu0 0.0
    %2140 = vmatpush1.msra.mxu0 0.0
    %2141 = vmatprep.subr.mxu0 0.0
    %2142 = vmatpush1.msra.mxu0 0.0
    %2143 = vmatprep.subr.mxu0 0.0
    %2144 = vmatpush1.msra.mxu0 0.0
    %2145 = vmatprep.subr.mxu0 0.0
    %2146 = vmatpush1.msra.mxu0 0.0
    %2147 = vmatprep.subr.mxu0 0.0
    %2148 = vmatpush1.msra.mxu0 0.0
    %2149 = vmatprep.subr.mxu0 0.0
    %2150 = vmatpush1.msra.mxu0 0.0
    %2151 = vmatprep.subr.mxu0 0.0
    %2152 = vmatpush1.msra.mxu0 0.0
    %2153 = vmatprep.subr.mxu0 0.0
    %2154 = vmatpush1.msra.mxu0 0.0
    %2155 = vmatprep.subr.mxu0 0.0
    %2156 = vmatpush1.msra.mxu0 0.0
    %2157 = vmatprep.subr.mxu0 0.0
    %2158 = vmatpush1.msra.mxu0 0.0
    %2159 = vmatprep.subr.mxu0 0.0
    %2160 = vmatpush1.msra.mxu0 0.0
    %2161 = vmatprep.subr.mxu0 0.0
    %2162 = vmatpush1.msra.mxu0 0.0
    %2163 = vmatprep.subr.mxu0 0.0
    %2164 = vmatpush1.msra.mxu0 0.0
    %2165 = vmatprep.subr.mxu0 0.0
    %2166 = vmatpush1.msra.mxu0 0.0
    %2167 = vmatprep.subr.mxu0 0.0
    %2168 = vmatpush1.msra.mxu0 0.0
    %2169 = vmatprep.subr.mxu0 0.0
    %2170 = vmatpush1.msra.mxu0 0.0
    %2171 = vmatprep.subr.mxu0 0.0
    %2172 = vmatpush1.msra.mxu0 0.0
    %2173 = vmatprep.subr.mxu0 0.0
    %2174 = vmatpush1.msra.mxu0 0.0
    %2175 = vmatprep.subr.mxu0 0.0
    %2176 = vmatpush1.msra.mxu0 0.0
    %2177 = vmatprep.subr.mxu0 0.0
    %2178 = vmatpush1.msra.mxu0 0.0
    %2179 = vmatprep.subr.mxu0 0.0
    %2180 = vmatpush1.msra.mxu0 0.0
    %2181 = vmatprep.subr.mxu0 0.0
    %2182 = vmatpush1.msra.mxu0 0.0
    %2183 = vmatprep.subr.mxu0 0.0
    %2184 = vmatpush1.msra.mxu0 0.0
    %2185 = vmatprep.subr.mxu0 0.0
    %2186 = vmatpush1.msra.mxu0 0.0
    %2187 = vmatprep.subr.mxu0 0.0
    %2188 = vmatpush1.msra.mxu0 0.0
    %2189 = vmatprep.subr.mxu0 0.0
    %2190 = vmatpush1.msra.mxu0 0.0
    %2191 = vmatprep.subr.mxu0 0.0
    %2192 = vmatpush1.msra.mxu0 0.0
    %2193 = vmatprep.mubr.f32.mxu0 0.0
    %2194 = vmatmul.mubr.f32.gmra.mrb[0].mxu0 %v2124
    %v2195 = vpop.f32.mrb[0].mxu0
    %v2196 = vadd.f32 0.0, %v2195
    %v2197 = vpop.f32.mrb[0].mxu0
    %2198 = vmatprep.mubr.f32.mxu0 0.0
    %2199 = vmatmul.mubr.f32.gmra.mrb[0].mxu0 %v2127
    %v2200 = vpop.f32.mrb[0].mxu0
    %v2201 = vadd.f32 0.0, %v2200
    %v2202 = vpop.f32.mrb[0].mxu0
    %2203 = vdwg.mxu0
    %2208 = vrot.lane.b32.xlu0 %v1309, 8
    %v2209 = vpop.permute.xlu0 %2208
    %2210 = vrot.lane.b32.xlu0 %v1314, 8
    %v2211 = vpop.permute.xlu0 %2210
    %2212 = vrot.lane.b32.xlu0 %v1396, 8
    %v2213 = vpop.permute.xlu0 %2212
    %2214 = vrot.lane.b32.xlu0 %v1401, 8
    %v2215 = vpop.permute.xlu0 %2214
    %2224 = vrot.lane.b32.xlu0 %v1709, 16
    %v2225 = vpop.permute.xlu0 %2224
    %2226 = vrot.lane.b32.xlu0 %v1714, 16
    %v2227 = vpop.permute.xlu0 %2226
    %2228 = vrot.lane.b32.xlu0 %v1796, 16
    %v2229 = vpop.permute.xlu0 %2228
    %2230 = vrot.lane.b32.xlu0 %v1801, 16
    %v2231 = vpop.permute.xlu0 %2230
    %2240 = vrot.lane.b32.xlu0 %v2109, 24
    %v2241 = vpop.permute.xlu0 %2240
    %2242 = vrot.lane.b32.xlu0 %v2114, 24
    %v2243 = vpop.permute.xlu0 %2242
    %2244 = vrot.lane.b32.xlu0 %v2196, 24
    %v2245 = vpop.permute.xlu0 %2244
    %2246 = vrot.lane.b32.xlu0 %v2201, 24
    %v2247 = vpop.permute.xlu0 %2246
    %v2252 = vsel %vm608, %v909, %v2209
    %v2253 = vsel %vm608, %v914, %v2211
    %v2254 = vsel %vm608, %v996, %v2213
    %v2255 = vsel %vm608, %v1001, %v2215
    %v2256 = vsel %vm785, %v2252, %v2225
    %v2257 = vsel %vm785, %v2253, %v2227
    %v2258 = vsel %vm785, %v2254, %v2229
    %v2259 = vsel %vm785, %v2255, %v2231
    %vm2260 = vcmask 195584
    %v2261 = vsel %vm2260, %v2256, %v2241
    %v2262 = vsel %vm2260, %v2257, %v2243
    %v2263 = vsel %vm2260, %v2258, %v2245
    %v2264 = vsel %vm2260, %v2259, %v2247
    %v2265 = vld [vmem:[#allocation7] sm:$0xff]
    %v2266 = vld [vmem:[#allocation7 + $0x8] sm:$0xff]
    %v2267 = vld [vmem:[#allocation7 + $0x10] sm:$0xff]
    %v2268 = vld [vmem:[#allocation7 + $0x18] sm:$0xff]
    %v2269 = vlaneseq
    %v2270 = vshrl.u32 %v2269, 7
    %v2271 = vsub.s32 6, %v2270
    %v2272 = vrot.slane %v92, %v2271
    %v2274 = vsel %vm210, %v2261, 0
    %v2277 = vsel %vm210, %v2262, 0
    %v2280 = vsel %vm210, %v2263, 0
    %v2283 = vsel %vm210, %v2264, 0
    %2285 = vmatprep.subr.mxu0 0.0
    %2286 = vmatpush1.msra.mxu0 %v2265
    %2287 = vmatprep.subr.mxu0 0.0
    %2288 = vmatpush1.msra.mxu0 %v2266
    %2289 = vmatprep.subr.mxu0 0.0
    %2290 = vmatpush1.msra.mxu0 %v2267
    %2291 = vmatprep.subr.mxu0 0.0
    %2292 = vmatpush1.msra.mxu0 %v2268
    %2293 = vmatprep.subr.mxu0 0.0
    %2294 = vmatpush1.msra.mxu0 0.0
    %2295 = vmatprep.subr.mxu0 0.0
    %2296 = vmatpush1.msra.mxu0 0.0
    %2297 = vmatprep.subr.mxu0 0.0
    %2298 = vmatpush1.msra.mxu0 0.0
    %2299 = vmatprep.subr.mxu0 0.0
    %2300 = vmatpush1.msra.mxu0 0.0
    %2301 = vmatprep.subr.mxu0 0.0
    %2302 = vmatpush1.msra.mxu0 0.0
    %2303 = vmatprep.subr.mxu0 0.0
    %2304 = vmatpush1.msra.mxu0 0.0
    %2305 = vmatprep.subr.mxu0 0.0
    %2306 = vmatpush1.msra.mxu0 0.0
    %2307 = vmatprep.subr.mxu0 0.0
    %2308 = vmatpush1.msra.mxu0 0.0
    %2309 = vmatprep.subr.mxu0 0.0
    %2310 = vmatpush1.msra.mxu0 0.0
    %2311 = vmatprep.subr.mxu0 0.0
    %2312 = vmatpush1.msra.mxu0 0.0
    %2313 = vmatprep.subr.mxu0 0.0
    %2314 = vmatpush1.msra.mxu0 0.0
    %2315 = vmatprep.subr.mxu0 0.0
    %2316 = vmatpush1.msra.mxu0 0.0
    %2317 = vmatprep.subr.mxu0 0.0
    %2318 = vmatpush1.msra.mxu0 0.0
    %2319 = vmatprep.subr.mxu0 0.0
    %2320 = vmatpush1.msra.mxu0 0.0
    %2321 = vmatprep.subr.mxu0 0.0
    %2322 = vmatpush1.msra.mxu0 0.0
    %2323 = vmatprep.subr.mxu0 0.0
    %2324 = vmatpush1.msra.mxu0 0.0
    %2325 = vmatprep.subr.mxu0 0.0
    %2326 = vmatpush1.msra.mxu0 0.0
    %2327 = vmatprep.subr.mxu0 0.0
    %2328 = vmatpush1.msra.mxu0 0.0
    %2329 = vmatprep.subr.mxu0 0.0
    %2330 = vmatpush1.msra.mxu0 0.0
    %2331 = vmatprep.subr.mxu0 0.0
    %2332 = vmatpush1.msra.mxu0 0.0
    %2333 = vmatprep.subr.mxu0 0.0
    %2334 = vmatpush1.msra.mxu0 0.0
    %2335 = vmatprep.subr.mxu0 0.0
    %2336 = vmatpush1.msra.mxu0 0.0
    %2337 = vmatprep.subr.mxu0 0.0
    %2338 = vmatpush1.msra.mxu0 0.0
    %2339 = vmatprep.subr.mxu0 0.0
    %2340 = vmatpush1.msra.mxu0 0.0
    %2341 = vmatprep.subr.mxu0 0.0
    %2342 = vmatpush1.msra.mxu0 0.0
    %2343 = vmatprep.subr.mxu0 0.0
    %2344 = vmatpush1.msra.mxu0 0.0
    %2345 = vmatprep.subr.mxu0 0.0
    %2346 = vmatpush1.msra.mxu0 0.0
    %2347 = vmatprep.subr.mxu0 0.0
    %2348 = vmatpush1.msra.mxu0 0.0
    %2349 = vmatprep.mubr.f32.mxu0 0.0
    %2350 = vmatmul.mubr.f32.gmra.mrb[0].mxu0 %v2274
    %v2351 = vpop.f32.mrb[0].mxu0
    %v2352 = vadd.f32 %v2272, %v2351
    %v2353 = vpop.f32.mrb[0].mxu0
    %2354 = vmatprep.mubr.f32.mxu0 0.0
    %2355 = vmatmul.mubr.f32.gmra.mrb[0].mxu0 %v2277
    %v2356 = vpop.f32.mrb[0].mxu0
    %v2357 = vadd.f32 %v2272, %v2356
    %v2358 = vpop.f32.mrb[0].mxu0
    %2359 = vmatprep.mubr.f32.mxu0 0.0
    %2360 = vmatmul.mubr.f32.gmra.mrb[0].mxu0 %v2280
    %v2361 = vpop.f32.mrb[0].mxu0
    %v2362 = vadd.f32 %v2272, %v2361
    %v2363 = vpop.f32.mrb[0].mxu0
    %2364 = vmatprep.mubr.f32.mxu0 0.0
    %2365 = vmatmul.mubr.f32.gmra.mrb[0].mxu0 %v2283
    %v2366 = vpop.f32.mrb[0].mxu0
    %v2367 = vadd.f32 %v2272, %v2366
    %v2368 = vpop.f32.mrb[0].mxu0
    %2369 = vdwg.mxu0
    %v2370 = vadd.f32 %v94, %v2352
    %v2371 = vadd.f32 %v95, %v2357
    %v2372 = vadd.f32 %v96, %v2362
    %v2373 = vadd.f32 %v97, %v2367
    %v2374 = vsel %vm210, %v2370, 0.0
    %2375 = vadd.xlane.f32.xlu0 %v2374
    %v2376 = vpop.xlane.xlu0 %2375
    %v2377 = vsel %vm210, %v2371, 0.0
    %2378 = vadd.xlane.f32.xlu0 %v2377
    %v2379 = vpop.xlane.xlu0 %2378
    %v2380 = vsel %vm210, %v2372, 0.0
    %2381 = vadd.xlane.f32.xlu0 %v2380
    %v2382 = vpop.xlane.xlu0 %2381
    %v2383 = vsel %vm210, %v2373, 0.0
    %2384 = vadd.xlane.f32.xlu0 %v2383
    %v2385 = vpop.xlane.xlu0 %2384
    %v2386 = vmul.f32 %v2376, %v223
    %v2387 = vmul.f32 %v2379, %v223
    %v2388 = vmul.f32 %v2382, %v223
    %v2389 = vmul.f32 %v2385, %v223
    %v2390 = vsub.f32 %v2370, %v2386
    %v2391 = vsub.f32 %v2371, %v2387
    %v2392 = vsub.f32 %v2372, %v2388
    %v2393 = vsub.f32 %v2373, %v2389
    %v2394 = vmul.f32 %v2390, %v2390
    %v2395 = vmul.f32 %v2391, %v2391
    %v2396 = vmul.f32 %v2392, %v2392
    %v2397 = vmul.f32 %v2393, %v2393
    %v2398 = vsel %vm210, %v2394, 0.0
    %2399 = vadd.xlane.f32.xlu0 %v2398
    %v2400 = vpop.xlane.xlu0 %2399
    %v2401 = vsel %vm210, %v2395, 0.0
    %2402 = vadd.xlane.f32.xlu0 %v2401
    %v2403 = vpop.xlane.xlu0 %2402
    %v2404 = vsel %vm210, %v2396, 0.0
    %2405 = vadd.xlane.f32.xlu0 %v2404
    %v2406 = vpop.xlane.xlu0 %2405
    %v2407 = vsel %vm210, %v2397, 0.0
    %2408 = vadd.xlane.f32.xlu0 %v2407
    %v2409 = vpop.xlane.xlu0 %2408
    %v2410 = vmul.f32 %v2400, %v223
    %v2411 = vmul.f32 %v2403, %v223
    %v2412 = vmul.f32 %v2406, %v223
    %v2413 = vmul.f32 %v2409, %v223
    %v2414 = vadd.f32 %v2410, 1e-05
    %v2415 = vadd.f32 %v2411, 1e-05
    %v2416 = vadd.f32 %v2412, 1e-05
    %v2417 = vadd.f32 %v2413, 1e-05
    %v2418 = vrsqrt.pop %v2414
    %v2419 = vrsqrt.pop %v2415
    %v2420 = vrsqrt.pop %v2416
    %v2421 = vrsqrt.pop %v2417
    %v2422 = vmul.f32 %v2390, %v2418
    %v2423 = vmul.f32 %v2391, %v2419
    %v2424 = vmul.f32 %v2392, %v2420
    %v2425 = vmul.f32 %v2393, %v2421
    %v2426 = vlaneseq
    %v2427 = vshrl.u32 %v2426, 7
    %v2428 = vsub.s32 7, %v2427
    %v2429 = vrot.slane %v92, %v2428
    %v2430 = vmul.f32 %v2422, %v2429
    %v2431 = vmul.f32 %v2423, %v2429
    %v2432 = vmul.f32 %v2424, %v2429
    %v2433 = vmul.f32 %v2425, %v2429
    %v2434 = vlaneseq
    %v2435 = vshrl.u32 %v2434, 7
    %v2436 = vsub.s32 0, %v2435
    %v2437 = vrot.slane %v93, %v2436
    %v2438 = vadd.f32 %v2430, %v2437
    %v2439 = vadd.f32 %v2431, %v2437
    %v2440 = vadd.f32 %v2432, %v2437
    %v2441 = vadd.f32 %v2433, %v2437
    %2442 = vst.msk [vmem:[%s10] sm:$0xff] %vm210, %v2438
    %2443 = vst.msk [vmem:[%s10 + $0x8] sm:$0xff] %vm210, %v2439
    %2444 = vst.msk [vmem:[%s10 + $0x10] sm:$0xff] %vm210, %v2440
    %2445 = vst.msk [vmem:[%s10 + $0x18] sm:$0xff] %vm210, %v2441
    %v2446 = vadd.f32 %v2438, %v457
    %v2447 = vadd.f32 %v2439, %v458
    %v2448 = vadd.f32 %v2440, %v459
    %v2449 = vadd.f32 %v2441, %v460
    %v2450 = vld [vmem:[%s7] sm:$0xff]
    %v2451 = vld [vmem:[%s7 + $0x8] sm:$0xff]
    %v2452 = vld [vmem:[%s7 + $0x10] sm:$0xff]
    %v2453 = vld [vmem:[%s7 + $0x18] sm:$0xff]
    %v2454 = vld [vmem:[%s7 + $0x20] sm:$0xff]
    %v2455 = vld [vmem:[%s7 + $0x28] sm:$0xff]
    %v2456 = vld [vmem:[%s7 + $0x30] sm:$0xff]
    %v2457 = vld [vmem:[%s7 + $0x38] sm:$0xff]
    %v2458 = vld [vmem:[%s8] sm:$0x3]
    %v2460 = vlaneseq
    %v2461 = vshrl.u32 %v2460, 7
    %v2462 = vsub.s32 0, %v2461
    %v2463 = vrot.slane %v2458, %v2462
    %v2464 = vlaneseq
    %v2465 = vshrl.u32 %v2464, 7
    %v2466 = vsub.s32 1, %v2465
    %v2467 = vrot.slane %v2458, %v2466
    %v2471 = vsel %vm210, %v2446, 0
    %v2474 = vsel %vm210, %v2447, 0
    %v2477 = vsel %vm210, %v2448, 0
    %v2480 = vsel %vm210, %v2449, 0
    %2482 = vmatprep.subr.mxu0 %v2451
    %2483 = vmatpush1.msra.mxu0 %v2450
    %2484 = vmatprep.subr.mxu0 %v2453
    %2485 = vmatpush1.msra.mxu0 %v2452
    %2486 = vmatprep.subr.mxu0 %v2455
    %2487 = vmatpush1.msra.mxu0 %v2454
    %2488 = vmatprep.subr.mxu0 %v2457
    %2489 = vmatpush1.msra.mxu0 %v2456
    %2490 = vmatprep.subr.mxu0 0.0
    %2491 = vmatpush1.msra.mxu0 0.0
    %2492 = vmatprep.subr.mxu0 0.0
    %2493 = vmatpush1.msra.mxu0 0.0
    %2494 = vmatprep.subr.mxu0 0.0
    %2495 = vmatpush1.msra.mxu0 0.0
    %2496 = vmatprep.subr.mxu0 0.0
    %2497 = vmatpush1.msra.mxu0 0.0
    %2498 = vmatprep.subr.mxu0 0.0
    %2499 = vmatpush1.msra.mxu0 0.0
    %2500 = vmatprep.subr.mxu0 0.0
    %2501 = vmatpush1.msra.mxu0 0.0
    %2502 = vmatprep.subr.mxu0 0.0
    %2503 = vmatpush1.msra.mxu0 0.0
    %2504 = vmatprep.subr.mxu0 0.0
    %2505 = vmatpush1.msra.mxu0 0.0
    %2506 = vmatprep.subr.mxu0 0.0
    %2507 = vmatpush1.msra.mxu0 0.0
    %2508 = vmatprep.subr.mxu0 0.0
    %2509 = vmatpush1.msra.mxu0 0.0
    %2510 = vmatprep.subr.mxu0 0.0
    %2511 = vmatpush1.msra.mxu0 0.0
    %2512 = vmatprep.subr.mxu0 0.0
    %2513 = vmatpush1.msra.mxu0 0.0
    %2514 = vmatprep.subr.mxu0 0.0
    %2515 = vmatpush1.msra.mxu0 0.0
    %2516 = vmatprep.subr.mxu0 0.0
    %2517 = vmatpush1.msra.mxu0 0.0
    %2518 = vmatprep.subr.mxu0 0.0
    %2519 = vmatpush1.msra.mxu0 0.0
    %2520 = vmatprep.subr.mxu0 0.0
    %2521 = vmatpush1.msra.mxu0 0.0
    %2522 = vmatprep.subr.mxu0 0.0
    %2523 = vmatpush1.msra.mxu0 0.0
    %2524 = vmatprep.subr.mxu0 0.0
    %2525 = vmatpush1.msra.mxu0 0.0
    %2526 = vmatprep.subr.mxu0 0.0
    %2527 = vmatpush1.msra.mxu0 0.0
    %2528 = vmatprep.subr.mxu0 0.0
    %2529 = vmatpush1.msra.mxu0 0.0
    %2530 = vmatprep.subr.mxu0 0.0
    %2531 = vmatpush1.msra.mxu0 0.0
    %2532 = vmatprep.subr.mxu0 0.0
    %2533 = vmatpush1.msra.mxu0 0.0
    %2534 = vmatprep.subr.mxu0 0.0
    %2535 = vmatpush1.msra.mxu0 0.0
    %2536 = vmatprep.subr.mxu0 0.0
    %2537 = vmatpush1.msra.mxu0 0.0
    %2538 = vmatprep.subr.mxu0 0.0
    %2539 = vmatpush1.msra.mxu0 0.0
    %2540 = vmatprep.subr.mxu0 0.0
    %2541 = vmatpush1.msra.mxu0 0.0
    %2542 = vmatprep.subr.mxu0 0.0
    %2543 = vmatpush1.msra.mxu0 0.0
    %2544 = vmatprep.subr.mxu0 0.0
    %2545 = vmatpush1.msra.mxu0 0.0
    %2546 = vmatprep.mubr.f32.mxu0 0.0
    %2547 = vmatmul.mubr.f32.gmra.mrb[0].mxu0 %v2471
    %v2548 = vpop.f32.mrb[0].mxu0
    %v2549 = vadd.f32 %v2463, %v2548
    %v2550 = vpop.f32.mrb[0].mxu0
    %v2551 = vadd.f32 %v2467, %v2550
    %2552 = vmatprep.mubr.f32.mxu0 0.0
    %2553 = vmatmul.mubr.f32.gmra.mrb[0].mxu0 %v2474
    %v2554 = vpop.f32.mrb[0].mxu0
    %v2555 = vadd.f32 %v2463, %v2554
    %v2556 = vpop.f32.mrb[0].mxu0
    %v2557 = vadd.f32 %v2467, %v2556
    %2558 = vmatprep.mubr.f32.mxu0 0.0
    %2559 = vmatmul.mubr.f32.gmra.mrb[0].mxu0 %v2477
    %v2560 = vpop.f32.mrb[0].mxu0
    %v2561 = vadd.f32 %v2463, %v2560
    %v2562 = vpop.f32.mrb[0].mxu0
    %v2563 = vadd.f32 %v2467, %v2562
    %2564 = vmatprep.mubr.f32.mxu0 0.0
    %2565 = vmatmul.mubr.f32.gmra.mrb[0].mxu0 %v2480
    %v2566 = vpop.f32.mrb[0].mxu0
    %v2567 = vadd.f32 %v2463, %v2566
    %v2568 = vpop.f32.mrb[0].mxu0
    %v2569 = vadd.f32 %v2467, %v2568
    %2570 = vdwg.mxu0
    %2571 = vst [vmem:[%s11] sm:$0xff] %v2549
    %2572 = vst.msk [vmem:[%s11 + $0x8] sm:$0xff] %vm500, %v2551
    %2573 = vst [vmem:[%s11 + $0x10] sm:$0xff] %v2555
    %2574 = vst.msk [vmem:[%s11 + $0x18] sm:$0xff] %vm500, %v2557
    %2575 = vst [vmem:[%s11 + $0x20] sm:$0xff] %v2561
    %2576 = vst.msk [vmem:[%s11 + $0x28] sm:$0xff] %vm500, %v2563
    %2577 = vst [vmem:[%s11 + $0x30] sm:$0xff] %v2567
    %2578 = vst.msk [vmem:[%s11 + $0x38] sm:$0xff] %vm500, %v2569
    // Predicated region
    $region58: #{decoder_layer_forward.2} parent=1 // pred_check
      _
    $region59: #{decoder_layer_forward.2} parent=1 // pred_check_branch
      %2580 = sbr.rel (0) target = $region61
    $region60: #{decoder_layer_forward.2} parent=1 // pred_region
      _
    $region61: #{decoder_layer_forward.2} parent=1 // pred_fallthru
      _
    // Predicated region
    $region62: #{decoder_layer_forward.2} parent=1 // pred_check
      _
    $region63: #{decoder_layer_forward.2} parent=1 // pred_check_branch
      %2582 = sbr.rel (0) target = $region65
    $region64: #{decoder_layer_forward.2} parent=1 // pred_region
      _
    $region65: #{decoder_layer_forward.2} parent=1 // pred_fallthru
      _
    // Predicated region
    $region66: #{decoder_layer_forward.2} parent=1 // pred_check
      _
    $region67: #{decoder_layer_forward.2} parent=1 // pred_check_branch
      %2584 = sbr.rel (0) target = $region69
    $region68: #{decoder_layer_forward.2} parent=1 // pred_region
      _
    $region69: #{decoder_layer_forward.2} parent=1 // pred_fallthru
      _
    // Predicated region
    $region70: #{decoder_layer_forward.2} parent=1 // pred_check
      _
    $region71: #{decoder_layer_forward.2} parent=1 // pred_check_branch
      %2586 = sbr.rel (0) target = $region73
    $region72: #{decoder_layer_forward.2} parent=1 // pred_region
      _
    $region73: #{decoder_layer_forward.2} parent=1 // pred_fallthru
      _
    %2587 = vsyncpa [#allocation3], 1
    %2588 = vsyncpa [#allocation5], 1
    %2589 = vsyncpa [#allocation8], 1

// kernel: decoder_layer_forward.3
$region0: #{decoder_layer_forward.3}
  #allocation0 [shape = 'u32[]', space=smem, size = 0x4, offset = 0x4, fixed_abs, tag = 'smem constant byte address 0x4 - core index']
  #allocation1 [shape = 'u32[144,128]{1,0:T(1,128)}', space=vmem, size = 0x12000, scoped, tag = 'internal scratch']
  %s0 = inlined_call_operand.vmem [shape: f32[32,32,64], index: 0, kind: input, shape index: {}]
  %s1 = inlined_call_operand.vmem [shape: f32[32,64], index: 1, kind: input, shape index: {}]
  %s2 = inlined_call_operand.vmem [shape: f32[32,1], index: 2, kind: input, shape index: {}]
  %s3 = inlined_call_operand.vmem [shape: f32[32,32], index: 3, kind: input, shape index: {}]
  %s4 = inlined_call_operand.vmem [shape: f32[32,32], index: 4, kind: input, shape index: {}]
  %s5 = inlined_call_operand.vmem [shape: f32[32,64], index: 5, kind: input, shape index: {}]
  %s6 = inlined_call_operand.vmem [shape: f32[1,64], index: 6, kind: input, shape index: {}]
  %s7 = inlined_call_operand.vmem [shape: f32[64,32], index: 7, kind: input, shape index: {}]
  %s8 = inlined_call_operand.vmem [shape: f32[6,32], index: 8, kind: input, shape index: {}]
  %s9 = inlined_call_operand.hbm [shape: f32[32,32], index: 9, kind: output, shape index: {}]
  %s10 = sld [smem:[#allocation0]]
  $region46: #{decoder_layer_forward.3} parent=0
    _
  %s12 = ssub.s32 1, %s10
  %s13 = scalar_select 0, %s12, %s10
  $region1: #{decoder_layer_forward.3} parent=0
    #allocation2 [shape = 'u8[16384]{0}', space=vmem, size = 0x4000, scoped, tag = 'output window, operand 0, single buffered']
    #allocation3 [shape = 's32[1]{0}', space=sflag, size = 0x4, scoped, tag = 'scoped memory for decoder_layer_forward.3']
    %14 = vsyncpa [#allocation3], 0
    // Predicated region
    $region2: #{decoder_layer_forward.3} parent=1 // pred_check
      _
    $region3: #{decoder_layer_forward.3} parent=1 // pred_check_branch
      %16 = sbr.rel (0) target = $region5
    $region4: #{decoder_layer_forward.3} parent=1 // pred_region
      _
    $region5: #{decoder_layer_forward.3} parent=1 // pred_fallthru
      _
    // Predicated region
    $region6: #{decoder_layer_forward.3} parent=1 // pred_check
      _
    $region7: #{decoder_layer_forward.3} parent=1 // pred_check_branch
      %18 = sbr.rel (0) target = $region9
    $region8: #{decoder_layer_forward.3} parent=1 // pred_region
      _
    $region9: #{decoder_layer_forward.3} parent=1 // pred_fallthru
      _
    // Predicated region
    $region10: #{decoder_layer_forward.3} parent=1 // pred_check
      _
    $region11: #{decoder_layer_forward.3} parent=1 // pred_check_branch
      %20 = sbr.rel (0) target = $region13
    $region12: #{decoder_layer_forward.3} parent=1 // pred_region
      _
    $region13: #{decoder_layer_forward.3} parent=1 // pred_fallthru
      _
    // Predicated region
    $region14: #{decoder_layer_forward.3} parent=1 // pred_check
      _
    $region15: #{decoder_layer_forward.3} parent=1 // pred_check_branch
      %22 = sbr.rel (0) target = $region17
    $region16: #{decoder_layer_forward.3} parent=1 // pred_region
      _
    $region17: #{decoder_layer_forward.3} parent=1 // pred_fallthru
      _
    // Predicated region
    $region18: #{decoder_layer_forward.3} parent=1 // pred_check
      _
    $region19: #{decoder_layer_forward.3} parent=1 // pred_check_branch
      %24 = sbr.rel (0) target = $region21
    $region20: #{decoder_layer_forward.3} parent=1 // pred_region
      _
    $region21: #{decoder_layer_forward.3} parent=1 // pred_fallthru
      _
    // Predicated region
    $region22: #{decoder_layer_forward.3} parent=1 // pred_check
      _
    $region23: #{decoder_layer_forward.3} parent=1 // pred_check_branch
      %26 = sbr.rel (0) target = $region25
    $region24: #{decoder_layer_forward.3} parent=1 // pred_region
      _
    $region25: #{decoder_layer_forward.3} parent=1 // pred_fallthru
      _
    // Predicated region
    $region26: #{decoder_layer_forward.3} parent=1 // pred_check
      _
    $region27: #{decoder_layer_forward.3} parent=1 // pred_check_branch
      %28 = sbr.rel (0) target = $region29
    $region28: #{decoder_layer_forward.3} parent=1 // pred_region
      _
    $region29: #{decoder_layer_forward.3} parent=1 // pred_fallthru
      _
    // Predicated region
    $region30: #{decoder_layer_forward.3} parent=1 // pred_check
      _
    $region31: #{decoder_layer_forward.3} parent=1 // pred_check_branch
      %30 = sbr.rel (0) target = $region33
    $region32: #{decoder_layer_forward.3} parent=1 // pred_region
      _
    $region33: #{decoder_layer_forward.3} parent=1 // pred_fallthru
      _
    // Predicated region
    $region34: #{decoder_layer_forward.3} parent=1 // pred_check
      _
    $region35: #{decoder_layer_forward.3} parent=1 // pred_check_branch
      %32 = sbr.rel (0) target = $region37
    $region36: #{decoder_layer_forward.3} parent=1 // pred_region
      _
    $region37: #{decoder_layer_forward.3} parent=1 // pred_fallthru
      _
    %v33 = vld [vmem:[%s8] sm:$0x3f]
    %v34 = vld [vmem:[%s0] sm:$0xff]
    %v35 = vld [vmem:[%s0 + $0x8] sm:$0xff]
    %v36 = vld [vmem:[%s0 + $0x10] sm:$0xff]
    %v37 = vld [vmem:[%s0 + $0x18] sm:$0xff]
    %v38 = vld [vmem:[%s0 + $0x20] sm:$0xff]
    %v39 = vld [vmem:[%s0 + $0x28] sm:$0xff]
    %v40 = vld [vmem:[%s0 + $0x30] sm:$0xff]
    %v41 = vld [vmem:[%s0 + $0x38] sm:$0xff]
    %v42 = vld [vmem:[%s0 + $0x40] sm:$0xff]
    %v43 = vld [vmem:[%s0 + $0x48] sm:$0xff]
    %v44 = vld [vmem:[%s0 + $0x50] sm:$0xff]
    %v45 = vld [vmem:[%s0 + $0x58] sm:$0xff]
    %v46 = vld [vmem:[%s0 + $0x60] sm:$0xff]
    %v47 = vld [vmem:[%s0 + $0x68] sm:$0xff]
    %v48 = vld [vmem:[%s0 + $0x70] sm:$0xff]
    %v49 = vld [vmem:[%s0 + $0x78] sm:$0xff]
    %v50 = vld [vmem:[%s0 + $0x80] sm:$0xff]
    %v51 = vld [vmem:[%s0 + $0x88] sm:$0xff]
    %v52 = vld [vmem:[%s0 + $0x90] sm:$0xff]
    %v53 = vld [vmem:[%s0 + $0x98] sm:$0xff]
    %v54 = vld [vmem:[%s0 + $0xa0] sm:$0xff]
    %v55 = vld [vmem:[%s0 + $0xa8] sm:$0xff]
    %v56 = vld [vmem:[%s0 + $0xb0] sm:$0xff]
    %v57 = vld [vmem:[%s0 + $0xb8] sm:$0xff]
    %v58 = vld [vmem:[%s0 + $0xc0] sm:$0xff]
    %v59 = vld [vmem:[%s0 + $0xc8] sm:$0xff]
    %v60 = vld [vmem:[%s0 + $0xd0] sm:$0xff]
    %v61 = vld [vmem:[%s0 + $0xd8] sm:$0xff]
    %v62 = vld [vmem:[%s0 + $0xe0] sm:$0xff]
    %v63 = vld [vmem:[%s0 + $0xe8] sm:$0xff]
    %v64 = vld [vmem:[%s0 + $0xf0] sm:$0xff]
    %v65 = vld [vmem:[%s0 + $0xf8] sm:$0xff]
    %v66 = vld [vmem:[%s0 + $0x100] sm:$0xff]
    %v67 = vld [vmem:[%s0 + $0x108] sm:$0xff]
    %v68 = vld [vmem:[%s0 + $0x110] sm:$0xff]
    %v69 = vld [vmem:[%s0 + $0x118] sm:$0xff]
    %v70 = vld [vmem:[%s0 + $0x120] sm:$0xff]
    %v71 = vld [vmem:[%s0 + $0x128] sm:$0xff]
    %v72 = vld [vmem:[%s0 + $0x130] sm:$0xff]
    %v73 = vld [vmem:[%s0 + $0x138] sm:$0xff]
    %v74 = vld [vmem:[%s0 + $0x140] sm:$0xff]
    %v75 = vld [vmem:[%s0 + $0x148] sm:$0xff]
    %v76 = vld [vmem:[%s0 + $0x150] sm:$0xff]
    %v77 = vld [vmem:[%s0 + $0x158] sm:$0xff]
    %v78 = vld [vmem:[%s0 + $0x160] sm:$0xff]
    %v79 = vld [vmem:[%s0 + $0x168] sm:$0xff]
    %v80 = vld [vmem:[%s0 + $0x170] sm:$0xff]
    %v81 = vld [vmem:[%s0 + $0x178] sm:$0xff]
    %v82 = vld [vmem:[%s0 + $0x180] sm:$0xff]
    %v83 = vld [vmem:[%s0 + $0x188] sm:$0xff]
    %v84 = vld [vmem:[%s0 + $0x190] sm:$0xff]
    %v85 = vld [vmem:[%s0 + $0x198] sm:$0xff]
    %v86 = vld [vmem:[%s0 + $0x1a0] sm:$0xff]
    %v87 = vld [vmem:[%s0 + $0x1a8] sm:$0xff]
    %v88 = vld [vmem:[%s0 + $0x1b0] sm:$0xff]
    %v89 = vld [vmem:[%s0 + $0x1b8] sm:$0xff]
    %v90 = vld [vmem:[%s0 + $0x1c0] sm:$0xff]
    %v91 = vld [vmem:[%s0 + $0x1c8] sm:$0xff]
    %v92 = vld [vmem:[%s0 + $0x1d0] sm:$0xff]
    %v93 = vld [vmem:[%s0 + $0x1d8] sm:$0xff]
    %v94 = vld [vmem:[%s0 + $0x1e0] sm:$0xff]
    %v95 = vld [vmem:[%s0 + $0x1e8] sm:$0xff]
    %v96 = vld [vmem:[%s0 + $0x1f0] sm:$0xff]
    %v97 = vld [vmem:[%s0 + $0x1f8] sm:$0xff]
    %v98 = vld [vmem:[%s0 + $0x200] sm:$0xff]
    %v99 = vld [vmem:[%s0 + $0x208] sm:$0xff]
    %v100 = vld [vmem:[%s0 + $0x210] sm:$0xff]
    %v101 = vld [vmem:[%s0 + $0x218] sm:$0xff]
    %v102 = vld [vmem:[%s0 + $0x220] sm:$0xff]
    %v103 = vld [vmem:[%s0 + $0x228] sm:$0xff]
    %v104 = vld [vmem:[%s0 + $0x230] sm:$0xff]
    %v105 = vld [vmem:[%s0 + $0x238] sm:$0xff]
    %v106 = vld [vmem:[%s0 + $0x240] sm:$0xff]
    %v107 = vld [vmem:[%s0 + $0x248] sm:$0xff]
    %v108 = vld [vmem:[%s0 + $0x250] sm:$0xff]
    %v109 = vld [vmem:[%s0 + $0x258] sm:$0xff]
    %v110 = vld [vmem:[%s0 + $0x260] sm:$0xff]
    %v111 = vld [vmem:[%s0 + $0x268] sm:$0xff]
    %v112 = vld [vmem:[%s0 + $0x270] sm:$0xff]
    %v113 = vld [vmem:[%s0 + $0x278] sm:$0xff]
    %v114 = vld [vmem:[%s0 + $0x280] sm:$0xff]
    %v115 = vld [vmem:[%s0 + $0x288] sm:$0xff]
    %v116 = vld [vmem:[%s0 + $0x290] sm:$0xff]
    %v117 = vld [vmem:[%s0 + $0x298] sm:$0xff]
    %v118 = vld [vmem:[%s0 + $0x2a0] sm:$0xff]
    %v119 = vld [vmem:[%s0 + $0x2a8] sm:$0xff]
    %v120 = vld [vmem:[%s0 + $0x2b0] sm:$0xff]
    %v121 = vld [vmem:[%s0 + $0x2b8] sm:$0xff]
    %v122 = vld [vmem:[%s0 + $0x2c0] sm:$0xff]
    %v123 = vld [vmem:[%s0 + $0x2c8] sm:$0xff]
    %v124 = vld [vmem:[%s0 + $0x2d0] sm:$0xff]
    %v125 = vld [vmem:[%s0 + $0x2d8] sm:$0xff]
    %v126 = vld [vmem:[%s0 + $0x2e0] sm:$0xff]
    %v127 = vld [vmem:[%s0 + $0x2e8] sm:$0xff]
    %v128 = vld [vmem:[%s0 + $0x2f0] sm:$0xff]
    %v129 = vld [vmem:[%s0 + $0x2f8] sm:$0xff]
    %v130 = vld [vmem:[%s0 + $0x300] sm:$0xff]
    %v131 = vld [vmem:[%s0 + $0x308] sm:$0xff]
    %v132 = vld [vmem:[%s0 + $0x310] sm:$0xff]
    %v133 = vld [vmem:[%s0 + $0x318] sm:$0xff]
    %v134 = vld [vmem:[%s0 + $0x320] sm:$0xff]
    %v135 = vld [vmem:[%s0 + $0x328] sm:$0xff]
    %v136 = vld [vmem:[%s0 + $0x330] sm:$0xff]
    %v137 = vld [vmem:[%s0 + $0x338] sm:$0xff]
    %v138 = vld [vmem:[%s0 + $0x340] sm:$0xff]
    %v139 = vld [vmem:[%s0 + $0x348] sm:$0xff]
    %v140 = vld [vmem:[%s0 + $0x350] sm:$0xff]
    %v141 = vld [vmem:[%s0 + $0x358] sm:$0xff]
    %v142 = vld [vmem:[%s0 + $0x360] sm:$0xff]
    %v143 = vld [vmem:[%s0 + $0x368] sm:$0xff]
    %v144 = vld [vmem:[%s0 + $0x370] sm:$0xff]
    %v145 = vld [vmem:[%s0 + $0x378] sm:$0xff]
    %v146 = vld [vmem:[%s0 + $0x380] sm:$0xff]
    %v147 = vld [vmem:[%s0 + $0x388] sm:$0xff]
    %v148 = vld [vmem:[%s0 + $0x390] sm:$0xff]
    %v149 = vld [vmem:[%s0 + $0x398] sm:$0xff]
    %v150 = vld [vmem:[%s0 + $0x3a0] sm:$0xff]
    %v151 = vld [vmem:[%s0 + $0x3a8] sm:$0xff]
    %v152 = vld [vmem:[%s0 + $0x3b0] sm:$0xff]
    %v153 = vld [vmem:[%s0 + $0x3b8] sm:$0xff]
    %v154 = vld [vmem:[%s0 + $0x3c0] sm:$0xff]
    %v155 = vld [vmem:[%s0 + $0x3c8] sm:$0xff]
    %v156 = vld [vmem:[%s0 + $0x3d0] sm:$0xff]
    %v157 = vld [vmem:[%s0 + $0x3d8] sm:$0xff]
    %v158 = vld [vmem:[%s0 + $0x3e0] sm:$0xff]
    %v159 = vld [vmem:[%s0 + $0x3e8] sm:$0xff]
    %v160 = vld [vmem:[%s0 + $0x3f0] sm:$0xff]
    %v161 = vld [vmem:[%s0 + $0x3f8] sm:$0xff]
    %v162 = vld [vmem:[%s1] sm:$0xff]
    %v163 = vld [vmem:[%s1 + $0x8] sm:$0xff]
    %v164 = vld [vmem:[%s1 + $0x10] sm:$0xff]
    %v165 = vld [vmem:[%s1 + $0x18] sm:$0xff]
    %v170 = vcombine.high %v162, %v162
    %v172 = vunpack.c.l.s4 1966171168
    %v173 = vunpack.c.0.s8 %v172
    %v174 = vlaneseq
    %v175 = vshrl.u32 %v174, 7
    %v176 = vsub.s32 %v173, %v175
    %v177 = vrot.slane %v162, %v176
    %v179 = vunpack.c.l.s4 1966171168
    %v180 = vunpack.c.0.s8 %v179
    %v181 = vlaneseq
    %v182 = vshrl.u32 %v181, 7
    %v183 = vsub.s32 %v180, %v182
    %v184 = vrot.slane %v170, %v183
    %v185 = vcombine.high %v177, %v177
    %v186 = vcombine.high %v184, %v184
    %v188 = vunpack.c.l.s4 1966171168
    %v189 = vunpack.c.0.s8 %v188
    %v190 = vlaneseq
    %v191 = vshrl.u32 %v190, 7
    %v192 = vsub.s32 %v189, %v191
    %v193 = vrot.slane %v177, %v192
    %v195 = vunpack.c.l.s4 1966171168
    %v196 = vunpack.c.0.s8 %v195
    %v197 = vlaneseq
    %v198 = vshrl.u32 %v197, 7
    %v199 = vsub.s32 %v196, %v198
    %v200 = vrot.slane %v184, %v199
    %v202 = vunpack.c.l.s4 1966171168
    %v203 = vunpack.c.0.s8 %v202
    %v204 = vlaneseq
    %v205 = vshrl.u32 %v204, 7
    %v206 = vsub.s32 %v203, %v205
    %v207 = vrot.slane %v185, %v206
    %v209 = vunpack.c.l.s4 1966171168
    %v210 = vunpack.c.0.s8 %v209
    %v211 = vlaneseq
    %v212 = vshrl.u32 %v211, 7
    %v213 = vsub.s32 %v210, %v212
    %v214 = vrot.slane %v186, %v213
    %v215 = vcombine.high %v193, %v193
    %v216 = vcombine.high %v200, %v200
    %v217 = vcombine.high %v207, %v207
    %v218 = vcombine.high %v214, %v214
    %v219 = vcombine.high %v163, %v163
    %v221 = vunpack.c.l.s4 1966171168
    %v222 = vunpack.c.0.s8 %v221
    %v223 = vlaneseq
    %v224 = vshrl.u32 %v223, 7
    %v225 = vsub.s32 %v222, %v224
    %v226 = vrot.slane %v163, %v225
    %v228 = vunpack.c.l.s4 1966171168
    %v229 = vunpack.c.0.s8 %v228
    %v230 = vlaneseq
    %v231 = vshrl.u32 %v230, 7
    %v232 = vsub.s32 %v229, %v231
    %v233 = vrot.slane %v219, %v232
    %v234 = vcombine.high %v226, %v226
    %v235 = vcombine.high %v233, %v233
    %v237 = vunpack.c.l.s4 1966171168
    %v238 = vunpack.c.0.s8 %v237
    %v239 = vlaneseq
    %v240 = vshrl.u32 %v239, 7
    %v241 = vsub.s32 %v238, %v240
    %v242 = vrot.slane %v226, %v241
    %v244 = vunpack.c.l.s4 1966171168
    %v245 = vunpack.c.0.s8 %v244
    %v246 = vlaneseq
    %v247 = vshrl.u32 %v246, 7
    %v248 = vsub.s32 %v245, %v247
    %v249 = vrot.slane %v233, %v248
    %v251 = vunpack.c.l.s4 1966171168
    %v252 = vunpack.c.0.s8 %v251
    %v253 = vlaneseq
    %v254 = vshrl.u32 %v253, 7
    %v255 = vsub.s32 %v252, %v254
    %v256 = vrot.slane %v234, %v255
    %v258 = vunpack.c.l.s4 1966171168
    %v259 = vunpack.c.0.s8 %v258
    %v260 = vlaneseq
    %v261 = vshrl.u32 %v260, 7
    %v262 = vsub.s32 %v259, %v261
    %v263 = vrot.slane %v235, %v262
    %v264 = vcombine.high %v242, %v242
    %v265 = vcombine.high %v249, %v249
    %v266 = vcombine.high %v256, %v256
    %v267 = vcombine.high %v263, %v263
    %v268 = vcombine.high %v164, %v164
    %v270 = vunpack.c.l.s4 1966171168
    %v271 = vunpack.c.0.s8 %v270
    %v272 = vlaneseq
    %v273 = vshrl.u32 %v272, 7
    %v274 = vsub.s32 %v271, %v273
    %v275 = vrot.slane %v164, %v274
    %v277 = vunpack.c.l.s4 1966171168
    %v278 = vunpack.c.0.s8 %v277
    %v279 = vlaneseq
    %v280 = vshrl.u32 %v279, 7
    %v281 = vsub.s32 %v278, %v280
    %v282 = vrot.slane %v268, %v281
    %v283 = vcombine.high %v275, %v275
    %v284 = vcombine.high %v282, %v282
    %v286 = vunpack.c.l.s4 1966171168
    %v287 = vunpack.c.0.s8 %v286
    %v288 = vlaneseq
    %v289 = vshrl.u32 %v288, 7
    %v290 = vsub.s32 %v287, %v289
    %v291 = vrot.slane %v275, %v290
    %v293 = vunpack.c.l.s4 1966171168
    %v294 = vunpack.c.0.s8 %v293
    %v295 = vlaneseq
    %v296 = vshrl.u32 %v295, 7
    %v297 = vsub.s32 %v294, %v296
    %v298 = vrot.slane %v282, %v297
    %v300 = vunpack.c.l.s4 1966171168
    %v301 = vunpack.c.0.s8 %v300
    %v302 = vlaneseq
    %v303 = vshrl.u32 %v302, 7
    %v304 = vsub.s32 %v301, %v303
    %v305 = vrot.slane %v283, %v304
    %v307 = vunpack.c.l.s4 1966171168
    %v308 = vunpack.c.0.s8 %v307
    %v309 = vlaneseq
    %v310 = vshrl.u32 %v309, 7
    %v311 = vsub.s32 %v308, %v310
    %v312 = vrot.slane %v284, %v311
    %v313 = vcombine.high %v291, %v291
    %v314 = vcombine.high %v298, %v298
    %v315 = vcombine.high %v305, %v305
    %v316 = vcombine.high %v312, %v312
    %v317 = vcombine.high %v165, %v165
    %v319 = vunpack.c.l.s4 1966171168
    %v320 = vunpack.c.0.s8 %v319
    %v321 = vlaneseq
    %v322 = vshrl.u32 %v321, 7
    %v323 = vsub.s32 %v320, %v322
    %v324 = vrot.slane %v165, %v323
    %v326 = vunpack.c.l.s4 1966171168
    %v327 = vunpack.c.0.s8 %v326
    %v328 = vlaneseq
    %v329 = vshrl.u32 %v328, 7
    %v330 = vsub.s32 %v327, %v329
    %v331 = vrot.slane %v317, %v330
    %v332 = vcombine.high %v324, %v324
    %v333 = vcombine.high %v331, %v331
    %v335 = vunpack.c.l.s4 1966171168
    %v336 = vunpack.c.0.s8 %v335
    %v337 = vlaneseq
    %v338 = vshrl.u32 %v337, 7
    %v339 = vsub.s32 %v336, %v338
    %v340 = vrot.slane %v324, %v339
    %v342 = vunpack.c.l.s4 1966171168
    %v343 = vunpack.c.0.s8 %v342
    %v344 = vlaneseq
    %v345 = vshrl.u32 %v344, 7
    %v346 = vsub.s32 %v343, %v345
    %v347 = vrot.slane %v331, %v346
    %v349 = vunpack.c.l.s4 1966171168
    %v350 = vunpack.c.0.s8 %v349
    %v351 = vlaneseq
    %v352 = vshrl.u32 %v351, 7
    %v353 = vsub.s32 %v350, %v352
    %v354 = vrot.slane %v332, %v353
    %v356 = vunpack.c.l.s4 1966171168
    %v357 = vunpack.c.0.s8 %v356
    %v358 = vlaneseq
    %v359 = vshrl.u32 %v358, 7
    %v360 = vsub.s32 %v357, %v359
    %v361 = vrot.slane %v333, %v360
    %v362 = vcombine.high %v340, %v340
    %v363 = vcombine.high %v347, %v347
    %v364 = vcombine.high %v354, %v354
    %v365 = vcombine.high %v361, %v361
    %v366 = vlaneseq
    %v367 = vshrl.u32 %v366, 7
    %v368 = vsub.s32 0, %v367
    %v369 = vrot.slane %v193, %v368
    %v370 = vlaneseq
    %v371 = vshrl.u32 %v370, 7
    %v372 = vsub.s32 0, %v371
    %v373 = vrot.slane %v207, %v372
    %v374 = vlaneseq
    %v375 = vshrl.u32 %v374, 7
    %v376 = vsub.s32 0, %v375
    %v377 = vrot.slane %v215, %v376
    %v378 = vlaneseq
    %v379 = vshrl.u32 %v378, 7
    %v380 = vsub.s32 0, %v379
    %v381 = vrot.slane %v217, %v380
    %v382 = vlaneseq
    %v383 = vshrl.u32 %v382, 7
    %v384 = vsub.s32 0, %v383
    %v385 = vrot.slane %v200, %v384
    %v386 = vlaneseq
    %v387 = vshrl.u32 %v386, 7
    %v388 = vsub.s32 0, %v387
    %v389 = vrot.slane %v214, %v388
    %v390 = vlaneseq
    %v391 = vshrl.u32 %v390, 7
    %v392 = vsub.s32 0, %v391
    %v393 = vrot.slane %v216, %v392
    %v394 = vlaneseq
    %v395 = vshrl.u32 %v394, 7
    %v396 = vsub.s32 0, %v395
    %v397 = vrot.slane %v218, %v396
    %v398 = vlaneseq
    %v399 = vshrl.u32 %v398, 7
    %v400 = vsub.s32 0, %v399
    %v401 = vrot.slane %v242, %v400
    %v402 = vlaneseq
    %v403 = vshrl.u32 %v402, 7
    %v404 = vsub.s32 0, %v403
    %v405 = vrot.slane %v256, %v404
    %v406 = vlaneseq
    %v407 = vshrl.u32 %v406, 7
    %v408 = vsub.s32 0, %v407
    %v409 = vrot.slane %v264, %v408
    %v410 = vlaneseq
    %v411 = vshrl.u32 %v410, 7
    %v412 = vsub.s32 0, %v411
    %v413 = vrot.slane %v266, %v412
    %v414 = vlaneseq
    %v415 = vshrl.u32 %v414, 7
    %v416 = vsub.s32 0, %v415
    %v417 = vrot.slane %v249, %v416
    %v418 = vlaneseq
    %v419 = vshrl.u32 %v418, 7
    %v420 = vsub.s32 0, %v419
    %v421 = vrot.slane %v263, %v420
    %v422 = vlaneseq
    %v423 = vshrl.u32 %v422, 7
    %v424 = vsub.s32 0, %v423
    %v425 = vrot.slane %v265, %v424
    %v426 = vlaneseq
    %v427 = vshrl.u32 %v426, 7
    %v428 = vsub.s32 0, %v427
    %v429 = vrot.slane %v267, %v428
    %v430 = vlaneseq
    %v431 = vshrl.u32 %v430, 7
    %v432 = vsub.s32 0, %v431
    %v433 = vrot.slane %v291, %v432
    %v434 = vlaneseq
    %v435 = vshrl.u32 %v434, 7
    %v436 = vsub.s32 0, %v435
    %v437 = vrot.slane %v305, %v436
    %v438 = vlaneseq
    %v439 = vshrl.u32 %v438, 7
    %v440 = vsub.s32 0, %v439
    %v441 = vrot.slane %v313, %v440
    %v442 = vlaneseq
    %v443 = vshrl.u32 %v442, 7
    %v444 = vsub.s32 0, %v443
    %v445 = vrot.slane %v315, %v444
    %v446 = vlaneseq
    %v447 = vshrl.u32 %v446, 7
    %v448 = vsub.s32 0, %v447
    %v449 = vrot.slane %v298, %v448
    %v450 = vlaneseq
    %v451 = vshrl.u32 %v450, 7
    %v452 = vsub.s32 0, %v451
    %v453 = vrot.slane %v312, %v452
    %v454 = vlaneseq
    %v455 = vshrl.u32 %v454, 7
    %v456 = vsub.s32 0, %v455
    %v457 = vrot.slane %v314, %v456
    %v458 = vlaneseq
    %v459 = vshrl.u32 %v458, 7
    %v460 = vsub.s32 0, %v459
    %v461 = vrot.slane %v316, %v460
    %v462 = vlaneseq
    %v463 = vshrl.u32 %v462, 7
    %v464 = vsub.s32 0, %v463
    %v465 = vrot.slane %v340, %v464
    %v466 = vlaneseq
    %v467 = vshrl.u32 %v466, 7
    %v468 = vsub.s32 0, %v467
    %v469 = vrot.slane %v354, %v468
    %v470 = vlaneseq
    %v471 = vshrl.u32 %v470, 7
    %v472 = vsub.s32 0, %v471
    %v473 = vrot.slane %v362, %v472
    %v474 = vlaneseq
    %v475 = vshrl.u32 %v474, 7
    %v476 = vsub.s32 0, %v475
    %v477 = vrot.slane %v364, %v476
    %v478 = vlaneseq
    %v479 = vshrl.u32 %v478, 7
    %v480 = vsub.s32 0, %v479
    %v481 = vrot.slane %v347, %v480
    %v482 = vlaneseq
    %v483 = vshrl.u32 %v482, 7
    %v484 = vsub.s32 0, %v483
    %v485 = vrot.slane %v361, %v484
    %v486 = vlaneseq
    %v487 = vshrl.u32 %v486, 7
    %v488 = vsub.s32 0, %v487
    %v489 = vrot.slane %v363, %v488
    %v490 = vlaneseq
    %v491 = vshrl.u32 %v490, 7
    %v492 = vsub.s32 0, %v491
    %v493 = vrot.slane %v365, %v492
    %v526 = vmul.f32 %v34, %v369
    %v527 = vmul.f32 %v35, %v369
    %v528 = vmul.f32 %v36, %v369
    %v529 = vmul.f32 %v37, %v369
    %v530 = vmul.f32 %v38, %v373
    %v531 = vmul.f32 %v39, %v373
    %v532 = vmul.f32 %v40, %v373
    %v533 = vmul.f32 %v41, %v373
    %v534 = vmul.f32 %v42, %v377
    %v535 = vmul.f32 %v43, %v377
    %v536 = vmul.f32 %v44, %v377
    %v537 = vmul.f32 %v45, %v377
    %v538 = vmul.f32 %v46, %v381
    %v539 = vmul.f32 %v47, %v381
    %v540 = vmul.f32 %v48, %v381
    %v541 = vmul.f32 %v49, %v381
    %v542 = vmul.f32 %v50, %v385
    %v543 = vmul.f32 %v51, %v385
    %v544 = vmul.f32 %v52, %v385
    %v545 = vmul.f32 %v53, %v385
    %v546 = vmul.f32 %v54, %v389
    %v547 = vmul.f32 %v55, %v389
    %v548 = vmul.f32 %v56, %v389
    %v549 = vmul.f32 %v57, %v389
    %v550 = vmul.f32 %v58, %v393
    %v551 = vmul.f32 %v59, %v393
    %v552 = vmul.f32 %v60, %v393
    %v553 = vmul.f32 %v61, %v393
    %v554 = vmul.f32 %v62, %v397
    %v555 = vmul.f32 %v63, %v397
    %v556 = vmul.f32 %v64, %v397
    %v557 = vmul.f32 %v65, %v397
    %v558 = vmul.f32 %v66, %v401
    %v559 = vmul.f32 %v67, %v401
    %v560 = vmul.f32 %v68, %v401
    %v561 = vmul.f32 %v69, %v401
    %v562 = vmul.f32 %v70, %v405
    %v563 = vmul.f32 %v71, %v405
    %v564 = vmul.f32 %v72, %v405
    %v565 = vmul.f32 %v73, %v405
    %v566 = vmul.f32 %v74, %v409
    %v567 = vmul.f32 %v75, %v409
    %v568 = vmul.f32 %v76, %v409
    %v569 = vmul.f32 %v77, %v409
    %v570 = vmul.f32 %v78, %v413
    %v571 = vmul.f32 %v79, %v413
    %v572 = vmul.f32 %v80, %v413
    %v573 = vmul.f32 %v81, %v413
    %v574 = vmul.f32 %v82, %v417
    %v575 = vmul.f32 %v83, %v417
    %v576 = vmul.f32 %v84, %v417
    %v577 = vmul.f32 %v85, %v417
    %v578 = vmul.f32 %v86, %v421
    %v579 = vmul.f32 %v87, %v421
    %v580 = vmul.f32 %v88, %v421
    %v581 = vmul.f32 %v89, %v421
    %v582 = vmul.f32 %v90, %v425
    %v583 = vmul.f32 %v91, %v425
    %v584 = vmul.f32 %v92, %v425
    %v585 = vmul.f32 %v93, %v425
    %v586 = vmul.f32 %v94, %v429
    %v587 = vmul.f32 %v95, %v429
    %v588 = vmul.f32 %v96, %v429
    %v589 = vmul.f32 %v97, %v429
    %v590 = vmul.f32 %v98, %v433
    %v591 = vmul.f32 %v99, %v433
    %v592 = vmul.f32 %v100, %v433
    %v593 = vmul.f32 %v101, %v433
    %v594 = vmul.f32 %v102, %v437
    %v595 = vmul.f32 %v103, %v437
    %v596 = vmul.f32 %v104, %v437
    %v597 = vmul.f32 %v105, %v437
    %v598 = vmul.f32 %v106, %v441
    %v599 = vmul.f32 %v107, %v441
    %v600 = vmul.f32 %v108, %v441
    %v601 = vmul.f32 %v109, %v441
    %v602 = vmul.f32 %v110, %v445
    %v603 = vmul.f32 %v111, %v445
    %v604 = vmul.f32 %v112, %v445
    %v605 = vmul.f32 %v113, %v445
    %v606 = vmul.f32 %v114, %v449
    %v607 = vmul.f32 %v115, %v449
    %v608 = vmul.f32 %v116, %v449
    %v609 = vmul.f32 %v117, %v449
    %v610 = vmul.f32 %v118, %v453
    %v611 = vmul.f32 %v119, %v453
    %v612 = vmul.f32 %v120, %v453
    %v613 = vmul.f32 %v121, %v453
    %v614 = vmul.f32 %v122, %v457
    %v615 = vmul.f32 %v123, %v457
    %v616 = vmul.f32 %v124, %v457
    %v617 = vmul.f32 %v125, %v457
    %v618 = vmul.f32 %v126, %v461
    %v619 = vmul.f32 %v127, %v461
    %v620 = vmul.f32 %v128, %v461
    %v621 = vmul.f32 %v129, %v461
    %v622 = vmul.f32 %v130, %v465
    %v623 = vmul.f32 %v131, %v465
    %v624 = vmul.f32 %v132, %v465
    %v625 = vmul.f32 %v133, %v465
    %v626 = vmul.f32 %v134, %v469
    %v627 = vmul.f32 %v135, %v469
    %v628 = vmul.f32 %v136, %v469
    %v629 = vmul.f32 %v137, %v469
    %v630 = vmul.f32 %v138, %v473
    %v631 = vmul.f32 %v139, %v473
    %v632 = vmul.f32 %v140, %v473
    %v633 = vmul.f32 %v141, %v473
    %v634 = vmul.f32 %v142, %v477
    %v635 = vmul.f32 %v143, %v477
    %v636 = vmul.f32 %v144, %v477
    %v637 = vmul.f32 %v145, %v477
    %v638 = vmul.f32 %v146, %v481
    %v639 = vmul.f32 %v147, %v481
    %v640 = vmul.f32 %v148, %v481
    %v641 = vmul.f32 %v149, %v481
    %v642 = vmul.f32 %v150, %v485
    %v643 = vmul.f32 %v151, %v485
    %v644 = vmul.f32 %v152, %v485
    %v645 = vmul.f32 %v153, %v485
    %v646 = vmul.f32 %v154, %v489
    %v647 = vmul.f32 %v155, %v489
    %v648 = vmul.f32 %v156, %v489
    %v649 = vmul.f32 %v157, %v489
    %v650 = vmul.f32 %v158, %v493
    %v651 = vmul.f32 %v159, %v493
    %v652 = vmul.f32 %v160, %v493
    %v653 = vmul.f32 %v161, %v493
    %vm654 = vcmask 523264
    %v655 = vsel %vm654, %v526, 0.0
    %656 = vadd.xlane.f32.xlu0 %v655
    %v657 = vpop.xlane.xlu0 %656
    %v658 = vsel %vm654, %v527, 0.0
    %659 = vadd.xlane.f32.xlu0 %v658
    %v660 = vpop.xlane.xlu0 %659
    %v661 = vsel %vm654, %v528, 0.0
    %662 = vadd.xlane.f32.xlu0 %v661
    %v663 = vpop.xlane.xlu0 %662
    %v664 = vsel %vm654, %v529, 0.0
    %665 = vadd.xlane.f32.xlu0 %v664
    %v666 = vpop.xlane.xlu0 %665
    %v667 = vsel %vm654, %v530, 0.0
    %668 = vadd.xlane.f32.xlu0 %v667
    %v669 = vpop.xlane.xlu0 %668
    %v670 = vsel %vm654, %v531, 0.0
    %671 = vadd.xlane.f32.xlu0 %v670
    %v672 = vpop.xlane.xlu0 %671
    %v673 = vsel %vm654, %v532, 0.0
    %674 = vadd.xlane.f32.xlu0 %v673
    %v675 = vpop.xlane.xlu0 %674
    %v676 = vsel %vm654, %v533, 0.0
    %677 = vadd.xlane.f32.xlu0 %v676
    %v678 = vpop.xlane.xlu0 %677
    %v679 = vsel %vm654, %v534, 0.0
    %680 = vadd.xlane.f32.xlu0 %v679
    %v681 = vpop.xlane.xlu0 %680
    %v682 = vsel %vm654, %v535, 0.0
    %683 = vadd.xlane.f32.xlu0 %v682
    %v684 = vpop.xlane.xlu0 %683
    %v685 = vsel %vm654, %v536, 0.0
    %686 = vadd.xlane.f32.xlu0 %v685
    %v687 = vpop.xlane.xlu0 %686
    %v688 = vsel %vm654, %v537, 0.0
    %689 = vadd.xlane.f32.xlu0 %v688
    %v690 = vpop.xlane.xlu0 %689
    %v691 = vsel %vm654, %v538, 0.0
    %692 = vadd.xlane.f32.xlu0 %v691
    %v693 = vpop.xlane.xlu0 %692
    %v694 = vsel %vm654, %v539, 0.0
    %695 = vadd.xlane.f32.xlu0 %v694
    %v696 = vpop.xlane.xlu0 %695
    %v697 = vsel %vm654, %v540, 0.0
    %698 = vadd.xlane.f32.xlu0 %v697
    %v699 = vpop.xlane.xlu0 %698
    %v700 = vsel %vm654, %v541, 0.0
    %701 = vadd.xlane.f32.xlu0 %v700
    %v702 = vpop.xlane.xlu0 %701
    %v703 = vsel %vm654, %v542, 0.0
    %704 = vadd.xlane.f32.xlu0 %v703
    %v705 = vpop.xlane.xlu0 %704
    %v706 = vsel %vm654, %v543, 0.0
    %707 = vadd.xlane.f32.xlu0 %v706
    %v708 = vpop.xlane.xlu0 %707
    %v709 = vsel %vm654, %v544, 0.0
    %710 = vadd.xlane.f32.xlu0 %v709
    %v711 = vpop.xlane.xlu0 %710
    %v712 = vsel %vm654, %v545, 0.0
    %713 = vadd.xlane.f32.xlu0 %v712
    %v714 = vpop.xlane.xlu0 %713
    %v715 = vsel %vm654, %v546, 0.0
    %716 = vadd.xlane.f32.xlu0 %v715
    %v717 = vpop.xlane.xlu0 %716
    %v718 = vsel %vm654, %v547, 0.0
    %719 = vadd.xlane.f32.xlu0 %v718
    %v720 = vpop.xlane.xlu0 %719
    %v721 = vsel %vm654, %v548, 0.0
    %722 = vadd.xlane.f32.xlu0 %v721
    %v723 = vpop.xlane.xlu0 %722
    %v724 = vsel %vm654, %v549, 0.0
    %725 = vadd.xlane.f32.xlu0 %v724
    %v726 = vpop.xlane.xlu0 %725
    %v727 = vsel %vm654, %v550, 0.0
    %728 = vadd.xlane.f32.xlu0 %v727
    %v729 = vpop.xlane.xlu0 %728
    %v730 = vsel %vm654, %v551, 0.0
    %731 = vadd.xlane.f32.xlu0 %v730
    %v732 = vpop.xlane.xlu0 %731
    %v733 = vsel %vm654, %v552, 0.0
    %734 = vadd.xlane.f32.xlu0 %v733
    %v735 = vpop.xlane.xlu0 %734
    %v736 = vsel %vm654, %v553, 0.0
    %737 = vadd.xlane.f32.xlu0 %v736
    %v738 = vpop.xlane.xlu0 %737
    %v739 = vsel %vm654, %v554, 0.0
    %740 = vadd.xlane.f32.xlu0 %v739
    %v741 = vpop.xlane.xlu0 %740
    %v742 = vsel %vm654, %v555, 0.0
    %743 = vadd.xlane.f32.xlu0 %v742
    %v744 = vpop.xlane.xlu0 %743
    %v745 = vsel %vm654, %v556, 0.0
    %746 = vadd.xlane.f32.xlu0 %v745
    %v747 = vpop.xlane.xlu0 %746
    %v748 = vsel %vm654, %v557, 0.0
    %749 = vadd.xlane.f32.xlu0 %v748
    %v750 = vpop.xlane.xlu0 %749
    %v751 = vsel %vm654, %v558, 0.0
    %752 = vadd.xlane.f32.xlu0 %v751
    %v753 = vpop.xlane.xlu0 %752
    %v754 = vsel %vm654, %v559, 0.0
    %755 = vadd.xlane.f32.xlu0 %v754
    %v756 = vpop.xlane.xlu0 %755
    %v757 = vsel %vm654, %v560, 0.0
    %758 = vadd.xlane.f32.xlu0 %v757
    %v759 = vpop.xlane.xlu0 %758
    %v760 = vsel %vm654, %v561, 0.0
    %761 = vadd.xlane.f32.xlu0 %v760
    %v762 = vpop.xlane.xlu0 %761
    %v763 = vsel %vm654, %v562, 0.0
    %764 = vadd.xlane.f32.xlu0 %v763
    %v765 = vpop.xlane.xlu0 %764
    %v766 = vsel %vm654, %v563, 0.0
    %767 = vadd.xlane.f32.xlu0 %v766
    %v768 = vpop.xlane.xlu0 %767
    %v769 = vsel %vm654, %v564, 0.0
    %770 = vadd.xlane.f32.xlu0 %v769
    %v771 = vpop.xlane.xlu0 %770
    %v772 = vsel %vm654, %v565, 0.0
    %773 = vadd.xlane.f32.xlu0 %v772
    %v774 = vpop.xlane.xlu0 %773
    %v775 = vsel %vm654, %v566, 0.0
    %776 = vadd.xlane.f32.xlu0 %v775
    %v777 = vpop.xlane.xlu0 %776
    %v778 = vsel %vm654, %v567, 0.0
    %779 = vadd.xlane.f32.xlu0 %v778
    %v780 = vpop.xlane.xlu0 %779
    %v781 = vsel %vm654, %v568, 0.0
    %782 = vadd.xlane.f32.xlu0 %v781
    %v783 = vpop.xlane.xlu0 %782
    %v784 = vsel %vm654, %v569, 0.0
    %785 = vadd.xlane.f32.xlu0 %v784
    %v786 = vpop.xlane.xlu0 %785
    %v787 = vsel %vm654, %v570, 0.0
    %788 = vadd.xlane.f32.xlu0 %v787
    %v789 = vpop.xlane.xlu0 %788
    %v790 = vsel %vm654, %v571, 0.0
    %791 = vadd.xlane.f32.xlu0 %v790
    %v792 = vpop.xlane.xlu0 %791
    %v793 = vsel %vm654, %v572, 0.0
    %794 = vadd.xlane.f32.xlu0 %v793
    %v795 = vpop.xlane.xlu0 %794
    %v796 = vsel %vm654, %v573, 0.0
    %797 = vadd.xlane.f32.xlu0 %v796
    %v798 = vpop.xlane.xlu0 %797
    %v799 = vsel %vm654, %v574, 0.0
    %800 = vadd.xlane.f32.xlu0 %v799
    %v801 = vpop.xlane.xlu0 %800
    %v802 = vsel %vm654, %v575, 0.0
    %803 = vadd.xlane.f32.xlu0 %v802
    %v804 = vpop.xlane.xlu0 %803
    %v805 = vsel %vm654, %v576, 0.0
    %806 = vadd.xlane.f32.xlu0 %v805
    %v807 = vpop.xlane.xlu0 %806
    %v808 = vsel %vm654, %v577, 0.0
    %809 = vadd.xlane.f32.xlu0 %v808
    %v810 = vpop.xlane.xlu0 %809
    %v811 = vsel %vm654, %v578, 0.0
    %812 = vadd.xlane.f32.xlu0 %v811
    %v813 = vpop.xlane.xlu0 %812
    %v814 = vsel %vm654, %v579, 0.0
    %815 = vadd.xlane.f32.xlu0 %v814
    %v816 = vpop.xlane.xlu0 %815
    %v817 = vsel %vm654, %v580, 0.0
    %818 = vadd.xlane.f32.xlu0 %v817
    %v819 = vpop.xlane.xlu0 %818
    %v820 = vsel %vm654, %v581, 0.0
    %821 = vadd.xlane.f32.xlu0 %v820
    %v822 = vpop.xlane.xlu0 %821
    %v823 = vsel %vm654, %v582, 0.0
    %824 = vadd.xlane.f32.xlu0 %v823
    %v825 = vpop.xlane.xlu0 %824
    %v826 = vsel %vm654, %v583, 0.0
    %827 = vadd.xlane.f32.xlu0 %v826
    %v828 = vpop.xlane.xlu0 %827
    %v829 = vsel %vm654, %v584, 0.0
    %830 = vadd.xlane.f32.xlu0 %v829
    %v831 = vpop.xlane.xlu0 %830
    %v832 = vsel %vm654, %v585, 0.0
    %833 = vadd.xlane.f32.xlu0 %v832
    %v834 = vpop.xlane.xlu0 %833
    %v835 = vsel %vm654, %v586, 0.0
    %836 = vadd.xlane.f32.xlu0 %v835
    %v837 = vpop.xlane.xlu0 %836
    %v838 = vsel %vm654, %v587, 0.0
    %839 = vadd.xlane.f32.xlu0 %v838
    %v840 = vpop.xlane.xlu0 %839
    %v841 = vsel %vm654, %v588, 0.0
    %842 = vadd.xlane.f32.xlu0 %v841
    %v843 = vpop.xlane.xlu0 %842
    %v844 = vsel %vm654, %v589, 0.0
    %845 = vadd.xlane.f32.xlu0 %v844
    %v846 = vpop.xlane.xlu0 %845
    %v847 = vsel %vm654, %v590, 0.0
    %848 = vadd.xlane.f32.xlu0 %v847
    %v849 = vpop.xlane.xlu0 %848
    %v850 = vsel %vm654, %v591, 0.0
    %851 = vadd.xlane.f32.xlu0 %v850
    %v852 = vpop.xlane.xlu0 %851
    %v853 = vsel %vm654, %v592, 0.0
    %854 = vadd.xlane.f32.xlu0 %v853
    %v855 = vpop.xlane.xlu0 %854
    %v856 = vsel %vm654, %v593, 0.0
    %857 = vadd.xlane.f32.xlu0 %v856
    %v858 = vpop.xlane.xlu0 %857
    %v859 = vsel %vm654, %v594, 0.0
    %860 = vadd.xlane.f32.xlu0 %v859
    %v861 = vpop.xlane.xlu0 %860
    %v862 = vsel %vm654, %v595, 0.0
    %863 = vadd.xlane.f32.xlu0 %v862
    %v864 = vpop.xlane.xlu0 %863
    %v865 = vsel %vm654, %v596, 0.0
    %866 = vadd.xlane.f32.xlu0 %v865
    %v867 = vpop.xlane.xlu0 %866
    %v868 = vsel %vm654, %v597, 0.0
    %869 = vadd.xlane.f32.xlu0 %v868
    %v870 = vpop.xlane.xlu0 %869
    %v871 = vsel %vm654, %v598, 0.0
    %872 = vadd.xlane.f32.xlu0 %v871
    %v873 = vpop.xlane.xlu0 %872
    %v874 = vsel %vm654, %v599, 0.0
    %875 = vadd.xlane.f32.xlu0 %v874
    %v876 = vpop.xlane.xlu0 %875
    %v877 = vsel %vm654, %v600, 0.0
    %878 = vadd.xlane.f32.xlu0 %v877
    %v879 = vpop.xlane.xlu0 %878
    %v880 = vsel %vm654, %v601, 0.0
    %881 = vadd.xlane.f32.xlu0 %v880
    %v882 = vpop.xlane.xlu0 %881
    %v883 = vsel %vm654, %v602, 0.0
    %884 = vadd.xlane.f32.xlu0 %v883
    %v885 = vpop.xlane.xlu0 %884
    %v886 = vsel %vm654, %v603, 0.0
    %887 = vadd.xlane.f32.xlu0 %v886
    %v888 = vpop.xlane.xlu0 %887
    %v889 = vsel %vm654, %v604, 0.0
    %890 = vadd.xlane.f32.xlu0 %v889
    %v891 = vpop.xlane.xlu0 %890
    %v892 = vsel %vm654, %v605, 0.0
    %893 = vadd.xlane.f32.xlu0 %v892
    %v894 = vpop.xlane.xlu0 %893
    %v895 = vsel %vm654, %v606, 0.0
    %896 = vadd.xlane.f32.xlu0 %v895
    %v897 = vpop.xlane.xlu0 %896
    %v898 = vsel %vm654, %v607, 0.0
    %899 = vadd.xlane.f32.xlu0 %v898
    %v900 = vpop.xlane.xlu0 %899
    %v901 = vsel %vm654, %v608, 0.0
    %902 = vadd.xlane.f32.xlu0 %v901
    %v903 = vpop.xlane.xlu0 %902
    %v904 = vsel %vm654, %v609, 0.0
    %905 = vadd.xlane.f32.xlu0 %v904
    %v906 = vpop.xlane.xlu0 %905
    %v907 = vsel %vm654, %v610, 0.0
    %908 = vadd.xlane.f32.xlu0 %v907
    %v909 = vpop.xlane.xlu0 %908
    %v910 = vsel %vm654, %v611, 0.0
    %911 = vadd.xlane.f32.xlu0 %v910
    %v912 = vpop.xlane.xlu0 %911
    %v913 = vsel %vm654, %v612, 0.0
    %914 = vadd.xlane.f32.xlu0 %v913
    %v915 = vpop.xlane.xlu0 %914
    %v916 = vsel %vm654, %v613, 0.0
    %917 = vadd.xlane.f32.xlu0 %v916
    %v918 = vpop.xlane.xlu0 %917
    %v919 = vsel %vm654, %v614, 0.0
    %920 = vadd.xlane.f32.xlu0 %v919
    %v921 = vpop.xlane.xlu0 %920
    %v922 = vsel %vm654, %v615, 0.0
    %923 = vadd.xlane.f32.xlu0 %v922
    %v924 = vpop.xlane.xlu0 %923
    %v925 = vsel %vm654, %v616, 0.0
    %926 = vadd.xlane.f32.xlu0 %v925
    %v927 = vpop.xlane.xlu0 %926
    %v928 = vsel %vm654, %v617, 0.0
    %929 = vadd.xlane.f32.xlu0 %v928
    %v930 = vpop.xlane.xlu0 %929
    %v931 = vsel %vm654, %v618, 0.0
    %932 = vadd.xlane.f32.xlu0 %v931
    %v933 = vpop.xlane.xlu0 %932
    %v934 = vsel %vm654, %v619, 0.0
    %935 = vadd.xlane.f32.xlu0 %v934
    %v936 = vpop.xlane.xlu0 %935
    %v937 = vsel %vm654, %v620, 0.0
    %938 = vadd.xlane.f32.xlu0 %v937
    %v939 = vpop.xlane.xlu0 %938
    %v940 = vsel %vm654, %v621, 0.0
    %941 = vadd.xlane.f32.xlu0 %v940
    %v942 = vpop.xlane.xlu0 %941
    %v943 = vsel %vm654, %v622, 0.0
    %944 = vadd.xlane.f32.xlu0 %v943
    %v945 = vpop.xlane.xlu0 %944
    %v946 = vsel %vm654, %v623, 0.0
    %947 = vadd.xlane.f32.xlu0 %v946
    %v948 = vpop.xlane.xlu0 %947
    %v949 = vsel %vm654, %v624, 0.0
    %950 = vadd.xlane.f32.xlu0 %v949
    %v951 = vpop.xlane.xlu0 %950
    %v952 = vsel %vm654, %v625, 0.0
    %953 = vadd.xlane.f32.xlu0 %v952
    %v954 = vpop.xlane.xlu0 %953
    %v955 = vsel %vm654, %v626, 0.0
    %956 = vadd.xlane.f32.xlu0 %v955
    %v957 = vpop.xlane.xlu0 %956
    %v958 = vsel %vm654, %v627, 0.0
    %959 = vadd.xlane.f32.xlu0 %v958
    %v960 = vpop.xlane.xlu0 %959
    %v961 = vsel %vm654, %v628, 0.0
    %962 = vadd.xlane.f32.xlu0 %v961
    %v963 = vpop.xlane.xlu0 %962
    %v964 = vsel %vm654, %v629, 0.0
    %965 = vadd.xlane.f32.xlu0 %v964
    %v966 = vpop.xlane.xlu0 %965
    %v967 = vsel %vm654, %v630, 0.0
    %968 = vadd.xlane.f32.xlu0 %v967
    %v969 = vpop.xlane.xlu0 %968
    %v970 = vsel %vm654, %v631, 0.0
    %971 = vadd.xlane.f32.xlu0 %v970
    %v972 = vpop.xlane.xlu0 %971
    %v973 = vsel %vm654, %v632, 0.0
    %974 = vadd.xlane.f32.xlu0 %v973
    %v975 = vpop.xlane.xlu0 %974
    %v976 = vsel %vm654, %v633, 0.0
    %977 = vadd.xlane.f32.xlu0 %v976
    %v978 = vpop.xlane.xlu0 %977
    %v979 = vsel %vm654, %v634, 0.0
    %980 = vadd.xlane.f32.xlu0 %v979
    %v981 = vpop.xlane.xlu0 %980
    %v982 = vsel %vm654, %v635, 0.0
    %983 = vadd.xlane.f32.xlu0 %v982
    %v984 = vpop.xlane.xlu0 %983
    %v985 = vsel %vm654, %v636, 0.0
    %986 = vadd.xlane.f32.xlu0 %v985
    %v987 = vpop.xlane.xlu0 %986
    %v988 = vsel %vm654, %v637, 0.0
    %989 = vadd.xlane.f32.xlu0 %v988
    %v990 = vpop.xlane.xlu0 %989
    %v991 = vsel %vm654, %v638, 0.0
    %992 = vadd.xlane.f32.xlu0 %v991
    %v993 = vpop.xlane.xlu0 %992
    %v994 = vsel %vm654, %v639, 0.0
    %995 = vadd.xlane.f32.xlu0 %v994
    %v996 = vpop.xlane.xlu0 %995
    %v997 = vsel %vm654, %v640, 0.0
    %998 = vadd.xlane.f32.xlu0 %v997
    %v999 = vpop.xlane.xlu0 %998
    %v1000 = vsel %vm654, %v641, 0.0
    %1001 = vadd.xlane.f32.xlu0 %v1000
    %v1002 = vpop.xlane.xlu0 %1001
    %v1003 = vsel %vm654, %v642, 0.0
    %1004 = vadd.xlane.f32.xlu0 %v1003
    %v1005 = vpop.xlane.xlu0 %1004
    %v1006 = vsel %vm654, %v643, 0.0
    %1007 = vadd.xlane.f32.xlu0 %v1006
    %v1008 = vpop.xlane.xlu0 %1007
    %v1009 = vsel %vm654, %v644, 0.0
    %1010 = vadd.xlane.f32.xlu0 %v1009
    %v1011 = vpop.xlane.xlu0 %1010
    %v1012 = vsel %vm654, %v645, 0.0
    %1013 = vadd.xlane.f32.xlu0 %v1012
    %v1014 = vpop.xlane.xlu0 %1013
    %v1015 = vsel %vm654, %v646, 0.0
    %1016 = vadd.xlane.f32.xlu0 %v1015
    %v1017 = vpop.xlane.xlu0 %1016
    %v1018 = vsel %vm654, %v647, 0.0
    %1019 = vadd.xlane.f32.xlu0 %v1018
    %v1020 = vpop.xlane.xlu0 %1019
    %v1021 = vsel %vm654, %v648, 0.0
    %1022 = vadd.xlane.f32.xlu0 %v1021
    %v1023 = vpop.xlane.xlu0 %1022
    %v1024 = vsel %vm654, %v649, 0.0
    %1025 = vadd.xlane.f32.xlu0 %v1024
    %v1026 = vpop.xlane.xlu0 %1025
    %v1027 = vsel %vm654, %v650, 0.0
    %1028 = vadd.xlane.f32.xlu0 %v1027
    %v1029 = vpop.xlane.xlu0 %1028
    %v1030 = vsel %vm654, %v651, 0.0
    %1031 = vadd.xlane.f32.xlu0 %v1030
    %v1032 = vpop.xlane.xlu0 %1031
    %v1033 = vsel %vm654, %v652, 0.0
    %1034 = vadd.xlane.f32.xlu0 %v1033
    %v1035 = vpop.xlane.xlu0 %1034
    %v1036 = vsel %vm654, %v653, 0.0
    %1037 = vadd.xlane.f32.xlu0 %v1036
    %v1038 = vpop.xlane.xlu0 %1037
    %v1039 = vld [vmem:[%s2] sm:$0xff]
    %v1040 = vld [vmem:[%s2 + $0x8] sm:$0xff]
    %v1041 = vld [vmem:[%s2 + $0x10] sm:$0xff]
    %v1042 = vld [vmem:[%s2 + $0x18] sm:$0xff]
    %v1043 = vrcp.pop %v1039
    %v1044 = vrcp.pop %v1040
    %v1045 = vrcp.pop %v1041
    %v1046 = vrcp.pop %v1042
    %1048 = vset.pattern.permute.xlu0 0
    %1049 = vperm.xlu0 %1048, %v1043
    %v1050 = vpop.permute.xlu0 %1049
    %1052 = vset.pattern.permute.xlu0 0
    %1053 = vperm.xlu0 %1052, %v1044
    %v1054 = vpop.permute.xlu0 %1053
    %1056 = vset.pattern.permute.xlu0 0
    %1057 = vperm.xlu0 %1056, %v1045
    %v1058 = vpop.permute.xlu0 %1057
    %1060 = vset.pattern.permute.xlu0 0
    %1061 = vperm.xlu0 %1060, %v1046
    %v1062 = vpop.permute.xlu0 %1061
    %v1063 = vlaneseq
    %v1064 = vshrl.u32 %v1063, 7
    %v1065 = vsub.s32 0, %v1064
    %v1066 = vrot.slane %v1050, %v1065
    %v1067 = vlaneseq
    %v1068 = vshrl.u32 %v1067, 7
    %v1069 = vsub.s32 1, %v1068
    %v1070 = vrot.slane %v1050, %v1069
    %v1071 = vlaneseq
    %v1072 = vshrl.u32 %v1071, 7
    %v1073 = vsub.s32 2, %v1072
    %v1074 = vrot.slane %v1050, %v1073
    %v1075 = vlaneseq
    %v1076 = vshrl.u32 %v1075, 7
    %v1077 = vsub.s32 3, %v1076
    %v1078 = vrot.slane %v1050, %v1077
    %v1079 = vlaneseq
    %v1080 = vshrl.u32 %v1079, 7
    %v1081 = vsub.s32 4, %v1080
    %v1082 = vrot.slane %v1050, %v1081
    %v1083 = vlaneseq
    %v1084 = vshrl.u32 %v1083, 7
    %v1085 = vsub.s32 5, %v1084
    %v1086 = vrot.slane %v1050, %v1085
    %v1087 = vlaneseq
    %v1088 = vshrl.u32 %v1087, 7
    %v1089 = vsub.s32 6, %v1088
    %v1090 = vrot.slane %v1050, %v1089
    %v1091 = vlaneseq
    %v1092 = vshrl.u32 %v1091, 7
    %v1093 = vsub.s32 7, %v1092
    %v1094 = vrot.slane %v1050, %v1093
    %v1095 = vlaneseq
    %v1096 = vshrl.u32 %v1095, 7
    %v1097 = vsub.s32 0, %v1096
    %v1098 = vrot.slane %v1054, %v1097
    %v1099 = vlaneseq
    %v1100 = vshrl.u32 %v1099, 7
    %v1101 = vsub.s32 1, %v1100
    %v1102 = vrot.slane %v1054, %v1101
    %v1103 = vlaneseq
    %v1104 = vshrl.u32 %v1103, 7
    %v1105 = vsub.s32 2, %v1104
    %v1106 = vrot.slane %v1054, %v1105
    %v1107 = vlaneseq
    %v1108 = vshrl.u32 %v1107, 7
    %v1109 = vsub.s32 3, %v1108
    %v1110 = vrot.slane %v1054, %v1109
    %v1111 = vlaneseq
    %v1112 = vshrl.u32 %v1111, 7
    %v1113 = vsub.s32 4, %v1112
    %v1114 = vrot.slane %v1054, %v1113
    %v1115 = vlaneseq
    %v1116 = vshrl.u32 %v1115, 7
    %v1117 = vsub.s32 5, %v1116
    %v1118 = vrot.slane %v1054, %v1117
    %v1119 = vlaneseq
    %v1120 = vshrl.u32 %v1119, 7
    %v1121 = vsub.s32 6, %v1120
    %v1122 = vrot.slane %v1054, %v1121
    %v1123 = vlaneseq
    %v1124 = vshrl.u32 %v1123, 7
    %v1125 = vsub.s32 7, %v1124
    %v1126 = vrot.slane %v1054, %v1125
    %v1127 = vlaneseq
    %v1128 = vshrl.u32 %v1127, 7
    %v1129 = vsub.s32 0, %v1128
    %v1130 = vrot.slane %v1058, %v1129
    %v1131 = vlaneseq
    %v1132 = vshrl.u32 %v1131, 7
    %v1133 = vsub.s32 1, %v1132
    %v1134 = vrot.slane %v1058, %v1133
    %v1135 = vlaneseq
    %v1136 = vshrl.u32 %v1135, 7
    %v1137 = vsub.s32 2, %v1136
    %v1138 = vrot.slane %v1058, %v1137
    %v1139 = vlaneseq
    %v1140 = vshrl.u32 %v1139, 7
    %v1141 = vsub.s32 3, %v1140
    %v1142 = vrot.slane %v1058, %v1141
    %v1143 = vlaneseq
    %v1144 = vshrl.u32 %v1143, 7
    %v1145 = vsub.s32 4, %v1144
    %v1146 = vrot.slane %v1058, %v1145
    %v1147 = vlaneseq
    %v1148 = vshrl.u32 %v1147, 7
    %v1149 = vsub.s32 5, %v1148
    %v1150 = vrot.slane %v1058, %v1149
    %v1151 = vlaneseq
    %v1152 = vshrl.u32 %v1151, 7
    %v1153 = vsub.s32 6, %v1152
    %v1154 = vrot.slane %v1058, %v1153
    %v1155 = vlaneseq
    %v1156 = vshrl.u32 %v1155, 7
    %v1157 = vsub.s32 7, %v1156
    %v1158 = vrot.slane %v1058, %v1157
    %v1159 = vlaneseq
    %v1160 = vshrl.u32 %v1159, 7
    %v1161 = vsub.s32 0, %v1160
    %v1162 = vrot.slane %v1062, %v1161
    %v1163 = vlaneseq
    %v1164 = vshrl.u32 %v1163, 7
    %v1165 = vsub.s32 1, %v1164
    %v1166 = vrot.slane %v1062, %v1165
    %v1167 = vlaneseq
    %v1168 = vshrl.u32 %v1167, 7
    %v1169 = vsub.s32 2, %v1168
    %v1170 = vrot.slane %v1062, %v1169
    %v1171 = vlaneseq
    %v1172 = vshrl.u32 %v1171, 7
    %v1173 = vsub.s32 3, %v1172
    %v1174 = vrot.slane %v1062, %v1173
    %v1175 = vlaneseq
    %v1176 = vshrl.u32 %v1175, 7
    %v1177 = vsub.s32 4, %v1176
    %v1178 = vrot.slane %v1062, %v1177
    %v1179 = vlaneseq
    %v1180 = vshrl.u32 %v1179, 7
    %v1181 = vsub.s32 5, %v1180
    %v1182 = vrot.slane %v1062, %v1181
    %v1183 = vlaneseq
    %v1184 = vshrl.u32 %v1183, 7
    %v1185 = vsub.s32 6, %v1184
    %v1186 = vrot.slane %v1062, %v1185
    %v1187 = vlaneseq
    %v1188 = vshrl.u32 %v1187, 7
    %v1189 = vsub.s32 7, %v1188
    %v1190 = vrot.slane %v1062, %v1189
    %v1223 = vmul.f32 %v657, %v1066
    %v1224 = vmul.f32 %v660, %v1066
    %v1225 = vmul.f32 %v663, %v1066
    %v1226 = vmul.f32 %v666, %v1066
    %v1227 = vmul.f32 %v669, %v1070
    %v1228 = vmul.f32 %v672, %v1070
    %v1229 = vmul.f32 %v675, %v1070
    %v1230 = vmul.f32 %v678, %v1070
    %v1231 = vmul.f32 %v681, %v1074
    %v1232 = vmul.f32 %v684, %v1074
    %v1233 = vmul.f32 %v687, %v1074
    %v1234 = vmul.f32 %v690, %v1074
    %v1235 = vmul.f32 %v693, %v1078
    %v1236 = vmul.f32 %v696, %v1078
    %v1237 = vmul.f32 %v699, %v1078
    %v1238 = vmul.f32 %v702, %v1078
    %v1239 = vmul.f32 %v705, %v1082
    %v1240 = vmul.f32 %v708, %v1082
    %v1241 = vmul.f32 %v711, %v1082
    %v1242 = vmul.f32 %v714, %v1082
    %v1243 = vmul.f32 %v717, %v1086
    %v1244 = vmul.f32 %v720, %v1086
    %v1245 = vmul.f32 %v723, %v1086
    %v1246 = vmul.f32 %v726, %v1086
    %v1247 = vmul.f32 %v729, %v1090
    %v1248 = vmul.f32 %v732, %v1090
    %v1249 = vmul.f32 %v735, %v1090
    %v1250 = vmul.f32 %v738, %v1090
    %v1251 = vmul.f32 %v741, %v1094
    %v1252 = vmul.f32 %v744, %v1094
    %v1253 = vmul.f32 %v747, %v1094
    %v1254 = vmul.f32 %v750, %v1094
    %v1255 = vmul.f32 %v753, %v1098
    %v1256 = vmul.f32 %v756, %v1098
    %v1257 = vmul.f32 %v759, %v1098
    %v1258 = vmul.f32 %v762, %v1098
    %v1259 = vmul.f32 %v765, %v1102
    %v1260 = vmul.f32 %v768, %v1102
    %v1261 = vmul.f32 %v771, %v1102
    %v1262 = vmul.f32 %v774, %v1102
    %v1263 = vmul.f32 %v777, %v1106
    %v1264 = vmul.f32 %v780, %v1106
    %v1265 = vmul.f32 %v783, %v1106
    %v1266 = vmul.f32 %v786, %v1106
    %v1267 = vmul.f32 %v789, %v1110
    %v1268 = vmul.f32 %v792, %v1110
    %v1269 = vmul.f32 %v795, %v1110
    %v1270 = vmul.f32 %v798, %v1110
    %v1271 = vmul.f32 %v801, %v1114
    %v1272 = vmul.f32 %v804, %v1114
    %v1273 = vmul.f32 %v807, %v1114
    %v1274 = vmul.f32 %v810, %v1114
    %v1275 = vmul.f32 %v813, %v1118
    %v1276 = vmul.f32 %v816, %v1118
    %v1277 = vmul.f32 %v819, %v1118
    %v1278 = vmul.f32 %v822, %v1118
    %v1279 = vmul.f32 %v825, %v1122
    %v1280 = vmul.f32 %v828, %v1122
    %v1281 = vmul.f32 %v831, %v1122
    %v1282 = vmul.f32 %v834, %v1122
    %v1283 = vmul.f32 %v837, %v1126
    %v1284 = vmul.f32 %v840, %v1126
    %v1285 = vmul.f32 %v843, %v1126
    %v1286 = vmul.f32 %v846, %v1126
    %v1287 = vmul.f32 %v849, %v1130
    %v1288 = vmul.f32 %v852, %v1130
    %v1289 = vmul.f32 %v855, %v1130
    %v1290 = vmul.f32 %v858, %v1130
    %v1291 = vmul.f32 %v861, %v1134
    %v1292 = vmul.f32 %v864, %v1134
    %v1293 = vmul.f32 %v867, %v1134
    %v1294 = vmul.f32 %v870, %v1134
    %v1295 = vmul.f32 %v873, %v1138
    %v1296 = vmul.f32 %v876, %v1138
    %v1297 = vmul.f32 %v879, %v1138
    %v1298 = vmul.f32 %v882, %v1138
    %v1299 = vmul.f32 %v885, %v1142
    %v1300 = vmul.f32 %v888, %v1142
    %v1301 = vmul.f32 %v891, %v1142
    %v1302 = vmul.f32 %v894, %v1142
    %v1303 = vmul.f32 %v897, %v1146
    %v1304 = vmul.f32 %v900, %v1146
    %v1305 = vmul.f32 %v903, %v1146
    %v1306 = vmul.f32 %v906, %v1146
    %v1307 = vmul.f32 %v909, %v1150
    %v1308 = vmul.f32 %v912, %v1150
    %v1309 = vmul.f32 %v915, %v1150
    %v1310 = vmul.f32 %v918, %v1150
    %v1311 = vmul.f32 %v921, %v1154
    %v1312 = vmul.f32 %v924, %v1154
    %v1313 = vmul.f32 %v927, %v1154
    %v1314 = vmul.f32 %v930, %v1154
    %v1315 = vmul.f32 %v933, %v1158
    %v1316 = vmul.f32 %v936, %v1158
    %v1317 = vmul.f32 %v939, %v1158
    %v1318 = vmul.f32 %v942, %v1158
    %v1319 = vmul.f32 %v945, %v1162
    %v1320 = vmul.f32 %v948, %v1162
    %v1321 = vmul.f32 %v951, %v1162
    %v1322 = vmul.f32 %v954, %v1162
    %v1323 = vmul.f32 %v957, %v1166
    %v1324 = vmul.f32 %v960, %v1166
    %v1325 = vmul.f32 %v963, %v1166
    %v1326 = vmul.f32 %v966, %v1166
    %v1327 = vmul.f32 %v969, %v1170
    %v1328 = vmul.f32 %v972, %v1170
    %v1329 = vmul.f32 %v975, %v1170
    %v1330 = vmul.f32 %v978, %v1170
    %v1331 = vmul.f32 %v981, %v1174
    %v1332 = vmul.f32 %v984, %v1174
    %v1333 = vmul.f32 %v987, %v1174
    %v1334 = vmul.f32 %v990, %v1174
    %v1335 = vmul.f32 %v993, %v1178
    %v1336 = vmul.f32 %v996, %v1178
    %v1337 = vmul.f32 %v999, %v1178
    %v1338 = vmul.f32 %v1002, %v1178
    %v1339 = vmul.f32 %v1005, %v1182
    %v1340 = vmul.f32 %v1008, %v1182
    %v1341 = vmul.f32 %v1011, %v1182
    %v1342 = vmul.f32 %v1014, %v1182
    %v1343 = vmul.f32 %v1017, %v1186
    %v1344 = vmul.f32 %v1020, %v1186
    %v1345 = vmul.f32 %v1023, %v1186
    %v1346 = vmul.f32 %v1026, %v1186
    %v1347 = vmul.f32 %v1029, %v1190
    %v1348 = vmul.f32 %v1032, %v1190
    %v1349 = vmul.f32 %v1035, %v1190
    %v1350 = vmul.f32 %v1038, %v1190
    %v1351 = vld [vmem:[%s3] sm:$0xff]
    %v1352 = vld [vmem:[%s3 + $0x8] sm:$0xff]
    %v1353 = vld [vmem:[%s3 + $0x10] sm:$0xff]
    %v1354 = vld [vmem:[%s3 + $0x18] sm:$0xff]
    %v1355 = vld [vmem:[%s4] sm:$0xff]
    %v1356 = vld [vmem:[%s4 + $0x8] sm:$0xff]
    %v1357 = vld [vmem:[%s4 + $0x10] sm:$0xff]
    %v1358 = vld [vmem:[%s4 + $0x18] sm:$0xff]
    %v1359 = vlaneseq
    %v1360 = vshrl.u32 %v1359, 7
    %v1361 = vsub.s32 0, %v1360
    %v1362 = vrot.slane %v33, %v1361
    %1491 = vset.pattern.permute.xlu0 0
    %1492 = vperm.xlu0 %1491, %v1223
    %v1493 = vpop.permute.xlu0 %1492
    %1494 = vset.pattern.permute.xlu0 0
    %1495 = vperm.xlu0 %1494, %v1224
    %v1496 = vpop.permute.xlu0 %1495
    %1497 = vset.pattern.permute.xlu0 0
    %1498 = vperm.xlu0 %1497, %v1225
    %v1499 = vpop.permute.xlu0 %1498
    %1500 = vset.pattern.permute.xlu0 0
    %1501 = vperm.xlu0 %1500, %v1226
    %v1502 = vpop.permute.xlu0 %1501
    %1503 = vset.pattern.permute.xlu0 0
    %1504 = vperm.xlu0 %1503, %v1227
    %v1505 = vpop.permute.xlu0 %1504
    %1506 = vset.pattern.permute.xlu0 0
    %1507 = vperm.xlu0 %1506, %v1228
    %v1508 = vpop.permute.xlu0 %1507
    %1509 = vset.pattern.permute.xlu0 0
    %1510 = vperm.xlu0 %1509, %v1229
    %v1511 = vpop.permute.xlu0 %1510
    %1512 = vset.pattern.permute.xlu0 0
    %1513 = vperm.xlu0 %1512, %v1230
    %v1514 = vpop.permute.xlu0 %1513
    %1515 = vset.pattern.permute.xlu0 0
    %1516 = vperm.xlu0 %1515, %v1231
    %v1517 = vpop.permute.xlu0 %1516
    %1518 = vset.pattern.permute.xlu0 0
    %1519 = vperm.xlu0 %1518, %v1232
    %v1520 = vpop.permute.xlu0 %1519
    %1521 = vset.pattern.permute.xlu0 0
    %1522 = vperm.xlu0 %1521, %v1233
    %v1523 = vpop.permute.xlu0 %1522
    %1524 = vset.pattern.permute.xlu0 0
    %1525 = vperm.xlu0 %1524, %v1234
    %v1526 = vpop.permute.xlu0 %1525
    %1527 = vset.pattern.permute.xlu0 0
    %1528 = vperm.xlu0 %1527, %v1235
    %v1529 = vpop.permute.xlu0 %1528
    %1530 = vset.pattern.permute.xlu0 0
    %1531 = vperm.xlu0 %1530, %v1236
    %v1532 = vpop.permute.xlu0 %1531
    %1533 = vset.pattern.permute.xlu0 0
    %1534 = vperm.xlu0 %1533, %v1237
    %v1535 = vpop.permute.xlu0 %1534
    %1536 = vset.pattern.permute.xlu0 0
    %1537 = vperm.xlu0 %1536, %v1238
    %v1538 = vpop.permute.xlu0 %1537
    %1539 = vset.pattern.permute.xlu0 0
    %1540 = vperm.xlu0 %1539, %v1239
    %v1541 = vpop.permute.xlu0 %1540
    %1542 = vset.pattern.permute.xlu0 0
    %1543 = vperm.xlu0 %1542, %v1240
    %v1544 = vpop.permute.xlu0 %1543
    %1545 = vset.pattern.permute.xlu0 0
    %1546 = vperm.xlu0 %1545, %v1241
    %v1547 = vpop.permute.xlu0 %1546
    %1548 = vset.pattern.permute.xlu0 0
    %1549 = vperm.xlu0 %1548, %v1242
    %v1550 = vpop.permute.xlu0 %1549
    %1551 = vset.pattern.permute.xlu0 0
    %1552 = vperm.xlu0 %1551, %v1243
    %v1553 = vpop.permute.xlu0 %1552
    %1554 = vset.pattern.permute.xlu0 0
    %1555 = vperm.xlu0 %1554, %v1244
    %v1556 = vpop.permute.xlu0 %1555
    %1557 = vset.pattern.permute.xlu0 0
    %1558 = vperm.xlu0 %1557, %v1245
    %v1559 = vpop.permute.xlu0 %1558
    %1560 = vset.pattern.permute.xlu0 0
    %1561 = vperm.xlu0 %1560, %v1246
    %v1562 = vpop.permute.xlu0 %1561
    %1563 = vset.pattern.permute.xlu0 0
    %1564 = vperm.xlu0 %1563, %v1247
    %v1565 = vpop.permute.xlu0 %1564
    %1566 = vset.pattern.permute.xlu0 0
    %1567 = vperm.xlu0 %1566, %v1248
    %v1568 = vpop.permute.xlu0 %1567
    %1569 = vset.pattern.permute.xlu0 0
    %1570 = vperm.xlu0 %1569, %v1249
    %v1571 = vpop.permute.xlu0 %1570
    %1572 = vset.pattern.permute.xlu0 0
    %1573 = vperm.xlu0 %1572, %v1250
    %v1574 = vpop.permute.xlu0 %1573
    %1575 = vset.pattern.permute.xlu0 0
    %1576 = vperm.xlu0 %1575, %v1251
    %v1577 = vpop.permute.xlu0 %1576
    %1578 = vset.pattern.permute.xlu0 0
    %1579 = vperm.xlu0 %1578, %v1252
    %v1580 = vpop.permute.xlu0 %1579
    %1581 = vset.pattern.permute.xlu0 0
    %1582 = vperm.xlu0 %1581, %v1253
    %v1583 = vpop.permute.xlu0 %1582
    %1584 = vset.pattern.permute.xlu0 0
    %1585 = vperm.xlu0 %1584, %v1254
    %v1586 = vpop.permute.xlu0 %1585
    %1587 = vset.pattern.permute.xlu0 0
    %1588 = vperm.xlu0 %1587, %v1255
    %v1589 = vpop.permute.xlu0 %1588
    %1590 = vset.pattern.permute.xlu0 0
    %1591 = vperm.xlu0 %1590, %v1256
    %v1592 = vpop.permute.xlu0 %1591
    %1593 = vset.pattern.permute.xlu0 0
    %1594 = vperm.xlu0 %1593, %v1257
    %v1595 = vpop.permute.xlu0 %1594
    %1596 = vset.pattern.permute.xlu0 0
    %1597 = vperm.xlu0 %1596, %v1258
    %v1598 = vpop.permute.xlu0 %1597
    %1599 = vset.pattern.permute.xlu0 0
    %1600 = vperm.xlu0 %1599, %v1259
    %v1601 = vpop.permute.xlu0 %1600
    %1602 = vset.pattern.permute.xlu0 0
    %1603 = vperm.xlu0 %1602, %v1260
    %v1604 = vpop.permute.xlu0 %1603
    %1605 = vset.pattern.permute.xlu0 0
    %1606 = vperm.xlu0 %1605, %v1261
    %v1607 = vpop.permute.xlu0 %1606
    %1608 = vset.pattern.permute.xlu0 0
    %1609 = vperm.xlu0 %1608, %v1262
    %v1610 = vpop.permute.xlu0 %1609
    %1611 = vset.pattern.permute.xlu0 0
    %1612 = vperm.xlu0 %1611, %v1263
    %v1613 = vpop.permute.xlu0 %1612
    %1614 = vset.pattern.permute.xlu0 0
    %1615 = vperm.xlu0 %1614, %v1264
    %v1616 = vpop.permute.xlu0 %1615
    %1617 = vset.pattern.permute.xlu0 0
    %1618 = vperm.xlu0 %1617, %v1265
    %v1619 = vpop.permute.xlu0 %1618
    %1620 = vset.pattern.permute.xlu0 0
    %1621 = vperm.xlu0 %1620, %v1266
    %v1622 = vpop.permute.xlu0 %1621
    %1623 = vset.pattern.permute.xlu0 0
    %1624 = vperm.xlu0 %1623, %v1267
    %v1625 = vpop.permute.xlu0 %1624
    %1626 = vset.pattern.permute.xlu0 0
    %1627 = vperm.xlu0 %1626, %v1268
    %v1628 = vpop.permute.xlu0 %1627
    %1629 = vset.pattern.permute.xlu0 0
    %1630 = vperm.xlu0 %1629, %v1269
    %v1631 = vpop.permute.xlu0 %1630
    %1632 = vset.pattern.permute.xlu0 0
    %1633 = vperm.xlu0 %1632, %v1270
    %v1634 = vpop.permute.xlu0 %1633
    %1635 = vset.pattern.permute.xlu0 0
    %1636 = vperm.xlu0 %1635, %v1271
    %v1637 = vpop.permute.xlu0 %1636
    %1638 = vset.pattern.permute.xlu0 0
    %1639 = vperm.xlu0 %1638, %v1272
    %v1640 = vpop.permute.xlu0 %1639
    %1641 = vset.pattern.permute.xlu0 0
    %1642 = vperm.xlu0 %1641, %v1273
    %v1643 = vpop.permute.xlu0 %1642
    %1644 = vset.pattern.permute.xlu0 0
    %1645 = vperm.xlu0 %1644, %v1274
    %v1646 = vpop.permute.xlu0 %1645
    %1647 = vset.pattern.permute.xlu0 0
    %1648 = vperm.xlu0 %1647, %v1275
    %v1649 = vpop.permute.xlu0 %1648
    %1650 = vset.pattern.permute.xlu0 0
    %1651 = vperm.xlu0 %1650, %v1276
    %v1652 = vpop.permute.xlu0 %1651
    %1653 = vset.pattern.permute.xlu0 0
    %1654 = vperm.xlu0 %1653, %v1277
    %v1655 = vpop.permute.xlu0 %1654
    %1656 = vset.pattern.permute.xlu0 0
    %1657 = vperm.xlu0 %1656, %v1278
    %v1658 = vpop.permute.xlu0 %1657
    %1659 = vset.pattern.permute.xlu0 0
    %1660 = vperm.xlu0 %1659, %v1279
    %v1661 = vpop.permute.xlu0 %1660
    %1662 = vset.pattern.permute.xlu0 0
    %1663 = vperm.xlu0 %1662, %v1280
    %v1664 = vpop.permute.xlu0 %1663
    %1665 = vset.pattern.permute.xlu0 0
    %1666 = vperm.xlu0 %1665, %v1281
    %v1667 = vpop.permute.xlu0 %1666
    %1668 = vset.pattern.permute.xlu0 0
    %1669 = vperm.xlu0 %1668, %v1282
    %v1670 = vpop.permute.xlu0 %1669
    %1671 = vset.pattern.permute.xlu0 0
    %1672 = vperm.xlu0 %1671, %v1283
    %v1673 = vpop.permute.xlu0 %1672
    %1674 = vset.pattern.permute.xlu0 0
    %1675 = vperm.xlu0 %1674, %v1284
    %v1676 = vpop.permute.xlu0 %1675
    %1677 = vset.pattern.permute.xlu0 0
    %1678 = vperm.xlu0 %1677, %v1285
    %v1679 = vpop.permute.xlu0 %1678
    %1680 = vset.pattern.permute.xlu0 0
    %1681 = vperm.xlu0 %1680, %v1286
    %v1682 = vpop.permute.xlu0 %1681
    %1683 = vset.pattern.permute.xlu0 0
    %1684 = vperm.xlu0 %1683, %v1287
    %v1685 = vpop.permute.xlu0 %1684
    %1686 = vset.pattern.permute.xlu0 0
    %1687 = vperm.xlu0 %1686, %v1288
    %v1688 = vpop.permute.xlu0 %1687
    %1689 = vset.pattern.permute.xlu0 0
    %1690 = vperm.xlu0 %1689, %v1289
    %v1691 = vpop.permute.xlu0 %1690
    %1692 = vset.pattern.permute.xlu0 0
    %1693 = vperm.xlu0 %1692, %v1290
    %v1694 = vpop.permute.xlu0 %1693
    %1695 = vset.pattern.permute.xlu0 0
    %1696 = vperm.xlu0 %1695, %v1291
    %v1697 = vpop.permute.xlu0 %1696
    %1698 = vset.pattern.permute.xlu0 0
    %1699 = vperm.xlu0 %1698, %v1292
    %v1700 = vpop.permute.xlu0 %1699
    %1701 = vset.pattern.permute.xlu0 0
    %1702 = vperm.xlu0 %1701, %v1293
    %v1703 = vpop.permute.xlu0 %1702
    %1704 = vset.pattern.permute.xlu0 0
    %1705 = vperm.xlu0 %1704, %v1294
    %v1706 = vpop.permute.xlu0 %1705
    %1707 = vset.pattern.permute.xlu0 0
    %1708 = vperm.xlu0 %1707, %v1295
    %v1709 = vpop.permute.xlu0 %1708
    %1710 = vset.pattern.permute.xlu0 0
    %1711 = vperm.xlu0 %1710, %v1296
    %v1712 = vpop.permute.xlu0 %1711
    %1713 = vset.pattern.permute.xlu0 0
    %1714 = vperm.xlu0 %1713, %v1297
    %v1715 = vpop.permute.xlu0 %1714
    %1716 = vset.pattern.permute.xlu0 0
    %1717 = vperm.xlu0 %1716, %v1298
    %v1718 = vpop.permute.xlu0 %1717
    %1719 = vset.pattern.permute.xlu0 0
    %1720 = vperm.xlu0 %1719, %v1299
    %v1721 = vpop.permute.xlu0 %1720
    %1722 = vset.pattern.permute.xlu0 0
    %1723 = vperm.xlu0 %1722, %v1300
    %v1724 = vpop.permute.xlu0 %1723
    %1725 = vset.pattern.permute.xlu0 0
    %1726 = vperm.xlu0 %1725, %v1301
    %v1727 = vpop.permute.xlu0 %1726
    %1728 = vset.pattern.permute.xlu0 0
    %1729 = vperm.xlu0 %1728, %v1302
    %v1730 = vpop.permute.xlu0 %1729
    %1731 = vset.pattern.permute.xlu0 0
    %1732 = vperm.xlu0 %1731, %v1303
    %v1733 = vpop.permute.xlu0 %1732
    %1734 = vset.pattern.permute.xlu0 0
    %1735 = vperm.xlu0 %1734, %v1304
    %v1736 = vpop.permute.xlu0 %1735
    %1737 = vset.pattern.permute.xlu0 0
    %1738 = vperm.xlu0 %1737, %v1305
    %v1739 = vpop.permute.xlu0 %1738
    %1740 = vset.pattern.permute.xlu0 0
    %1741 = vperm.xlu0 %1740, %v1306
    %v1742 = vpop.permute.xlu0 %1741
    %1743 = vset.pattern.permute.xlu0 0
    %1744 = vperm.xlu0 %1743, %v1307
    %v1745 = vpop.permute.xlu0 %1744
    %1746 = vset.pattern.permute.xlu0 0
    %1747 = vperm.xlu0 %1746, %v1308
    %v1748 = vpop.permute.xlu0 %1747
    %1749 = vset.pattern.permute.xlu0 0
    %1750 = vperm.xlu0 %1749, %v1309
    %v1751 = vpop.permute.xlu0 %1750
    %1752 = vset.pattern.permute.xlu0 0
    %1753 = vperm.xlu0 %1752, %v1310
    %v1754 = vpop.permute.xlu0 %1753
    %1755 = vset.pattern.permute.xlu0 0
    %1756 = vperm.xlu0 %1755, %v1311
    %v1757 = vpop.permute.xlu0 %1756
    %1758 = vset.pattern.permute.xlu0 0
    %1759 = vperm.xlu0 %1758, %v1312
    %v1760 = vpop.permute.xlu0 %1759
    %1761 = vset.pattern.permute.xlu0 0
    %1762 = vperm.xlu0 %1761, %v1313
    %v1763 = vpop.permute.xlu0 %1762
    %1764 = vset.pattern.permute.xlu0 0
    %1765 = vperm.xlu0 %1764, %v1314
    %v1766 = vpop.permute.xlu0 %1765
    %1767 = vset.pattern.permute.xlu0 0
    %1768 = vperm.xlu0 %1767, %v1315
    %v1769 = vpop.permute.xlu0 %1768
    %1770 = vset.pattern.permute.xlu0 0
    %1771 = vperm.xlu0 %1770, %v1316
    %v1772 = vpop.permute.xlu0 %1771
    %1773 = vset.pattern.permute.xlu0 0
    %1774 = vperm.xlu0 %1773, %v1317
    %v1775 = vpop.permute.xlu0 %1774
    %1776 = vset.pattern.permute.xlu0 0
    %1777 = vperm.xlu0 %1776, %v1318
    %v1778 = vpop.permute.xlu0 %1777
    %1779 = vset.pattern.permute.xlu0 0
    %1780 = vperm.xlu0 %1779, %v1319
    %v1781 = vpop.permute.xlu0 %1780
    %1782 = vset.pattern.permute.xlu0 0
    %1783 = vperm.xlu0 %1782, %v1320
    %v1784 = vpop.permute.xlu0 %1783
    %1785 = vset.pattern.permute.xlu0 0
    %1786 = vperm.xlu0 %1785, %v1321
    %v1787 = vpop.permute.xlu0 %1786
    %1788 = vset.pattern.permute.xlu0 0
    %1789 = vperm.xlu0 %1788, %v1322
    %v1790 = vpop.permute.xlu0 %1789
    %1791 = vset.pattern.permute.xlu0 0
    %1792 = vperm.xlu0 %1791, %v1323
    %v1793 = vpop.permute.xlu0 %1792
    %1794 = vset.pattern.permute.xlu0 0
    %1795 = vperm.xlu0 %1794, %v1324
    %v1796 = vpop.permute.xlu0 %1795
    %1797 = vset.pattern.permute.xlu0 0
    %1798 = vperm.xlu0 %1797, %v1325
    %v1799 = vpop.permute.xlu0 %1798
    %1800 = vset.pattern.permute.xlu0 0
    %1801 = vperm.xlu0 %1800, %v1326
    %v1802 = vpop.permute.xlu0 %1801
    %1803 = vset.pattern.permute.xlu0 0
    %1804 = vperm.xlu0 %1803, %v1327
    %v1805 = vpop.permute.xlu0 %1804
    %1806 = vset.pattern.permute.xlu0 0
    %1807 = vperm.xlu0 %1806, %v1328
    %v1808 = vpop.permute.xlu0 %1807
    %1809 = vset.pattern.permute.xlu0 0
    %1810 = vperm.xlu0 %1809, %v1329
    %v1811 = vpop.permute.xlu0 %1810
    %1812 = vset.pattern.permute.xlu0 0
    %1813 = vperm.xlu0 %1812, %v1330
    %v1814 = vpop.permute.xlu0 %1813
    %1815 = vset.pattern.permute.xlu0 0
    %1816 = vperm.xlu0 %1815, %v1331
    %v1817 = vpop.permute.xlu0 %1816
    %1818 = vset.pattern.permute.xlu0 0
    %1819 = vperm.xlu0 %1818, %v1332
    %v1820 = vpop.permute.xlu0 %1819
    %1821 = vset.pattern.permute.xlu0 0
    %1822 = vperm.xlu0 %1821, %v1333
    %v1823 = vpop.permute.xlu0 %1822
    %1824 = vset.pattern.permute.xlu0 0
    %1825 = vperm.xlu0 %1824, %v1334
    %v1826 = vpop.permute.xlu0 %1825
    %1827 = vset.pattern.permute.xlu0 0
    %1828 = vperm.xlu0 %1827, %v1335
    %v1829 = vpop.permute.xlu0 %1828
    %1830 = vset.pattern.permute.xlu0 0
    %1831 = vperm.xlu0 %1830, %v1336
    %v1832 = vpop.permute.xlu0 %1831
    %1833 = vset.pattern.permute.xlu0 0
    %1834 = vperm.xlu0 %1833, %v1337
    %v1835 = vpop.permute.xlu0 %1834
    %1836 = vset.pattern.permute.xlu0 0
    %1837 = vperm.xlu0 %1836, %v1338
    %v1838 = vpop.permute.xlu0 %1837
    %1839 = vset.pattern.permute.xlu0 0
    %1840 = vperm.xlu0 %1839, %v1339
    %v1841 = vpop.permute.xlu0 %1840
    %1842 = vset.pattern.permute.xlu0 0
    %1843 = vperm.xlu0 %1842, %v1340
    %v1844 = vpop.permute.xlu0 %1843
    %1845 = vset.pattern.permute.xlu0 0
    %1846 = vperm.xlu0 %1845, %v1341
    %v1847 = vpop.permute.xlu0 %1846
    %1848 = vset.pattern.permute.xlu0 0
    %1849 = vperm.xlu0 %1848, %v1342
    %v1850 = vpop.permute.xlu0 %1849
    %1851 = vset.pattern.permute.xlu0 0
    %1852 = vperm.xlu0 %1851, %v1343
    %v1853 = vpop.permute.xlu0 %1852
    %1854 = vset.pattern.permute.xlu0 0
    %1855 = vperm.xlu0 %1854, %v1344
    %v1856 = vpop.permute.xlu0 %1855
    %1857 = vset.pattern.permute.xlu0 0
    %1858 = vperm.xlu0 %1857, %v1345
    %v1859 = vpop.permute.xlu0 %1858
    %1860 = vset.pattern.permute.xlu0 0
    %1861 = vperm.xlu0 %1860, %v1346
    %v1862 = vpop.permute.xlu0 %1861
    %1863 = vset.pattern.permute.xlu0 0
    %1864 = vperm.xlu0 %1863, %v1347
    %v1865 = vpop.permute.xlu0 %1864
    %1866 = vset.pattern.permute.xlu0 0
    %1867 = vperm.xlu0 %1866, %v1348
    %v1868 = vpop.permute.xlu0 %1867
    %1869 = vset.pattern.permute.xlu0 0
    %1870 = vperm.xlu0 %1869, %v1349
    %v1871 = vpop.permute.xlu0 %1870
    %1872 = vset.pattern.permute.xlu0 0
    %1873 = vperm.xlu0 %1872, %v1350
    %v1874 = vpop.permute.xlu0 %1873
    %v1875 = vlaneseq
    %v1876 = vand.u32 %v1875, 127
    %v1877 = vlaneseq
    %v1878 = vshrl.u32 %v1877, 7
    %v1879 = vsub.s32 %v1876, %v1878
    %v1880 = vrot.slane %v1493, %v1879
    %v1881 = vadd.s32 %v1876, 4294967288
    %v1882 = vlaneseq
    %v1883 = vshrl.u32 %v1882, 7
    %v1884 = vsub.s32 %v1881, %v1883
    %v1885 = vrot.slane %v1496, %v1884
    %vm1886 = vcmask 130112
    %v1887 = vsel %vm1886, %v1885, %v1880
    %v1888 = vadd.s32 %v1876, 4294967280
    %v1889 = vlaneseq
    %v1890 = vshrl.u32 %v1889, 7
    %v1891 = vsub.s32 %v1888, %v1890
    %v1892 = vrot.slane %v1499, %v1891
    %vm1893 = vcmask 195712
    %v1894 = vsel %vm1893, %v1892, %v1887
    %v1895 = vadd.s32 %v1876, 4294967272
    %v1896 = vlaneseq
    %v1897 = vshrl.u32 %v1896, 7
    %v1898 = vsub.s32 %v1895, %v1897
    %v1899 = vrot.slane %v1502, %v1898
    %vm1900 = vcmask 261312
    %v1901 = vsel %vm1900, %v1899, %v1894
    %v1902 = vlaneseq
    %v1903 = vshrl.u32 %v1902, 7
    %v1904 = vsub.s32 %v1876, %v1903
    %v1905 = vrot.slane %v1505, %v1904
    %v1906 = vlaneseq
    %v1907 = vshrl.u32 %v1906, 7
    %v1908 = vsub.s32 %v1881, %v1907
    %v1909 = vrot.slane %v1508, %v1908
    %v1910 = vsel %vm1886, %v1909, %v1905
    %v1911 = vlaneseq
    %v1912 = vshrl.u32 %v1911, 7
    %v1913 = vsub.s32 %v1888, %v1912
    %v1914 = vrot.slane %v1511, %v1913
    %v1915 = vsel %vm1893, %v1914, %v1910
    %v1916 = vlaneseq
    %v1917 = vshrl.u32 %v1916, 7
    %v1918 = vsub.s32 %v1895, %v1917
    %v1919 = vrot.slane %v1514, %v1918
    %v1920 = vsel %vm1900, %v1919, %v1915
    %v1921 = vlaneseq
    %v1922 = vshrl.u32 %v1921, 7
    %v1923 = vsub.s32 %v1876, %v1922
    %v1924 = vrot.slane %v1517, %v1923
    %v1925 = vlaneseq
    %v1926 = vshrl.u32 %v1925, 7
    %v1927 = vsub.s32 %v1881, %v1926
    %v1928 = vrot.slane %v1520, %v1927
    %v1929 = vsel %vm1886, %v1928, %v1924
    %v1930 = vlaneseq
    %v1931 = vshrl.u32 %v1930, 7
    %v1932 = vsub.s32 %v1888, %v1931
    %v1933 = vrot.slane %v1523, %v1932
    %v1934 = vsel %vm1893, %v1933, %v1929
    %v1935 = vlaneseq
    %v1936 = vshrl.u32 %v1935, 7
    %v1937 = vsub.s32 %v1895, %v1936
    %v1938 = vrot.slane %v1526, %v1937
    %v1939 = vsel %vm1900, %v1938, %v1934
    %v1940 = vlaneseq
    %v1941 = vshrl.u32 %v1940, 7
    %v1942 = vsub.s32 %v1876, %v1941
    %v1943 = vrot.slane %v1529, %v1942
    %v1944 = vlaneseq
    %v1945 = vshrl.u32 %v1944, 7
    %v1946 = vsub.s32 %v1881, %v1945
    %v1947 = vrot.slane %v1532, %v1946
    %v1948 = vsel %vm1886, %v1947, %v1943
    %v1949 = vlaneseq
    %v1950 = vshrl.u32 %v1949, 7
    %v1951 = vsub.s32 %v1888, %v1950
    %v1952 = vrot.slane %v1535, %v1951
    %v1953 = vsel %vm1893, %v1952, %v1948
    %v1954 = vlaneseq
    %v1955 = vshrl.u32 %v1954, 7
    %v1956 = vsub.s32 %v1895, %v1955
    %v1957 = vrot.slane %v1538, %v1956
    %v1958 = vsel %vm1900, %v1957, %v1953
    %v1959 = vlaneseq
    %v1960 = vshrl.u32 %v1959, 7
    %v1961 = vsub.s32 %v1876, %v1960
    %v1962 = vrot.slane %v1541, %v1961
    %v1963 = vlaneseq
    %v1964 = vshrl.u32 %v1963, 7
    %v1965 = vsub.s32 %v1881, %v1964
    %v1966 = vrot.slane %v1544, %v1965
    %v1967 = vsel %vm1886, %v1966, %v1962
    %v1968 = vlaneseq
    %v1969 = vshrl.u32 %v1968, 7
    %v1970 = vsub.s32 %v1888, %v1969
    %v1971 = vrot.slane %v1547, %v1970
    %v1972 = vsel %vm1893, %v1971, %v1967
    %v1973 = vlaneseq
    %v1974 = vshrl.u32 %v1973, 7
    %v1975 = vsub.s32 %v1895, %v1974
    %v1976 = vrot.slane %v1550, %v1975
    %v1977 = vsel %vm1900, %v1976, %v1972
    %v1978 = vlaneseq
    %v1979 = vshrl.u32 %v1978, 7
    %v1980 = vsub.s32 %v1876, %v1979
    %v1981 = vrot.slane %v1553, %v1980
    %v1982 = vlaneseq
    %v1983 = vshrl.u32 %v1982, 7
    %v1984 = vsub.s32 %v1881, %v1983
    %v1985 = vrot.slane %v1556, %v1984
    %v1986 = vsel %vm1886, %v1985, %v1981
    %v1987 = vlaneseq
    %v1988 = vshrl.u32 %v1987, 7
    %v1989 = vsub.s32 %v1888, %v1988
    %v1990 = vrot.slane %v1559, %v1989
    %v1991 = vsel %vm1893, %v1990, %v1986
    %v1992 = vlaneseq
    %v1993 = vshrl.u32 %v1992, 7
    %v1994 = vsub.s32 %v1895, %v1993
    %v1995 = vrot.slane %v1562, %v1994
    %v1996 = vsel %vm1900, %v1995, %v1991
    %v1997 = vlaneseq
    %v1998 = vshrl.u32 %v1997, 7
    %v1999 = vsub.s32 %v1876, %v1998
    %v2000 = vrot.slane %v1565, %v1999
    %v2001 = vlaneseq
    %v2002 = vshrl.u32 %v2001, 7
    %v2003 = vsub.s32 %v1881, %v2002
    %v2004 = vrot.slane %v1568, %v2003
    %v2005 = vsel %vm1886, %v2004, %v2000
    %v2006 = vlaneseq
    %v2007 = vshrl.u32 %v2006, 7
    %v2008 = vsub.s32 %v1888, %v2007
    %v2009 = vrot.slane %v1571, %v2008
    %v2010 = vsel %vm1893, %v2009, %v2005
    %v2011 = vlaneseq
    %v2012 = vshrl.u32 %v2011, 7
    %v2013 = vsub.s32 %v1895, %v2012
    %v2014 = vrot.slane %v1574, %v2013
    %v2015 = vsel %vm1900, %v2014, %v2010
    %v2016 = vlaneseq
    %v2017 = vshrl.u32 %v2016, 7
    %v2018 = vsub.s32 %v1876, %v2017
    %v2019 = vrot.slane %v1577, %v2018
    %v2020 = vlaneseq
    %v2021 = vshrl.u32 %v2020, 7
    %v2022 = vsub.s32 %v1881, %v2021
    %v2023 = vrot.slane %v1580, %v2022
    %v2024 = vsel %vm1886, %v2023, %v2019
    %v2025 = vlaneseq
    %v2026 = vshrl.u32 %v2025, 7
    %v2027 = vsub.s32 %v1888, %v2026
    %v2028 = vrot.slane %v1583, %v2027
    %v2029 = vsel %vm1893, %v2028, %v2024
    %v2030 = vlaneseq
    %v2031 = vshrl.u32 %v2030, 7
    %v2032 = vsub.s32 %v1895, %v2031
    %v2033 = vrot.slane %v1586, %v2032
    %v2034 = vsel %vm1900, %v2033, %v2029
    %v2035 = vlaneseq
    %v2036 = vshrl.u32 %v2035, 7
    %v2037 = vsub.s32 %v1876, %v2036
    %v2038 = vrot.slane %v1589, %v2037
    %v2039 = vlaneseq
    %v2040 = vshrl.u32 %v2039, 7
    %v2041 = vsub.s32 %v1881, %v2040
    %v2042 = vrot.slane %v1592, %v2041
    %v2043 = vsel %vm1886, %v2042, %v2038
    %v2044 = vlaneseq
    %v2045 = vshrl.u32 %v2044, 7
    %v2046 = vsub.s32 %v1888, %v2045
    %v2047 = vrot.slane %v1595, %v2046
    %v2048 = vsel %vm1893, %v2047, %v2043
    %v2049 = vlaneseq
    %v2050 = vshrl.u32 %v2049, 7
    %v2051 = vsub.s32 %v1895, %v2050
    %v2052 = vrot.slane %v1598, %v2051
    %v2053 = vsel %vm1900, %v2052, %v2048
    %v2054 = vlaneseq
    %v2055 = vshrl.u32 %v2054, 7
    %v2056 = vsub.s32 %v1876, %v2055
    %v2057 = vrot.slane %v1601, %v2056
    %v2058 = vlaneseq
    %v2059 = vshrl.u32 %v2058, 7
    %v2060 = vsub.s32 %v1881, %v2059
    %v2061 = vrot.slane %v1604, %v2060
    %v2062 = vsel %vm1886, %v2061, %v2057
    %v2063 = vlaneseq
    %v2064 = vshrl.u32 %v2063, 7
    %v2065 = vsub.s32 %v1888, %v2064
    %v2066 = vrot.slane %v1607, %v2065
    %v2067 = vsel %vm1893, %v2066, %v2062
    %v2068 = vlaneseq
    %v2069 = vshrl.u32 %v2068, 7
    %v2070 = vsub.s32 %v1895, %v2069
    %v2071 = vrot.slane %v1610, %v2070
    %v2072 = vsel %vm1900, %v2071, %v2067
    %v2073 = vlaneseq
    %v2074 = vshrl.u32 %v2073, 7
    %v2075 = vsub.s32 %v1876, %v2074
    %v2076 = vrot.slane %v1613, %v2075
    %v2077 = vlaneseq
    %v2078 = vshrl.u32 %v2077, 7
    %v2079 = vsub.s32 %v1881, %v2078
    %v2080 = vrot.slane %v1616, %v2079
    %v2081 = vsel %vm1886, %v2080, %v2076
    %v2082 = vlaneseq
    %v2083 = vshrl.u32 %v2082, 7
    %v2084 = vsub.s32 %v1888, %v2083
    %v2085 = vrot.slane %v1619, %v2084
    %v2086 = vsel %vm1893, %v2085, %v2081
    %v2087 = vlaneseq
    %v2088 = vshrl.u32 %v2087, 7
    %v2089 = vsub.s32 %v1895, %v2088
    %v2090 = vrot.slane %v1622, %v2089
    %v2091 = vsel %vm1900, %v2090, %v2086
    %v2092 = vlaneseq
    %v2093 = vshrl.u32 %v2092, 7
    %v2094 = vsub.s32 %v1876, %v2093
    %v2095 = vrot.slane %v1625, %v2094
    %v2096 = vlaneseq
    %v2097 = vshrl.u32 %v2096, 7
    %v2098 = vsub.s32 %v1881, %v2097
    %v2099 = vrot.slane %v1628, %v2098
    %v2100 = vsel %vm1886, %v2099, %v2095
    %v2101 = vlaneseq
    %v2102 = vshrl.u32 %v2101, 7
    %v2103 = vsub.s32 %v1888, %v2102
    %v2104 = vrot.slane %v1631, %v2103
    %v2105 = vsel %vm1893, %v2104, %v2100
    %v2106 = vlaneseq
    %v2107 = vshrl.u32 %v2106, 7
    %v2108 = vsub.s32 %v1895, %v2107
    %v2109 = vrot.slane %v1634, %v2108
    %v2110 = vsel %vm1900, %v2109, %v2105
    %v2111 = vlaneseq
    %v2112 = vshrl.u32 %v2111, 7
    %v2113 = vsub.s32 %v1876, %v2112
    %v2114 = vrot.slane %v1637, %v2113
    %v2115 = vlaneseq
    %v2116 = vshrl.u32 %v2115, 7
    %v2117 = vsub.s32 %v1881, %v2116
    %v2118 = vrot.slane %v1640, %v2117
    %v2119 = vsel %vm1886, %v2118, %v2114
    %v2120 = vlaneseq
    %v2121 = vshrl.u32 %v2120, 7
    %v2122 = vsub.s32 %v1888, %v2121
    %v2123 = vrot.slane %v1643, %v2122
    %v2124 = vsel %vm1893, %v2123, %v2119
    %v2125 = vlaneseq
    %v2126 = vshrl.u32 %v2125, 7
    %v2127 = vsub.s32 %v1895, %v2126
    %v2128 = vrot.slane %v1646, %v2127
    %v2129 = vsel %vm1900, %v2128, %v2124
    %v2130 = vlaneseq
    %v2131 = vshrl.u32 %v2130, 7
    %v2132 = vsub.s32 %v1876, %v2131
    %v2133 = vrot.slane %v1649, %v2132
    %v2134 = vlaneseq
    %v2135 = vshrl.u32 %v2134, 7
    %v2136 = vsub.s32 %v1881, %v2135
    %v2137 = vrot.slane %v1652, %v2136
    %v2138 = vsel %vm1886, %v2137, %v2133
    %v2139 = vlaneseq
    %v2140 = vshrl.u32 %v2139, 7
    %v2141 = vsub.s32 %v1888, %v2140
    %v2142 = vrot.slane %v1655, %v2141
    %v2143 = vsel %vm1893, %v2142, %v2138
    %v2144 = vlaneseq
    %v2145 = vshrl.u32 %v2144, 7
    %v2146 = vsub.s32 %v1895, %v2145
    %v2147 = vrot.slane %v1658, %v2146
    %v2148 = vsel %vm1900, %v2147, %v2143
    %v2149 = vlaneseq
    %v2150 = vshrl.u32 %v2149, 7
    %v2151 = vsub.s32 %v1876, %v2150
    %v2152 = vrot.slane %v1661, %v2151
    %v2153 = vlaneseq
    %v2154 = vshrl.u32 %v2153, 7
    %v2155 = vsub.s32 %v1881, %v2154
    %v2156 = vrot.slane %v1664, %v2155
    %v2157 = vsel %vm1886, %v2156, %v2152
    %v2158 = vlaneseq
    %v2159 = vshrl.u32 %v2158, 7
    %v2160 = vsub.s32 %v1888, %v2159
    %v2161 = vrot.slane %v1667, %v2160
    %v2162 = vsel %vm1893, %v2161, %v2157
    %v2163 = vlaneseq
    %v2164 = vshrl.u32 %v2163, 7
    %v2165 = vsub.s32 %v1895, %v2164
    %v2166 = vrot.slane %v1670, %v2165
    %v2167 = vsel %vm1900, %v2166, %v2162
    %v2168 = vlaneseq
    %v2169 = vshrl.u32 %v2168, 7
    %v2170 = vsub.s32 %v1876, %v2169
    %v2171 = vrot.slane %v1673, %v2170
    %v2172 = vlaneseq
    %v2173 = vshrl.u32 %v2172, 7
    %v2174 = vsub.s32 %v1881, %v2173
    %v2175 = vrot.slane %v1676, %v2174
    %v2176 = vsel %vm1886, %v2175, %v2171
    %v2177 = vlaneseq
    %v2178 = vshrl.u32 %v2177, 7
    %v2179 = vsub.s32 %v1888, %v2178
    %v2180 = vrot.slane %v1679, %v2179
    %v2181 = vsel %vm1893, %v2180, %v2176
    %v2182 = vlaneseq
    %v2183 = vshrl.u32 %v2182, 7
    %v2184 = vsub.s32 %v1895, %v2183
    %v2185 = vrot.slane %v1682, %v2184
    %v2186 = vsel %vm1900, %v2185, %v2181
    %v2187 = vlaneseq
    %v2188 = vshrl.u32 %v2187, 7
    %v2189 = vsub.s32 %v1876, %v2188
    %v2190 = vrot.slane %v1685, %v2189
    %v2191 = vlaneseq
    %v2192 = vshrl.u32 %v2191, 7
    %v2193 = vsub.s32 %v1881, %v2192
    %v2194 = vrot.slane %v1688, %v2193
    %v2195 = vsel %vm1886, %v2194, %v2190
    %v2196 = vlaneseq
    %v2197 = vshrl.u32 %v2196, 7
    %v2198 = vsub.s32 %v1888, %v2197
    %v2199 = vrot.slane %v1691, %v2198
    %v2200 = vsel %vm1893, %v2199, %v2195
    %v2201 = vlaneseq
    %v2202 = vshrl.u32 %v2201, 7
    %v2203 = vsub.s32 %v1895, %v2202
    %v2204 = vrot.slane %v1694, %v2203
    %v2205 = vsel %vm1900, %v2204, %v2200
    %v2206 = vlaneseq
    %v2207 = vshrl.u32 %v2206, 7
    %v2208 = vsub.s32 %v1876, %v2207
    %v2209 = vrot.slane %v1697, %v2208
    %v2210 = vlaneseq
    %v2211 = vshrl.u32 %v2210, 7
    %v2212 = vsub.s32 %v1881, %v2211
    %v2213 = vrot.slane %v1700, %v2212
    %v2214 = vsel %vm1886, %v2213, %v2209
    %v2215 = vlaneseq
    %v2216 = vshrl.u32 %v2215, 7
    %v2217 = vsub.s32 %v1888, %v2216
    %v2218 = vrot.slane %v1703, %v2217
    %v2219 = vsel %vm1893, %v2218, %v2214
    %v2220 = vlaneseq
    %v2221 = vshrl.u32 %v2220, 7
    %v2222 = vsub.s32 %v1895, %v2221
    %v2223 = vrot.slane %v1706, %v2222
    %v2224 = vsel %vm1900, %v2223, %v2219
    %v2225 = vlaneseq
    %v2226 = vshrl.u32 %v2225, 7
    %v2227 = vsub.s32 %v1876, %v2226
    %v2228 = vrot.slane %v1709, %v2227
    %v2229 = vlaneseq
    %v2230 = vshrl.u32 %v2229, 7
    %v2231 = vsub.s32 %v1881, %v2230
    %v2232 = vrot.slane %v1712, %v2231
    %v2233 = vsel %vm1886, %v2232, %v2228
    %v2234 = vlaneseq
    %v2235 = vshrl.u32 %v2234, 7
    %v2236 = vsub.s32 %v1888, %v2235
    %v2237 = vrot.slane %v1715, %v2236
    %v2238 = vsel %vm1893, %v2237, %v2233
    %v2239 = vlaneseq
    %v2240 = vshrl.u32 %v2239, 7
    %v2241 = vsub.s32 %v1895, %v2240
    %v2242 = vrot.slane %v1718, %v2241
    %v2243 = vsel %vm1900, %v2242, %v2238
    %v2244 = vlaneseq
    %v2245 = vshrl.u32 %v2244, 7
    %v2246 = vsub.s32 %v1876, %v2245
    %v2247 = vrot.slane %v1721, %v2246
    %v2248 = vlaneseq
    %v2249 = vshrl.u32 %v2248, 7
    %v2250 = vsub.s32 %v1881, %v2249
    %v2251 = vrot.slane %v1724, %v2250
    %v2252 = vsel %vm1886, %v2251, %v2247
    %v2253 = vlaneseq
    %v2254 = vshrl.u32 %v2253, 7
    %v2255 = vsub.s32 %v1888, %v2254
    %v2256 = vrot.slane %v1727, %v2255
    %v2257 = vsel %vm1893, %v2256, %v2252
    %v2258 = vlaneseq
    %v2259 = vshrl.u32 %v2258, 7
    %v2260 = vsub.s32 %v1895, %v2259
    %v2261 = vrot.slane %v1730, %v2260
    %v2262 = vsel %vm1900, %v2261, %v2257
    %v2263 = vlaneseq
    %v2264 = vshrl.u32 %v2263, 7
    %v2265 = vsub.s32 %v1876, %v2264
    %v2266 = vrot.slane %v1733, %v2265
    %v2267 = vlaneseq
    %v2268 = vshrl.u32 %v2267, 7
    %v2269 = vsub.s32 %v1881, %v2268
    %v2270 = vrot.slane %v1736, %v2269
    %v2271 = vsel %vm1886, %v2270, %v2266
    %v2272 = vlaneseq
    %v2273 = vshrl.u32 %v2272, 7
    %v2274 = vsub.s32 %v1888, %v2273
    %v2275 = vrot.slane %v1739, %v2274
    %v2276 = vsel %vm1893, %v2275, %v2271
    %v2277 = vlaneseq
    %v2278 = vshrl.u32 %v2277, 7
    %v2279 = vsub.s32 %v1895, %v2278
    %v2280 = vrot.slane %v1742, %v2279
    %v2281 = vsel %vm1900, %v2280, %v2276
    %v2282 = vlaneseq
    %v2283 = vshrl.u32 %v2282, 7
    %v2284 = vsub.s32 %v1876, %v2283
    %v2285 = vrot.slane %v1745, %v2284
    %v2286 = vlaneseq
    %v2287 = vshrl.u32 %v2286, 7
    %v2288 = vsub.s32 %v1881, %v2287
    %v2289 = vrot.slane %v1748, %v2288
    %v2290 = vsel %vm1886, %v2289, %v2285
    %v2291 = vlaneseq
    %v2292 = vshrl.u32 %v2291, 7
    %v2293 = vsub.s32 %v1888, %v2292
    %v2294 = vrot.slane %v1751, %v2293
    %v2295 = vsel %vm1893, %v2294, %v2290
    %v2296 = vlaneseq
    %v2297 = vshrl.u32 %v2296, 7
    %v2298 = vsub.s32 %v1895, %v2297
    %v2299 = vrot.slane %v1754, %v2298
    %v2300 = vsel %vm1900, %v2299, %v2295
    %v2301 = vlaneseq
    %v2302 = vshrl.u32 %v2301, 7
    %v2303 = vsub.s32 %v1876, %v2302
    %v2304 = vrot.slane %v1757, %v2303
    %v2305 = vlaneseq
    %v2306 = vshrl.u32 %v2305, 7
    %v2307 = vsub.s32 %v1881, %v2306
    %v2308 = vrot.slane %v1760, %v2307
    %v2309 = vsel %vm1886, %v2308, %v2304
    %v2310 = vlaneseq
    %v2311 = vshrl.u32 %v2310, 7
    %v2312 = vsub.s32 %v1888, %v2311
    %v2313 = vrot.slane %v1763, %v2312
    %v2314 = vsel %vm1893, %v2313, %v2309
    %v2315 = vlaneseq
    %v2316 = vshrl.u32 %v2315, 7
    %v2317 = vsub.s32 %v1895, %v2316
    %v2318 = vrot.slane %v1766, %v2317
    %v2319 = vsel %vm1900, %v2318, %v2314
    %v2320 = vlaneseq
    %v2321 = vshrl.u32 %v2320, 7
    %v2322 = vsub.s32 %v1876, %v2321
    %v2323 = vrot.slane %v1769, %v2322
    %v2324 = vlaneseq
    %v2325 = vshrl.u32 %v2324, 7
    %v2326 = vsub.s32 %v1881, %v2325
    %v2327 = vrot.slane %v1772, %v2326
    %v2328 = vsel %vm1886, %v2327, %v2323
    %v2329 = vlaneseq
    %v2330 = vshrl.u32 %v2329, 7
    %v2331 = vsub.s32 %v1888, %v2330
    %v2332 = vrot.slane %v1775, %v2331
    %v2333 = vsel %vm1893, %v2332, %v2328
    %v2334 = vlaneseq
    %v2335 = vshrl.u32 %v2334, 7
    %v2336 = vsub.s32 %v1895, %v2335
    %v2337 = vrot.slane %v1778, %v2336
    %v2338 = vsel %vm1900, %v2337, %v2333
    %v2339 = vlaneseq
    %v2340 = vshrl.u32 %v2339, 7
    %v2341 = vsub.s32 %v1876, %v2340
    %v2342 = vrot.slane %v1781, %v2341
    %v2343 = vlaneseq
    %v2344 = vshrl.u32 %v2343, 7
    %v2345 = vsub.s32 %v1881, %v2344
    %v2346 = vrot.slane %v1784, %v2345
    %v2347 = vsel %vm1886, %v2346, %v2342
    %v2348 = vlaneseq
    %v2349 = vshrl.u32 %v2348, 7
    %v2350 = vsub.s32 %v1888, %v2349
    %v2351 = vrot.slane %v1787, %v2350
    %v2352 = vsel %vm1893, %v2351, %v2347
    %v2353 = vlaneseq
    %v2354 = vshrl.u32 %v2353, 7
    %v2355 = vsub.s32 %v1895, %v2354
    %v2356 = vrot.slane %v1790, %v2355
    %v2357 = vsel %vm1900, %v2356, %v2352
    %v2358 = vlaneseq
    %v2359 = vshrl.u32 %v2358, 7
    %v2360 = vsub.s32 %v1876, %v2359
    %v2361 = vrot.slane %v1793, %v2360
    %v2362 = vlaneseq
    %v2363 = vshrl.u32 %v2362, 7
    %v2364 = vsub.s32 %v1881, %v2363
    %v2365 = vrot.slane %v1796, %v2364
    %v2366 = vsel %vm1886, %v2365, %v2361
    %v2367 = vlaneseq
    %v2368 = vshrl.u32 %v2367, 7
    %v2369 = vsub.s32 %v1888, %v2368
    %v2370 = vrot.slane %v1799, %v2369
    %v2371 = vsel %vm1893, %v2370, %v2366
    %v2372 = vlaneseq
    %v2373 = vshrl.u32 %v2372, 7
    %v2374 = vsub.s32 %v1895, %v2373
    %v2375 = vrot.slane %v1802, %v2374
    %v2376 = vsel %vm1900, %v2375, %v2371
    %v2377 = vlaneseq
    %v2378 = vshrl.u32 %v2377, 7
    %v2379 = vsub.s32 %v1876, %v2378
    %v2380 = vrot.slane %v1805, %v2379
    %v2381 = vlaneseq
    %v2382 = vshrl.u32 %v2381, 7
    %v2383 = vsub.s32 %v1881, %v2382
    %v2384 = vrot.slane %v1808, %v2383
    %v2385 = vsel %vm1886, %v2384, %v2380
    %v2386 = vlaneseq
    %v2387 = vshrl.u32 %v2386, 7
    %v2388 = vsub.s32 %v1888, %v2387
    %v2389 = vrot.slane %v1811, %v2388
    %v2390 = vsel %vm1893, %v2389, %v2385
    %v2391 = vlaneseq
    %v2392 = vshrl.u32 %v2391, 7
    %v2393 = vsub.s32 %v1895, %v2392
    %v2394 = vrot.slane %v1814, %v2393
    %v2395 = vsel %vm1900, %v2394, %v2390
    %v2396 = vlaneseq
    %v2397 = vshrl.u32 %v2396, 7
    %v2398 = vsub.s32 %v1876, %v2397
    %v2399 = vrot.slane %v1817, %v2398
    %v2400 = vlaneseq
    %v2401 = vshrl.u32 %v2400, 7
    %v2402 = vsub.s32 %v1881, %v2401
    %v2403 = vrot.slane %v1820, %v2402
    %v2404 = vsel %vm1886, %v2403, %v2399
    %v2405 = vlaneseq
    %v2406 = vshrl.u32 %v2405, 7
    %v2407 = vsub.s32 %v1888, %v2406
    %v2408 = vrot.slane %v1823, %v2407
    %v2409 = vsel %vm1893, %v2408, %v2404
    %v2410 = vlaneseq
    %v2411 = vshrl.u32 %v2410, 7
    %v2412 = vsub.s32 %v1895, %v2411
    %v2413 = vrot.slane %v1826, %v2412
    %v2414 = vsel %vm1900, %v2413, %v2409
    %v2415 = vlaneseq
    %v2416 = vshrl.u32 %v2415, 7
    %v2417 = vsub.s32 %v1876, %v2416
    %v2418 = vrot.slane %v1829, %v2417
    %v2419 = vlaneseq
    %v2420 = vshrl.u32 %v2419, 7
    %v2421 = vsub.s32 %v1881, %v2420
    %v2422 = vrot.slane %v1832, %v2421
    %v2423 = vsel %vm1886, %v2422, %v2418
    %v2424 = vlaneseq
    %v2425 = vshrl.u32 %v2424, 7
    %v2426 = vsub.s32 %v1888, %v2425
    %v2427 = vrot.slane %v1835, %v2426
    %v2428 = vsel %vm1893, %v2427, %v2423
    %v2429 = vlaneseq
    %v2430 = vshrl.u32 %v2429, 7
    %v2431 = vsub.s32 %v1895, %v2430
    %v2432 = vrot.slane %v1838, %v2431
    %v2433 = vsel %vm1900, %v2432, %v2428
    %v2434 = vlaneseq
    %v2435 = vshrl.u32 %v2434, 7
    %v2436 = vsub.s32 %v1876, %v2435
    %v2437 = vrot.slane %v1841, %v2436
    %v2438 = vlaneseq
    %v2439 = vshrl.u32 %v2438, 7
    %v2440 = vsub.s32 %v1881, %v2439
    %v2441 = vrot.slane %v1844, %v2440
    %v2442 = vsel %vm1886, %v2441, %v2437
    %v2443 = vlaneseq
    %v2444 = vshrl.u32 %v2443, 7
    %v2445 = vsub.s32 %v1888, %v2444
    %v2446 = vrot.slane %v1847, %v2445
    %v2447 = vsel %vm1893, %v2446, %v2442
    %v2448 = vlaneseq
    %v2449 = vshrl.u32 %v2448, 7
    %v2450 = vsub.s32 %v1895, %v2449
    %v2451 = vrot.slane %v1850, %v2450
    %v2452 = vsel %vm1900, %v2451, %v2447
    %v2453 = vlaneseq
    %v2454 = vshrl.u32 %v2453, 7
    %v2455 = vsub.s32 %v1876, %v2454
    %v2456 = vrot.slane %v1853, %v2455
    %v2457 = vlaneseq
    %v2458 = vshrl.u32 %v2457, 7
    %v2459 = vsub.s32 %v1881, %v2458
    %v2460 = vrot.slane %v1856, %v2459
    %v2461 = vsel %vm1886, %v2460, %v2456
    %v2462 = vlaneseq
    %v2463 = vshrl.u32 %v2462, 7
    %v2464 = vsub.s32 %v1888, %v2463
    %v2465 = vrot.slane %v1859, %v2464
    %v2466 = vsel %vm1893, %v2465, %v2461
    %v2467 = vlaneseq
    %v2468 = vshrl.u32 %v2467, 7
    %v2469 = vsub.s32 %v1895, %v2468
    %v2470 = vrot.slane %v1862, %v2469
    %v2471 = vsel %vm1900, %v2470, %v2466
    %v2472 = vlaneseq
    %v2473 = vshrl.u32 %v2472, 7
    %v2474 = vsub.s32 %v1876, %v2473
    %v2475 = vrot.slane %v1865, %v2474
    %v2476 = vlaneseq
    %v2477 = vshrl.u32 %v2476, 7
    %v2478 = vsub.s32 %v1881, %v2477
    %v2479 = vrot.slane %v1868, %v2478
    %v2480 = vsel %vm1886, %v2479, %v2475
    %v2481 = vlaneseq
    %v2482 = vshrl.u32 %v2481, 7
    %v2483 = vsub.s32 %v1888, %v2482
    %v2484 = vrot.slane %v1871, %v2483
    %v2485 = vsel %vm1893, %v2484, %v2480
    %v2486 = vlaneseq
    %v2487 = vshrl.u32 %v2486, 7
    %v2488 = vsub.s32 %v1895, %v2487
    %v2489 = vrot.slane %v1874, %v2488
    %v2490 = vsel %vm1900, %v2489, %v2485
    %vm2491 = vcmask 1041409
    %v2492 = vsel %vm2491, %v1920, %v1901
    %vm2493 = vcmask 1042434
    %v2494 = vsel %vm2493, %v1939, %v2492
    %vm2495 = vcmask 1043459
    %v2496 = vsel %vm2495, %v1958, %v2494
    %vm2497 = vcmask 1044484
    %v2498 = vsel %vm2497, %v1977, %v2496
    %vm2499 = vcmask 1045509
    %v2500 = vsel %vm2499, %v1996, %v2498
    %vm2501 = vcmask 1046534
    %v2502 = vsel %vm2501, %v2015, %v2500
    %vm2503 = vcmask 1047559
    %v2504 = vsel %vm2503, %v2034, %v2502
    %v2505 = vsel %vm2491, %v2072, %v2053
    %v2506 = vsel %vm2493, %v2091, %v2505
    %v2507 = vsel %vm2495, %v2110, %v2506
    %v2508 = vsel %vm2497, %v2129, %v2507
    %v2509 = vsel %vm2499, %v2148, %v2508
    %v2510 = vsel %vm2501, %v2167, %v2509
    %v2511 = vsel %vm2503, %v2186, %v2510
    %v2512 = vsel %vm2491, %v2224, %v2205
    %v2513 = vsel %vm2493, %v2243, %v2512
    %v2514 = vsel %vm2495, %v2262, %v2513
    %v2515 = vsel %vm2497, %v2281, %v2514
    %v2516 = vsel %vm2499, %v2300, %v2515
    %v2517 = vsel %vm2501, %v2319, %v2516
    %v2518 = vsel %vm2503, %v2338, %v2517
    %v2519 = vsel %vm2491, %v2376, %v2357
    %v2520 = vsel %vm2493, %v2395, %v2519
    %v2521 = vsel %vm2495, %v2414, %v2520
    %v2522 = vsel %vm2497, %v2433, %v2521
    %v2523 = vsel %vm2499, %v2452, %v2522
    %v2524 = vsel %vm2501, %v2471, %v2523
    %v2525 = vsel %vm2503, %v2490, %v2524
    %vm2526 = vcmask 261120
    %v2527 = vsel %vm2526, %v2504, 0
    %v2529 = vsel %vm2526, %v2511, 0
    %v2531 = vsel %vm2526, %v2518, 0
    %v2533 = vsel %vm2526, %v2525, 0
    %2535 = vmatprep.subr.mxu0 0.0
    %2536 = vmatpush1.msra.mxu0 %v1355
    %2537 = vmatprep.subr.mxu0 0.0
    %2538 = vmatpush1.msra.mxu0 %v1356
    %2539 = vmatprep.subr.mxu0 0.0
    %2540 = vmatpush1.msra.mxu0 %v1357
    %2541 = vmatprep.subr.mxu0 0.0
    %2542 = vmatpush1.msra.mxu0 %v1358
    %2543 = vmatprep.subr.mxu0 0.0
    %2544 = vmatpush1.msra.mxu0 0.0
    %2545 = vmatprep.subr.mxu0 0.0
    %2546 = vmatpush1.msra.mxu0 0.0
    %2547 = vmatprep.subr.mxu0 0.0
    %2548 = vmatpush1.msra.mxu0 0.0
    %2549 = vmatprep.subr.mxu0 0.0
    %2550 = vmatpush1.msra.mxu0 0.0
    %2551 = vmatprep.subr.mxu0 0.0
    %2552 = vmatpush1.msra.mxu0 0.0
    %2553 = vmatprep.subr.mxu0 0.0
    %2554 = vmatpush1.msra.mxu0 0.0
    %2555 = vmatprep.subr.mxu0 0.0
    %2556 = vmatpush1.msra.mxu0 0.0
    %2557 = vmatprep.subr.mxu0 0.0
    %2558 = vmatpush1.msra.mxu0 0.0
    %2559 = vmatprep.subr.mxu0 0.0
    %2560 = vmatpush1.msra.mxu0 0.0
    %2561 = vmatprep.subr.mxu0 0.0
    %2562 = vmatpush1.msra.mxu0 0.0
    %2563 = vmatprep.subr.mxu0 0.0
    %2564 = vmatpush1.msra.mxu0 0.0
    %2565 = vmatprep.subr.mxu0 0.0
    %2566 = vmatpush1.msra.mxu0 0.0
    %2567 = vmatprep.subr.mxu0 0.0
    %2568 = vmatpush1.msra.mxu0 0.0
    %2569 = vmatprep.subr.mxu0 0.0
    %2570 = vmatpush1.msra.mxu0 0.0
    %2571 = vmatprep.subr.mxu0 0.0
    %2572 = vmatpush1.msra.mxu0 0.0
    %2573 = vmatprep.subr.mxu0 0.0
    %2574 = vmatpush1.msra.mxu0 0.0
    %2575 = vmatprep.subr.mxu0 0.0
    %2576 = vmatpush1.msra.mxu0 0.0
    %2577 = vmatprep.subr.mxu0 0.0
    %2578 = vmatpush1.msra.mxu0 0.0
    %2579 = vmatprep.subr.mxu0 0.0
    %2580 = vmatpush1.msra.mxu0 0.0
    %2581 = vmatprep.subr.mxu0 0.0
    %2582 = vmatpush1.msra.mxu0 0.0
    %2583 = vmatprep.subr.mxu0 0.0
    %2584 = vmatpush1.msra.mxu0 0.0
    %2585 = vmatprep.subr.mxu0 0.0
    %2586 = vmatpush1.msra.mxu0 0.0
    %2587 = vmatprep.subr.mxu0 0.0
    %2588 = vmatpush1.msra.mxu0 0.0
    %2589 = vmatprep.subr.mxu0 0.0
    %2590 = vmatpush1.msra.mxu0 0.0
    %2591 = vmatprep.subr.mxu0 0.0
    %2592 = vmatpush1.msra.mxu0 0.0
    %2593 = vmatprep.subr.mxu0 0.0
    %2594 = vmatpush1.msra.mxu0 0.0
    %2595 = vmatprep.subr.mxu0 0.0
    %2596 = vmatpush1.msra.mxu0 0.0
    %2597 = vmatprep.subr.mxu0 0.0
    %2598 = vmatpush1.msra.mxu0 0.0
    %2599 = vmatprep.mubr.f32.mxu0 0.0
    %2600 = vmatmul.mubr.f32.gmra.mrb[0].mxu0 %v2527
    %v2601 = vpop.f32.mrb[0].mxu0
    %v2602 = vadd.f32 %v1362, %v2601
    %v2603 = vpop.f32.mrb[0].mxu0
    %2604 = vmatprep.mubr.f32.mxu0 0.0
    %2605 = vmatmul.mubr.f32.gmra.mrb[0].mxu0 %v2529
    %v2606 = vpop.f32.mrb[0].mxu0
    %v2607 = vadd.f32 %v1362, %v2606
    %v2608 = vpop.f32.mrb[0].mxu0
    %2609 = vmatprep.mubr.f32.mxu0 0.0
    %2610 = vmatmul.mubr.f32.gmra.mrb[0].mxu0 %v2531
    %v2611 = vpop.f32.mrb[0].mxu0
    %v2612 = vadd.f32 %v1362, %v2611
    %v2613 = vpop.f32.mrb[0].mxu0
    %2614 = vmatprep.mubr.f32.mxu0 0.0
    %2615 = vmatmul.mubr.f32.gmra.mrb[0].mxu0 %v2533
    %v2616 = vpop.f32.mrb[0].mxu0
    %v2617 = vadd.f32 %v1362, %v2616
    %v2618 = vpop.f32.mrb[0].mxu0
    %2619 = vdwg.mxu0
    %v2620 = vadd.f32 %v2602, %v1351
    %v2621 = vadd.f32 %v2607, %v1352
    %v2622 = vadd.f32 %v2612, %v1353
    %v2623 = vadd.f32 %v2617, %v1354
    %v2624 = vadd.f32 %v1351, %v2620
    %v2625 = vadd.f32 %v1352, %v2621
    %v2626 = vadd.f32 %v1353, %v2622
    %v2627 = vadd.f32 %v1354, %v2623
    %v2628 = vsel %vm2526, %v2624, 0.0
    %2629 = vadd.xlane.f32.xlu0 %v2628
    %v2630 = vpop.xlane.xlu0 %2629
    %v2631 = vsel %vm2526, %v2625, 0.0
    %2632 = vadd.xlane.f32.xlu0 %v2631
    %v2633 = vpop.xlane.xlu0 %2632
    %v2634 = vsel %vm2526, %v2626, 0.0
    %2635 = vadd.xlane.f32.xlu0 %v2634
    %v2636 = vpop.xlane.xlu0 %2635
    %v2637 = vsel %vm2526, %v2627, 0.0
    %2638 = vadd.xlane.f32.xlu0 %v2637
    %v2639 = vpop.xlane.xlu0 %2638
    %v2640 = vrcp.pop 32.0
    %v2641 = vmul.f32 %v2630, %v2640
    %v2642 = vmul.f32 %v2633, %v2640
    %v2643 = vmul.f32 %v2636, %v2640
    %v2644 = vmul.f32 %v2639, %v2640
    %v2645 = vsub.f32 %v2624, %v2641
    %v2646 = vsub.f32 %v2625, %v2642
    %v2647 = vsub.f32 %v2626, %v2643
    %v2648 = vsub.f32 %v2627, %v2644
    %v2649 = vmul.f32 %v2645, %v2645
    %v2650 = vmul.f32 %v2646, %v2646
    %v2651 = vmul.f32 %v2647, %v2647
    %v2652 = vmul.f32 %v2648, %v2648
    %v2653 = vsel %vm2526, %v2649, 0.0
    %2654 = vadd.xlane.f32.xlu0 %v2653
    %v2655 = vpop.xlane.xlu0 %2654
    %v2656 = vsel %vm2526, %v2650, 0.0
    %2657 = vadd.xlane.f32.xlu0 %v2656
    %v2658 = vpop.xlane.xlu0 %2657
    %v2659 = vsel %vm2526, %v2651, 0.0
    %2660 = vadd.xlane.f32.xlu0 %v2659
    %v2661 = vpop.xlane.xlu0 %2660
    %v2662 = vsel %vm2526, %v2652, 0.0
    %2663 = vadd.xlane.f32.xlu0 %v2662
    %v2664 = vpop.xlane.xlu0 %2663
    %v2665 = vmul.f32 %v2655, %v2640
    %v2666 = vmul.f32 %v2658, %v2640
    %v2667 = vmul.f32 %v2661, %v2640
    %v2668 = vmul.f32 %v2664, %v2640
    %v2669 = vadd.f32 %v2665, 1e-05
    %v2670 = vadd.f32 %v2666, 1e-05
    %v2671 = vadd.f32 %v2667, 1e-05
    %v2672 = vadd.f32 %v2668, 1e-05
    %v2673 = vrsqrt.pop %v2669
    %v2674 = vrsqrt.pop %v2670
    %v2675 = vrsqrt.pop %v2671
    %v2676 = vrsqrt.pop %v2672
    %v2677 = vmul.f32 %v2645, %v2673
    %v2678 = vmul.f32 %v2646, %v2674
    %v2679 = vmul.f32 %v2647, %v2675
    %v2680 = vmul.f32 %v2648, %v2676
    %v2681 = vlaneseq
    %v2682 = vshrl.u32 %v2681, 7
    %v2683 = vsub.s32 1, %v2682
    %v2684 = vrot.slane %v33, %v2683
    %v2685 = vmul.f32 %v2677, %v2684
    %v2686 = vmul.f32 %v2678, %v2684
    %v2687 = vmul.f32 %v2679, %v2684
    %v2688 = vmul.f32 %v2680, %v2684
    %v2689 = vlaneseq
    %v2690 = vshrl.u32 %v2689, 7
    %v2691 = vsub.s32 2, %v2690
    %v2692 = vrot.slane %v33, %v2691
    %v2693 = vadd.f32 %v2685, %v2692
    %v2694 = vadd.f32 %v2686, %v2692
    %v2695 = vadd.f32 %v2687, %v2692
    %v2696 = vadd.f32 %v2688, %v2692
    %v2697 = vld [vmem:[%s5] sm:$0xff]
    %v2698 = vld [vmem:[%s5 + $0x8] sm:$0xff]
    %v2699 = vld [vmem:[%s5 + $0x10] sm:$0xff]
    %v2700 = vld [vmem:[%s5 + $0x18] sm:$0xff]
    %v2701 = vld [vmem:[%s6] sm:$0x1]
    %v2703 = vlaneseq
    %v2704 = vshrl.u32 %v2703, 7
    %v2705 = vsub.s32 0, %v2704
    %v2706 = vrot.slane %v2701, %v2705
    %v2709 = vsel %vm2526, %v2693, 0
    %v2712 = vsel %vm2526, %v2694, 0
    %v2715 = vsel %vm2526, %v2695, 0
    %v2718 = vsel %vm2526, %v2696, 0
    %2720 = vmatprep.subr.mxu0 0.0
    %2721 = vmatpush1.msra.mxu0 %v2697
    %2722 = vmatprep.subr.mxu0 0.0
    %2723 = vmatpush1.msra.mxu0 %v2698
    %2724 = vmatprep.subr.mxu0 0.0
    %2725 = vmatpush1.msra.mxu0 %v2699
    %2726 = vmatprep.subr.mxu0 0.0
    %2727 = vmatpush1.msra.mxu0 %v2700
    %2728 = vmatprep.subr.mxu0 0.0
    %2729 = vmatpush1.msra.mxu0 0.0
    %2730 = vmatprep.subr.mxu0 0.0
    %2731 = vmatpush1.msra.mxu0 0.0
    %2732 = vmatprep.subr.mxu0 0.0
    %2733 = vmatpush1.msra.mxu0 0.0
    %2734 = vmatprep.subr.mxu0 0.0
    %2735 = vmatpush1.msra.mxu0 0.0
    %2736 = vmatprep.subr.mxu0 0.0
    %2737 = vmatpush1.msra.mxu0 0.0
    %2738 = vmatprep.subr.mxu0 0.0
    %2739 = vmatpush1.msra.mxu0 0.0
    %2740 = vmatprep.subr.mxu0 0.0
    %2741 = vmatpush1.msra.mxu0 0.0
    %2742 = vmatprep.subr.mxu0 0.0
    %2743 = vmatpush1.msra.mxu0 0.0
    %2744 = vmatprep.subr.mxu0 0.0
    %2745 = vmatpush1.msra.mxu0 0.0
    %2746 = vmatprep.subr.mxu0 0.0
    %2747 = vmatpush1.msra.mxu0 0.0
    %2748 = vmatprep.subr.mxu0 0.0
    %2749 = vmatpush1.msra.mxu0 0.0
    %2750 = vmatprep.subr.mxu0 0.0
    %2751 = vmatpush1.msra.mxu0 0.0
    %2752 = vmatprep.subr.mxu0 0.0
    %2753 = vmatpush1.msra.mxu0 0.0
    %2754 = vmatprep.subr.mxu0 0.0
    %2755 = vmatpush1.msra.mxu0 0.0
    %2756 = vmatprep.subr.mxu0 0.0
    %2757 = vmatpush1.msra.mxu0 0.0
    %2758 = vmatprep.subr.mxu0 0.0
    %2759 = vmatpush1.msra.mxu0 0.0
    %2760 = vmatprep.subr.mxu0 0.0
    %2761 = vmatpush1.msra.mxu0 0.0
    %2762 = vmatprep.subr.mxu0 0.0
    %2763 = vmatpush1.msra.mxu0 0.0
    %2764 = vmatprep.subr.mxu0 0.0
    %2765 = vmatpush1.msra.mxu0 0.0
    %2766 = vmatprep.subr.mxu0 0.0
    %2767 = vmatpush1.msra.mxu0 0.0
    %2768 = vmatprep.subr.mxu0 0.0
    %2769 = vmatpush1.msra.mxu0 0.0
    %2770 = vmatprep.subr.mxu0 0.0
    %2771 = vmatpush1.msra.mxu0 0.0
    %2772 = vmatprep.subr.mxu0 0.0
    %2773 = vmatpush1.msra.mxu0 0.0
    %2774 = vmatprep.subr.mxu0 0.0
    %2775 = vmatpush1.msra.mxu0 0.0
    %2776 = vmatprep.subr.mxu0 0.0
    %2777 = vmatpush1.msra.mxu0 0.0
    %2778 = vmatprep.subr.mxu0 0.0
    %2779 = vmatpush1.msra.mxu0 0.0
    %2780 = vmatprep.subr.mxu0 0.0
    %2781 = vmatpush1.msra.mxu0 0.0
    %2782 = vmatprep.subr.mxu0 0.0
    %2783 = vmatpush1.msra.mxu0 0.0
    %2784 = vmatprep.mubr.f32.mxu0 0.0
    %2785 = vmatmul.mubr.f32.gmra.mrb[0].mxu0 %v2709
    %v2786 = vpop.f32.mrb[0].mxu0
    %v2787 = vadd.f32 %v2706, %v2786
    %v2788 = vpop.f32.mrb[0].mxu0
    %2789 = vmatprep.mubr.f32.mxu0 0.0
    %2790 = vmatmul.mubr.f32.gmra.mrb[0].mxu0 %v2712
    %v2791 = vpop.f32.mrb[0].mxu0
    %v2792 = vadd.f32 %v2706, %v2791
    %v2793 = vpop.f32.mrb[0].mxu0
    %2794 = vmatprep.mubr.f32.mxu0 0.0
    %2795 = vmatmul.mubr.f32.gmra.mrb[0].mxu0 %v2715
    %v2796 = vpop.f32.mrb[0].mxu0
    %v2797 = vadd.f32 %v2706, %v2796
    %v2798 = vpop.f32.mrb[0].mxu0
    %2799 = vmatprep.mubr.f32.mxu0 0.0
    %2800 = vmatmul.mubr.f32.gmra.mrb[0].mxu0 %v2718
    %v2801 = vpop.f32.mrb[0].mxu0
    %v2802 = vadd.f32 %v2706, %v2801
    %v2803 = vpop.f32.mrb[0].mxu0
    %2804 = vdwg.mxu0
    %v2805 = vmax.f32 %v2787, 0.0
    %v2806 = vmax.f32 %v2792, 0.0
    %v2807 = vmax.f32 %v2797, 0.0
    %v2808 = vmax.f32 %v2802, 0.0
    %v2809 = vld [vmem:[%s7] sm:$0xff]
    %v2810 = vld [vmem:[%s7 + $0x8] sm:$0xff]
    %v2811 = vld [vmem:[%s7 + $0x10] sm:$0xff]
    %v2812 = vld [vmem:[%s7 + $0x18] sm:$0xff]
    %v2813 = vld [vmem:[%s7 + $0x20] sm:$0xff]
    %v2814 = vld [vmem:[%s7 + $0x28] sm:$0xff]
    %v2815 = vld [vmem:[%s7 + $0x30] sm:$0xff]
    %v2816 = vld [vmem:[%s7 + $0x38] sm:$0xff]
    %v2817 = vlaneseq
    %v2818 = vshrl.u32 %v2817, 7
    %v2819 = vsub.s32 3, %v2818
    %v2820 = vrot.slane %v33, %v2819
    %v2822 = vsel %vm654, %v2805, 0
    %v2825 = vsel %vm654, %v2806, 0
    %v2828 = vsel %vm654, %v2807, 0
    %v2831 = vsel %vm654, %v2808, 0
    %2833 = vmatprep.subr.mxu0 0.0
    %2834 = vmatpush1.msra.mxu0 %v2809
    %2835 = vmatprep.subr.mxu0 0.0
    %2836 = vmatpush1.msra.mxu0 %v2810
    %2837 = vmatprep.subr.mxu0 0.0
    %2838 = vmatpush1.msra.mxu0 %v2811
    %2839 = vmatprep.subr.mxu0 0.0
    %2840 = vmatpush1.msra.mxu0 %v2812
    %2841 = vmatprep.subr.mxu0 0.0
    %2842 = vmatpush1.msra.mxu0 %v2813
    %2843 = vmatprep.subr.mxu0 0.0
    %2844 = vmatpush1.msra.mxu0 %v2814
    %2845 = vmatprep.subr.mxu0 0.0
    %2846 = vmatpush1.msra.mxu0 %v2815
    %2847 = vmatprep.subr.mxu0 0.0
    %2848 = vmatpush1.msra.mxu0 %v2816
    %2849 = vmatprep.subr.mxu0 0.0
    %2850 = vmatpush1.msra.mxu0 0.0
    %2851 = vmatprep.subr.mxu0 0.0
    %2852 = vmatpush1.msra.mxu0 0.0
    %2853 = vmatprep.subr.mxu0 0.0
    %2854 = vmatpush1.msra.mxu0 0.0
    %2855 = vmatprep.subr.mxu0 0.0
    %2856 = vmatpush1.msra.mxu0 0.0
    %2857 = vmatprep.subr.mxu0 0.0
    %2858 = vmatpush1.msra.mxu0 0.0
    %2859 = vmatprep.subr.mxu0 0.0
    %2860 = vmatpush1.msra.mxu0 0.0
    %2861 = vmatprep.subr.mxu0 0.0
    %2862 = vmatpush1.msra.mxu0 0.0
    %2863 = vmatprep.subr.mxu0 0.0
    %2864 = vmatpush1.msra.mxu0 0.0
    %2865 = vmatprep.subr.mxu0 0.0
    %2866 = vmatpush1.msra.mxu0 0.0
    %2867 = vmatprep.subr.mxu0 0.0
    %2868 = vmatpush1.msra.mxu0 0.0
    %2869 = vmatprep.subr.mxu0 0.0
    %2870 = vmatpush1.msra.mxu0 0.0
    %2871 = vmatprep.subr.mxu0 0.0
    %2872 = vmatpush1.msra.mxu0 0.0
    %2873 = vmatprep.subr.mxu0 0.0
    %2874 = vmatpush1.msra.mxu0 0.0
    %2875 = vmatprep.subr.mxu0 0.0
    %2876 = vmatpush1.msra.mxu0 0.0
    %2877 = vmatprep.subr.mxu0 0.0
    %2878 = vmatpush1.msra.mxu0 0.0
    %2879 = vmatprep.subr.mxu0 0.0
    %2880 = vmatpush1.msra.mxu0 0.0
    %2881 = vmatprep.subr.mxu0 0.0
    %2882 = vmatpush1.msra.mxu0 0.0
    %2883 = vmatprep.subr.mxu0 0.0
    %2884 = vmatpush1.msra.mxu0 0.0
    %2885 = vmatprep.subr.mxu0 0.0
    %2886 = vmatpush1.msra.mxu0 0.0
    %2887 = vmatprep.subr.mxu0 0.0
    %2888 = vmatpush1.msra.mxu0 0.0
    %2889 = vmatprep.subr.mxu0 0.0
    %2890 = vmatpush1.msra.mxu0 0.0
    %2891 = vmatprep.subr.mxu0 0.0
    %2892 = vmatpush1.msra.mxu0 0.0
    %2893 = vmatprep.subr.mxu0 0.0
    %2894 = vmatpush1.msra.mxu0 0.0
    %2895 = vmatprep.subr.mxu0 0.0
    %2896 = vmatpush1.msra.mxu0 0.0
    %2897 = vmatprep.mubr.f32.mxu0 0.0
    %2898 = vmatmul.mubr.f32.gmra.mrb[0].mxu0 %v2822
    %v2899 = vpop.f32.mrb[0].mxu0
    %v2900 = vadd.f32 %v2820, %v2899
    %v2901 = vpop.f32.mrb[0].mxu0
    %2902 = vmatprep.mubr.f32.mxu0 0.0
    %2903 = vmatmul.mubr.f32.gmra.mrb[0].mxu0 %v2825
    %v2904 = vpop.f32.mrb[0].mxu0
    %v2905 = vadd.f32 %v2820, %v2904
    %v2906 = vpop.f32.mrb[0].mxu0
    %2907 = vmatprep.mubr.f32.mxu0 0.0
    %2908 = vmatmul.mubr.f32.gmra.mrb[0].mxu0 %v2828
    %v2909 = vpop.f32.mrb[0].mxu0
    %v2910 = vadd.f32 %v2820, %v2909
    %v2911 = vpop.f32.mrb[0].mxu0
    %2912 = vmatprep.mubr.f32.mxu0 0.0
    %2913 = vmatmul.mubr.f32.gmra.mrb[0].mxu0 %v2831
    %v2914 = vpop.f32.mrb[0].mxu0
    %v2915 = vadd.f32 %v2820, %v2914
    %v2916 = vpop.f32.mrb[0].mxu0
    %2917 = vdwg.mxu0
    %v2918 = vadd.f32 %v2693, %v2900
    %v2919 = vadd.f32 %v2694, %v2905
    %v2920 = vadd.f32 %v2695, %v2910
    %v2921 = vadd.f32 %v2696, %v2915
    %v2922 = vsel %vm2526, %v2918, 0.0
    %2923 = vadd.xlane.f32.xlu0 %v2922
    %v2924 = vpop.xlane.xlu0 %2923
    %v2925 = vsel %vm2526, %v2919, 0.0
    %2926 = vadd.xlane.f32.xlu0 %v2925
    %v2927 = vpop.xlane.xlu0 %2926
    %v2928 = vsel %vm2526, %v2920, 0.0
    %2929 = vadd.xlane.f32.xlu0 %v2928
    %v2930 = vpop.xlane.xlu0 %2929
    %v2931 = vsel %vm2526, %v2921, 0.0
    %2932 = vadd.xlane.f32.xlu0 %v2931
    %v2933 = vpop.xlane.xlu0 %2932
    %v2934 = vmul.f32 %v2924, %v2640
    %v2935 = vmul.f32 %v2927, %v2640
    %v2936 = vmul.f32 %v2930, %v2640
    %v2937 = vmul.f32 %v2933, %v2640
    %v2938 = vsub.f32 %v2918, %v2934
    %v2939 = vsub.f32 %v2919, %v2935
    %v2940 = vsub.f32 %v2920, %v2936
    %v2941 = vsub.f32 %v2921, %v2937
    %v2942 = vmul.f32 %v2938, %v2938
    %v2943 = vmul.f32 %v2939, %v2939
    %v2944 = vmul.f32 %v2940, %v2940
    %v2945 = vmul.f32 %v2941, %v2941
    %v2946 = vsel %vm2526, %v2942, 0.0
    %2947 = vadd.xlane.f32.xlu0 %v2946
    %v2948 = vpop.xlane.xlu0 %2947
    %v2949 = vsel %vm2526, %v2943, 0.0
    %2950 = vadd.xlane.f32.xlu0 %v2949
    %v2951 = vpop.xlane.xlu0 %2950
    %v2952 = vsel %vm2526, %v2944, 0.0
    %2953 = vadd.xlane.f32.xlu0 %v2952
    %v2954 = vpop.xlane.xlu0 %2953
    %v2955 = vsel %vm2526, %v2945, 0.0
    %2956 = vadd.xlane.f32.xlu0 %v2955
    %v2957 = vpop.xlane.xlu0 %2956
    %v2958 = vmul.f32 %v2948, %v2640
    %v2959 = vmul.f32 %v2951, %v2640
    %v2960 = vmul.f32 %v2954, %v2640
    %v2961 = vmul.f32 %v2957, %v2640
    %v2962 = vadd.f32 %v2958, 1e-05
    %v2963 = vadd.f32 %v2959, 1e-05
    %v2964 = vadd.f32 %v2960, 1e-05
    %v2965 = vadd.f32 %v2961, 1e-05
    %v2966 = vrsqrt.pop %v2962
    %v2967 = vrsqrt.pop %v2963
    %v2968 = vrsqrt.pop %v2964
    %v2969 = vrsqrt.pop %v2965
    %v2970 = vmul.f32 %v2938, %v2966
    %v2971 = vmul.f32 %v2939, %v2967
    %v2972 = vmul.f32 %v2940, %v2968
    %v2973 = vmul.f32 %v2941, %v2969
    %v2974 = vlaneseq
    %v2975 = vshrl.u32 %v2974, 7
    %v2976 = vsub.s32 4, %v2975
    %v2977 = vrot.slane %v33, %v2976
    %v2978 = vmul.f32 %v2970, %v2977
    %v2979 = vmul.f32 %v2971, %v2977
    %v2980 = vmul.f32 %v2972, %v2977
    %v2981 = vmul.f32 %v2973, %v2977
    %v2982 = vlaneseq
    %v2983 = vshrl.u32 %v2982, 7
    %v2984 = vsub.s32 5, %v2983
    %v2985 = vrot.slane %v33, %v2984
    %v2986 = vadd.f32 %v2978, %v2985
    %v2987 = vadd.f32 %v2979, %v2985
    %v2988 = vadd.f32 %v2980, %v2985
    %v2989 = vadd.f32 %v2981, %v2985
    %2990 = vst.msk [vmem:[#allocation2] sm:$0xff] %vm2526, %v2986
    %2991 = vst.msk [vmem:[#allocation2 + $0x8] sm:$0xff] %vm2526, %v2987
    %2992 = vst.msk [vmem:[#allocation2 + $0x10] sm:$0xff] %vm2526, %v2988
    %2993 = vst.msk [vmem:[#allocation2 + $0x18] sm:$0xff] %vm2526, %v2989
    // Predicated region
    $region38: #{decoder_layer_forward.3} parent=1 // pred_check
      _
    $region39: #{decoder_layer_forward.3} parent=1 // pred_check_branch
      %2995 = sbr.rel (0) target = $region41
    $region40: #{decoder_layer_forward.3} parent=1 // pred_region
      %s2997 = ssub.s32 512, 512
      %2998 = vsyncadd [#allocation3], %s2997
      %s2999 = sshll.u32 [#allocation2], 4
      %s3000 = int_to_ptr.vmem [resolvable:$true] %s2999
      %3005 = dma.vmem_to_hbm [thread:$0]  %s3000, 512, %s9, [#allocation3], 128, 128, 8
    $region41: #{decoder_layer_forward.3} parent=1 // pred_fallthru
      _
    // Predicated region
    $region42: #{decoder_layer_forward.3} parent=1 // pred_check
      _
    $region43: #{decoder_layer_forward.3} parent=1 // pred_check_branch
      %3007 = sbr.rel (0) target = $region45
    $region44: #{decoder_layer_forward.3} parent=1 // pred_region
      %3008 = dma.done [#allocation3], 512
    $region45: #{decoder_layer_forward.3} parent=1 // pred_fallthru
      _
    %3009 = vsyncpa [#allocation3], 1

</llo_original>
